<compile_context>
chip_gen: v6e
topology: v6e:2x2x1
jax: 0.10.0
libtpu: 0.0.40
codegen_flags: <defaults>
</compile_context>

<pallas_src>
import functools

import jax
import jax.numpy as jnp
from jax import lax
from jax.experimental import pallas as pl
from jax.experimental.pallas import tpu as pltpu


# -----------------------------------------------------------------------------
# Compiler-parameter helpers
# -----------------------------------------------------------------------------
@functools.lru_cache(maxsize=None)
def _vmem_limit_bytes():
    """Scoped-VMEM budget sized per generation (v7x: 64 MiB physical)."""
    try:
        cap = int(pltpu.get_tpu_info().vmem_capacity_bytes)
    except Exception:  # interpret mode / CPU AOT / older jax
        cap = 128 * 1024 * 1024
    return int(min(cap // 2, 64 * 1024 * 1024))


def _cparams(dimension_semantics):
    return pltpu.CompilerParams(
        dimension_semantics=dimension_semantics,
        vmem_limit_bytes=_vmem_limit_bytes(),
    )


def _pick_row_tile(M):
    """Row tile for the big (T*B, ...) matmuls (multiple of 8 sublanes)."""
    for c in (256, 128, 64, 32, 16, 8):
        if M % c == 0 and c < M:
            return c
    return M


def _pick_time_chunk(T):
    """Time chunk for the recurrent kernel (grid carries h/c across chunks)."""
    for c in (64, 32, 16, 8, 4, 2):
        if T % c == 0 and c < T:
            return c
    return T


# -----------------------------------------------------------------------------
# Pallas kernels
# -----------------------------------------------------------------------------
def _in_proj_first_kernel(x_ref, w_ref, b_ref, gf_ref, gb_ref):
    """Layer-0 input projection for BOTH directions in one matmul.

    x_ref: (TM, Din), w_ref: (Din, 8H) = [W_ih_fwd | W_ih_bwd], b_ref: (1, 8H).
    Outputs the pre-computed gate inputs gf/gb: (TM, 4H) each.
    """
    g4 = gf_ref.shape[1]
    gates = (
        jnp.dot(x_ref[...], w_ref[...], preferred_element_type=jnp.float32)
        + b_ref[...]
    )
    gf_ref[...] = gates[:, :g4]
    gb_ref[...] = gates[:, g4:]


def _in_proj_pair_kernel(f_ref, bk_ref, w_ref, b_ref, gf_ref, gb_ref):
    """Layer l>0 input projection; avoids materializing concat([fwd, bwd]).

    f_ref/bk_ref: (TM, H), w_ref: (2H, 8H) (rows [:H] multiply fwd, rows [H:]
    multiply bwd), b_ref: (1, 8H).
    """
    H = f_ref.shape[1]
    g4 = gf_ref.shape[1]
    gates = (
        jnp.dot(f_ref[...], w_ref[0:H, :], preferred_element_type=jnp.float32)
        + jnp.dot(bk_ref[...], w_ref[H:, :], preferred_element_type=jnp.float32)
        + b_ref[...]
    )
    gf_ref[...] = gates[:, :g4]
    gb_ref[...] = gates[:, g4:]


def _bilstm_chunk_kernel(gf_ref, gb_ref, whhf_ref, whhb_ref, of_ref, ob_ref,
                         hf, cf, hb, cb):
    """Fused bidirectional LSTM recurrence over one T-chunk.

    gf_ref: (Tc, B, 4H) forward-direction gate inputs (block t).
    gb_ref: (Tc, B, 4H) backward-direction gate inputs (block nblk-1-t; the
            backward recurrence walks this block from the last row down).
    whhf_ref/whhb_ref: (H, 4H) recurrent weights (gate order i, f, g, o).
    of_ref/ob_ref: (Tc, B, H) hidden states per step.
    hf/cf/hb/cb: (B, H) VMEM scratch carrying the state across grid steps.
    """
    Tc = gf_ref.shape[0]
    H = whhf_ref.shape[0]

    @pl.when(pl.program_id(0) == 0)
    def _init():
        hf[...] = jnp.zeros_like(hf)
        cf[...] = jnp.zeros_like(cf)
        hb[...] = jnp.zeros_like(hb)
        cb[...] = jnp.zeros_like(cb)

    def cell(g, h, c, w_ref):
        # NOTE: for production sizes keep H a multiple of 128 so these gate
        # slices stay lane-aligned (toy H=32 here).
        gates = g + jnp.dot(h, w_ref[...], preferred_element_type=jnp.float32)
        i = jax.nn.sigmoid(gates[:, 0 * H:1 * H])
        f = jax.nn.sigmoid(gates[:, 1 * H:2 * H])
        gg = jnp.tanh(gates[:, 2 * H:3 * H])
        o = jax.nn.sigmoid(gates[:, 3 * H:4 * H])
        c_new = f * c + i * gg
        h_new = o * jnp.tanh(c_new)
        return h_new, c_new

    def step(s, _):
        # forward direction: local time s
        h_new, c_new = cell(gf_ref[s], hf[...], cf[...], whhf_ref)
        hf[...] = h_new
        cf[...] = c_new
        of_ref[s] = h_new
        # backward direction: local time Tc-1-s of the (time-reversed) block
        sb = Tc - 1 - s
        hb_new, cb_new = cell(gb_ref[sb], hb[...], cb[...], whhb_ref)
        hb[...] = hb_new
        cb[...] = cb_new
        ob_ref[sb] = hb_new
        return 0

    lax.fori_loop(0, Tc, step, 0, unroll=(Tc <= 8))


def _classifier_kernel(f_ref, bk_ref, w_ref, bias_ref, o_ref):
    """Fused direction-sum + output Linear (lane-dense padded n_classes)."""
    summed = f_ref[...] + bk_ref[...]
    o_ref[...] = (
        jnp.dot(summed, w_ref[...], preferred_element_type=jnp.float32)
        + bias_ref[...]
    )


# -----------------------------------------------------------------------------
# pallas_call wrappers
# -----------------------------------------------------------------------------
def input_proj_first(x2d, w, b):
    M, Din = x2d.shape
    G8 = w.shape[1]
    G4 = G8 // 2
    TM = _pick_row_tile(M)
    grid = (M // TM,)
    return pl.pallas_call(
        _in_proj_first_kernel,
        out_shape=(jax.ShapeDtypeStruct((M, G4), jnp.float32),
                   jax.ShapeDtypeStruct((M, G4), jnp.float32)),
        grid=grid,
        in_specs=[
            pl.BlockSpec((TM, Din), lambda i: (i, 0)),
            pl.BlockSpec((Din, G8), lambda i: (0, 0)),
            pl.BlockSpec((1, G8), lambda i: (0, 0)),
        ],
        out_specs=(
            pl.BlockSpec((TM, G4), lambda i: (i, 0)),
            pl.BlockSpec((TM, G4), lambda i: (i, 0)),
        ),
        compiler_params=_cparams(("parallel",)),
    )(x2d, w, b)


def input_proj_pair(fwd2d, bwd2d, w, b):
    M, H = fwd2d.shape
    G8 = w.shape[1]
    G4 = G8 // 2
    TM = _pick_row_tile(M)
    grid = (M // TM,)
    return pl.pallas_call(
        _in_proj_pair_kernel,
        out_shape=(jax.ShapeDtypeStruct((M, G4), jnp.float32),
                   jax.ShapeDtypeStruct((M, G4), jnp.float32)),
        grid=grid,
        in_specs=[
            pl.BlockSpec((TM, H), lambda i: (i, 0)),
            pl.BlockSpec((TM, H), lambda i: (i, 0)),
            pl.BlockSpec((2 * H, G8), lambda i: (0, 0)),
            pl.BlockSpec((1, G8), lambda i: (0, 0)),
        ],
        out_specs=(
            pl.BlockSpec((TM, G4), lambda i: (i, 0)),
            pl.BlockSpec((TM, G4), lambda i: (i, 0)),
        ),
        compiler_params=_cparams(("parallel",)),
    )(fwd2d, bwd2d, w, b)


def bilstm_layer(gf, gb, w_hh_f, w_hh_b):
    """gf/gb: (T, B, 4H) precomputed gate inputs -> (fwd, bwd): (T, B, H)."""
    T, B, G4 = gf.shape
    H = w_hh_f.shape[0]
    Tc = _pick_time_chunk(T)
    nblk = T // Tc
    return pl.pallas_call(
        _bilstm_chunk_kernel,
        out_shape=(jax.ShapeDtypeStruct((T, B, H), jnp.float32),
                   jax.ShapeDtypeStruct((T, B, H), jnp.float32)),
        grid=(nblk,),
        in_specs=[
            pl.BlockSpec((Tc, B, G4), lambda t: (t, 0, 0)),
            pl.BlockSpec((Tc, B, G4), lambda t: (nblk - 1 - t, 0, 0)),
            pl.BlockSpec((H, G4), lambda t: (0, 0)),
            pl.BlockSpec((H, G4), lambda t: (0, 0)),
        ],
        out_specs=(
            pl.BlockSpec((Tc, B, H), lambda t: (t, 0, 0)),
            pl.BlockSpec((Tc, B, H), lambda t: (nblk - 1 - t, 0, 0)),
        ),
        scratch_shapes=[pltpu.VMEM((B, H), jnp.float32) for _ in range(4)],
        compiler_params=_cparams(("arbitrary",)),  # state carries across chunks
    )(gf, gb, w_hh_f, w_hh_b)


def classifier_head(fwd2d, bwd2d, w_out_p, b_out_p):
    M, H = fwd2d.shape
    Npad = w_out_p.shape[1]
    TM = _pick_row_tile(M)
    grid = (M // TM,)
    return pl.pallas_call(
        _classifier_kernel,
        out_shape=jax.ShapeDtypeStruct((M, Npad), jnp.float32),
        grid=grid,
        in_specs=[
            pl.BlockSpec((TM, H), lambda i: (i, 0)),
            pl.BlockSpec((TM, H), lambda i: (i, 0)),
            pl.BlockSpec((H, Npad), lambda i: (0, 0)),
            pl.BlockSpec((1, Npad), lambda i: (0, 0)),
        ],
        out_specs=pl.BlockSpec((TM, Npad), lambda i: (i, 0)),
        compiler_params=_cparams(("parallel",)),
    )(fwd2d, bwd2d, w_out_p, b_out_p)


# -----------------------------------------------------------------------------
# DeepLSTM forward
# -----------------------------------------------------------------------------
def deep_lstm_forward(seq, params, *, n_layer, d_model, n_classes, mask=None):
    """seq: (B, T, d_input) float32 -> (logits (B, T, n_classes), mask)."""
    B, T, d_in = seq.shape
    H = d_model
    M = T * B
    x = jnp.transpose(seq, (1, 0, 2)).reshape(M, d_in)  # time-major rows

    # layer 0: fused input projection for both directions, then recurrence
    gf, gb = input_proj_first(x, params["w_ih_l0"], params["b_l0"])
    fwd, bwd = bilstm_layer(gf.reshape(T, B, 4 * H), gb.reshape(T, B, 4 * H),
                            params["w_hh_l0_f"], params["w_hh_l0_b"])

    for l in range(1, n_layer):
        gf, gb = input_proj_pair(fwd.reshape(M, H), bwd.reshape(M, H),
                                 params[f"w_ih_l{l}"], params[f"b_l{l}"])
        fwd, bwd = bilstm_layer(gf.reshape(T, B, 4 * H),
                                gb.reshape(T, B, 4 * H),
                                params[f"w_hh_l{l}_f"], params[f"w_hh_l{l}_b"])

    # pynn Encoder sums the two directions of the last layer; fused with the
    # output Linear (d_project == d_model so project is None).
    logits_p = classifier_head(fwd.reshape(M, H), bwd.reshape(M, H),
                               params["w_out_p"], params["b_out_p"])
    logits = logits_p[:, :n_classes].reshape(T, B, n_classes)
    return jnp.transpose(logits, (1, 0, 2)), mask


# -----------------------------------------------------------------------------
# Pure-JAX reference (for correctness check)
# -----------------------------------------------------------------------------
def _ref_lstm_scan(gx, w_hh):
    T, B, _ = gx.shape
    H = w_hh.shape[0]

    def step(carry, g_t):
        h, c = carry
        gates = g_t + h @ w_hh
        i = jax.nn.sigmoid(gates[:, :H])
        f = jax.nn.sigmoid(gates[:, H:2 * H])
        g = jnp.tanh(gates[:, 2 * H:3 * H])
        o = jax.nn.sigmoid(gates[:, 3 * H:])
        c = f * c + i * g
        h = o * jnp.tanh(c)
        return (h, c), h

    z = jnp.zeros((B, H), jnp.float32)
    _, hs = lax.scan(step, (z, z), gx)
    return hs


def ref_deep_lstm_forward(seq, params, *, n_layer, d_model, n_classes):
    B, T, _ = seq.shape
    H = d_model
    x = jnp.transpose(seq, (1, 0, 2))
    fwd = bwd = None
    for l in range(n_layer):
        w = params[f"w_ih_l{l}"]
        b = params[f"b_l{l}"][0]
        gx = x @ w + b                              # (T, B, 8H)
        fwd = _ref_lstm_scan(gx[..., :4 * H], params[f"w_hh_l{l}_f"])
        bwd = jnp.flip(_ref_lstm_scan(jnp.flip(gx[..., 4 * H:], axis=0),
                                      params[f"w_hh_l{l}_b"]), axis=0)
        x = jnp.concatenate([fwd, bwd], axis=-1)    # next layer input
    out = fwd + bwd
    logits = out @ params["w_out_p"][:, :n_classes] + params["b_out_p"][0, :n_classes]
    return jnp.transpose(logits, (1, 0, 2))


# -----------------------------------------------------------------------------
# Deterministic parameter construction
# -----------------------------------------------------------------------------
def make_params(key, *, d_input, d_model, n_layer, n_classes, n_classes_pad):
    params = {}
    H = d_model
    k = 1.0 / jnp.sqrt(H)
    for l in range(n_layer):
        din = d_input if l == 0 else 2 * H  # bidirectional concat feeds l>0
        key, k1, k2, k3, k4, k5, k6, k7, k8 = jax.random.split(key, 9)
        w_ih_f = jax.random.uniform(k1, (din, 4 * H), jnp.float32, -k, k)
        w_ih_b = jax.random.uniform(k2, (din, 4 * H), jnp.float32, -k, k)
        w_hh_f = jax.random.uniform(k3, (H, 4 * H), jnp.float32, -k, k)
        w_hh_b = jax.random.uniform(k4, (H, 4 * H), jnp.float32, -k, k)
        b_f = (jax.random.uniform(k5, (4 * H,), jnp.float32, -k, k)
               + jax.random.uniform(k6, (4 * H,), jnp.float32, -k, k))
        b_b = (jax.random.uniform(k7, (4 * H,), jnp.float32, -k, k)
               + jax.random.uniform(k8, (4 * H,), jnp.float32, -k, k))
        # both directions concatenated along the output axis: one projection
        # matmul per layer covers fwd and bwd
        params[f"w_ih_l{l}"] = jnp.concatenate([w_ih_f, w_ih_b], axis=1)
        params[f"b_l{l}"] = jnp.concatenate([b_f, b_b])[None, :]
        params[f"w_hh_l{l}_f"] = w_hh_f
        params[f"w_hh_l{l}_b"] = w_hh_b

    key, k1, k2 = jax.random.split(key, 3)
    w_out = jax.random.uniform(k1, (H, n_classes), jnp.float32, -k, k)
    b_out = jax.random.uniform(k2, (n_classes,), jnp.float32, -k, k)
    pad = n_classes_pad - n_classes
    params["w_out_p"] = jnp.pad(w_out, ((0, 0), (0, pad)))   # lane-dense output
    params["b_out_p"] = jnp.pad(b_out, (0, pad))[None, :]
    return params


# -----------------------------------------------------------------------------
if __name__ == "__main__":
    B, T = 2, 8
    d_input, d_model, n_layer, n_classes = 16, 32, 2, 11
    n_classes_pad = ((n_classes + 127) // 128) * 128

    key = jax.random.PRNGKey(0)
    key, kseq, kparams = jax.random.split(key, 3)
    seq = jax.random.normal(kseq, (B, T, d_input), jnp.float32)
    params = make_params(kparams, d_input=d_input, d_model=d_model,
                         n_layer=n_layer, n_classes=n_classes,
                         n_classes_pad=n_classes_pad)

    fwd_fn = jax.jit(functools.partial(deep_lstm_forward, n_layer=n_layer,
                                       d_model=d_model, n_classes=n_classes))
    logits, mask = fwd_fn(seq, params)
    logits = jax.block_until_ready(logits)
    assert logits.shape == (B, T, n_classes)
    assert mask is None

    ref = ref_deep_lstm_forward(seq, params, n_layer=n_layer,
                                d_model=d_model, n_classes=n_classes)
    max_err = float(jnp.max(jnp.abs(logits - ref)))
    assert jnp.allclose(logits, ref, rtol=5e-4, atol=5e-4), max_err

    print("KERNEL_OK")
</pallas_src>

<mosaic_0001>
module attributes {stable_mosaic.version = 11 : i64} {
  func.func @_in_proj_pair_kernel(%arg0: i32, %arg1: memref<8x32xf32, #tpu.memory_space<vmem>>, %arg2: memref<8x32xf32, #tpu.memory_space<vmem>>, %arg3: memref<64x256xf32, #tpu.memory_space<vmem>>, %arg4: memref<1x256xf32, #tpu.memory_space<vmem>>, %arg5: memref<8x128xf32, #tpu.memory_space<vmem>>, %arg6: memref<8x128xf32, #tpu.memory_space<vmem>>) attributes {dimension_semantics = [#tpu.dimension_semantics<parallel>], iteration_bounds = array<i64: 2>, scalar_prefetch = 0 : i64, scratch_operands = 0 : i64, tpu.core_type = #tpu.core_type<tc>, window_params = [{transform_indices = @transform_0, window_bounds = array<i64: 8, 32>}, {transform_indices = @transform_1, window_bounds = array<i64: 8, 32>}, {pipeline_mode = #tpu.pipeline_mode<synchronous>, transform_indices = @transform_2, window_bounds = array<i64: 64, 256>}, {pipeline_mode = #tpu.pipeline_mode<synchronous>, transform_indices = @transform_3, window_bounds = array<i64: 1, 256>}, {transform_indices = @transform_4, window_bounds = array<i64: 8, 128>}, {transform_indices = @transform_5, window_bounds = array<i64: 8, 128>}]} {
    %c0 = arith.constant 0 : index
    %c0_0 = arith.constant 0 : index
    %0 = vector.load %arg1[%c0, %c0_0] : memref<8x32xf32, #tpu.memory_space<vmem>>, vector<8x32xf32>
    %c0_1 = arith.constant 0 : index
    %c0_2 = arith.constant 0 : index
    %1 = vector.load %arg3[%c0_1, %c0_2] : memref<64x256xf32, #tpu.memory_space<vmem>>, vector<32x256xf32>
    %cst = arith.constant dense<0.000000e+00> : vector<8x256xf32>
    %2 = tpu.matmul %0, %1, %cst {dimension_numbers = #tpu.dot_dimension_numbers<[1], [0], [0], [1], [0, 0, 1, 1], [], []>} : vector<8x32xf32>, vector<32x256xf32>, vector<8x256xf32> -> vector<8x256xf32>
    %c0_3 = arith.constant 0 : index
    %c0_4 = arith.constant 0 : index
    %3 = vector.load %arg2[%c0_3, %c0_4] : memref<8x32xf32, #tpu.memory_space<vmem>>, vector<8x32xf32>
    %c32 = arith.constant 32 : index
    %c0_5 = arith.constant 0 : index
    %4 = vector.load %arg3[%c32, %c0_5] : memref<64x256xf32, #tpu.memory_space<vmem>>, vector<32x256xf32>
    %cst_6 = arith.constant dense<0.000000e+00> : vector<8x256xf32>
    %5 = tpu.matmul %3, %4, %cst_6 {dimension_numbers = #tpu.dot_dimension_numbers<[1], [0], [0], [1], [0, 0, 1, 1], [], []>} : vector<8x32xf32>, vector<32x256xf32>, vector<8x256xf32> -> vector<8x256xf32>
    %6 = arith.addf %2, %5 : vector<8x256xf32>
    %c0_7 = arith.constant 0 : index
    %c0_8 = arith.constant 0 : index
    %7 = vector.load %arg4[%c0_7, %c0_8] : memref<1x256xf32, #tpu.memory_space<vmem>>, vector<1x256xf32>
    %8 = vector.broadcast %7 : vector<1x256xf32> to vector<8x256xf32>
    %9 = arith.addf %6, %8 : vector<8x256xf32>
    %10 = vector.extract_strided_slice %9 {offsets = [0, 0], sizes = [8, 128], strides = [1, 1]} : vector<8x256xf32> to vector<8x128xf32>
    %c0_9 = arith.constant 0 : index
    %c0_10 = arith.constant 0 : index
    %11 = vector.load %arg5[%c0_9, %c0_10] : memref<8x128xf32, #tpu.memory_space<vmem>>, vector<8x128xf32>
    tpu.vector_store %arg5[%c0_9, %c0_10], %10 {strides = array<i32>} : memref<8x128xf32, #tpu.memory_space<vmem>>, vector<8x128xf32>,
    %12 = vector.extract_strided_slice %9 {offsets = [0, 128], sizes = [8, 128], strides = [1, 1]} : vector<8x256xf32> to vector<8x128xf32>
    %c0_11 = arith.constant 0 : index
    %c0_12 = arith.constant 0 : index
    %13 = vector.load %arg6[%c0_11, %c0_12] : memref<8x128xf32, #tpu.memory_space<vmem>>, vector<8x128xf32>
    tpu.vector_store %arg6[%c0_11, %c0_12], %12 {strides = array<i32>} : memref<8x128xf32, #tpu.memory_space<vmem>>, vector<8x128xf32>,
    return
  }
  func.func @transform_0(%arg0: i32) -> (i32, i32) {
    %c0_i32 = arith.constant 0 : i32
    %c0_i32_0 = arith.constant 0 : i32
    return %arg0, %c0_i32 : i32, i32
  }
  func.func @transform_1(%arg0: i32) -> (i32, i32) {
    %c0_i32 = arith.constant 0 : i32
    %c0_i32_0 = arith.constant 0 : i32
    return %arg0, %c0_i32 : i32, i32
  }
  func.func @transform_2(%arg0: i32) -> (i32, i32) {
    %c0_i32 = arith.constant 0 : i32
    %c0_i32_0 = arith.constant 0 : i32
    %c0_i32_1 = arith.constant 0 : i32
    return %c0_i32, %c0_i32_0 : i32, i32
  }
  func.func @transform_3(%arg0: i32) -> (i32, i32) {
    %c0_i32 = arith.constant 0 : i32
    %c0_i32_0 = arith.constant 0 : i32
    %c0_i32_1 = arith.constant 0 : i32
    return %c0_i32, %c0_i32_0 : i32, i32
  }
  func.func @transform_4(%arg0: i32) -> (i32, i32) {
    %c0_i32 = arith.constant 0 : i32
    %c0_i32_0 = arith.constant 0 : i32
    return %arg0, %c0_i32 : i32, i32
  }
  func.func @transform_5(%arg0: i32) -> (i32, i32) {
    %c0_i32 = arith.constant 0 : i32
    %c0_i32_0 = arith.constant 0 : i32
    return %arg0, %c0_i32 : i32, i32
  }
}

module attributes {stable_mosaic.version = 11 : i64} {
  func.func @_in_proj_first_kernel(%arg0: i32, %arg1: memref<8x16xf32, #tpu.memory_space<vmem>>, %arg2: memref<16x256xf32, #tpu.memory_space<vmem>>, %arg3: memref<1x256xf32, #tpu.memory_space<vmem>>, %arg4: memref<8x128xf32, #tpu.memory_space<vmem>>, %arg5: memref<8x128xf32, #tpu.memory_space<vmem>>) attributes {dimension_semantics = [#tpu.dimension_semantics<parallel>], iteration_bounds = array<i64: 2>, scalar_prefetch = 0 : i64, scratch_operands = 0 : i64, tpu.core_type = #tpu.core_type<tc>, window_params = [{transform_indices = @transform_0, window_bounds = array<i64: 8, 16>}, {pipeline_mode = #tpu.pipeline_mode<synchronous>, transform_indices = @transform_1, window_bounds = array<i64: 16, 256>}, {pipeline_mode = #tpu.pipeline_mode<synchronous>, transform_indices = @transform_2, window_bounds = array<i64: 1, 256>}, {transform_indices = @transform_3, window_bounds = array<i64: 8, 128>}, {transform_indices = @transform_4, window_bounds = array<i64: 8, 128>}]} {
    %c0 = arith.constant 0 : index
    %c0_0 = arith.constant 0 : index
    %0 = vector.load %arg1[%c0, %c0_0] : memref<8x16xf32, #tpu.memory_space<vmem>>, vector<8x16xf32>
    %c0_1 = arith.constant 0 : index
    %c0_2 = arith.constant 0 : index
    %1 = vector.load %arg2[%c0_1, %c0_2] : memref<16x256xf32, #tpu.memory_space<vmem>>, vector<16x256xf32>
    %cst = arith.constant dense<0.000000e+00> : vector<8x256xf32>
    %2 = tpu.matmul %0, %1, %cst {dimension_numbers = #tpu.dot_dimension_numbers<[1], [0], [0], [1], [0, 0, 1, 1], [], []>} : vector<8x16xf32>, vector<16x256xf32>, vector<8x256xf32> -> vector<8x256xf32>
    %c0_3 = arith.constant 0 : index
    %c0_4 = arith.constant 0 : index
    %3 = vector.load %arg3[%c0_3, %c0_4] : memref<1x256xf32, #tpu.memory_space<vmem>>, vector<1x256xf32>
    %4 = vector.broadcast %3 : vector<1x256xf32> to vector<8x256xf32>
    %5 = arith.addf %2, %4 : vector<8x256xf32>
    %6 = vector.extract_strided_slice %5 {offsets = [0, 0], sizes = [8, 128], strides = [1, 1]} : vector<8x256xf32> to vector<8x128xf32>
    %c0_5 = arith.constant 0 : index
    %c0_6 = arith.constant 0 : index
    %7 = vector.load %arg4[%c0_5, %c0_6] : memref<8x128xf32, #tpu.memory_space<vmem>>, vector<8x128xf32>
    tpu.vector_store %arg4[%c0_5, %c0_6], %6 {strides = array<i32>} : memref<8x128xf32, #tpu.memory_space<vmem>>, vector<8x128xf32>,
    %8 = vector.extract_strided_slice %5 {offsets = [0, 128], sizes = [8, 128], strides = [1, 1]} : vector<8x256xf32> to vector<8x128xf32>
    %c0_7 = arith.constant 0 : index
    %c0_8 = arith.constant 0 : index
    %9 = vector.load %arg5[%c0_7, %c0_8] : memref<8x128xf32, #tpu.memory_space<vmem>>, vector<8x128xf32>
    tpu.vector_store %arg5[%c0_7, %c0_8], %8 {strides = array<i32>} : memref<8x128xf32, #tpu.memory_space<vmem>>, vector<8x128xf32>,
    return
  }
  func.func @transform_0(%arg0: i32) -> (i32, i32) {
    %c0_i32 = arith.constant 0 : i32
    %c0_i32_0 = arith.constant 0 : i32
    return %arg0, %c0_i32 : i32, i32
  }
  func.func @transform_1(%arg0: i32) -> (i32, i32) {
    %c0_i32 = arith.constant 0 : i32
    %c0_i32_0 = arith.constant 0 : i32
    %c0_i32_1 = arith.constant 0 : i32
    return %c0_i32, %c0_i32_0 : i32, i32
  }
  func.func @transform_2(%arg0: i32) -> (i32, i32) {
    %c0_i32 = arith.constant 0 : i32
    %c0_i32_0 = arith.constant 0 : i32
    %c0_i32_1 = arith.constant 0 : i32
    return %c0_i32, %c0_i32_0 : i32, i32
  }
  func.func @transform_3(%arg0: i32) -> (i32, i32) {
    %c0_i32 = arith.constant 0 : i32
    %c0_i32_0 = arith.constant 0 : i32
    return %arg0, %c0_i32 : i32, i32
  }
  func.func @transform_4(%arg0: i32) -> (i32, i32) {
    %c0_i32 = arith.constant 0 : i32
    %c0_i32_0 = arith.constant 0 : i32
    return %arg0, %c0_i32 : i32, i32
  }
}

module attributes {stable_mosaic.version = 11 : i64} {
  func.func @_bilstm_chunk_kernel(%arg0: i32, %arg1: memref<4x2x128xf32, #tpu.memory_space<vmem>>, %arg2: memref<4x2x128xf32, #tpu.memory_space<vmem>>, %arg3: memref<32x128xf32, #tpu.memory_space<vmem>>, %arg4: memref<32x128xf32, #tpu.memory_space<vmem>>, %arg5: memref<4x2x32xf32, #tpu.memory_space<vmem>>, %arg6: memref<4x2x32xf32, #tpu.memory_space<vmem>>, %arg7: memref<2x32xf32, #tpu.memory_space<vmem>>, %arg8: memref<2x32xf32, #tpu.memory_space<vmem>>, %arg9: memref<2x32xf32, #tpu.memory_space<vmem>>, %arg10: memref<2x32xf32, #tpu.memory_space<vmem>>) attributes {dimension_semantics = [#tpu.dimension_semantics<arbitrary>], iteration_bounds = array<i64: 2>, scalar_prefetch = 0 : i64, scratch_operands = 4 : i64, tpu.core_type = #tpu.core_type<tc>, window_params = [{transform_indices = @transform_0, window_bounds = array<i64: 4, 2, 128>}, {transform_indices = @transform_1, window_bounds = array<i64: 4, 2, 128>}, {pipeline_mode = #tpu.pipeline_mode<synchronous>, transform_indices = @transform_2, window_bounds = array<i64: 32, 128>}, {pipeline_mode = #tpu.pipeline_mode<synchronous>, transform_indices = @transform_3, window_bounds = array<i64: 32, 128>}, {transform_indices = @transform_4, window_bounds = array<i64: 4, 2, 32>}, {transform_indices = @transform_5, window_bounds = array<i64: 4, 2, 32>}]} {
    %c0_i32 = arith.constant 0 : i32
    %0 = arith.cmpi eq, %arg0, %c0_i32 : i32
    %1 = arith.extui %0 : i1 to i32
    %c0_i32_0 = arith.constant 0 : i32
    %2 = arith.cmpi ne, %1, %c0_i32_0 : i32
    scf.if %2 {
      %cst_148 = arith.constant 0.000000e+00 : f32
      %319 = vector.broadcast %cst_148 : f32 to vector<2x32xf32>
      %c0_149 = arith.constant 0 : index
      %c0_150 = arith.constant 0 : index
      %320 = vector.load %arg7[%c0_149, %c0_150] : memref<2x32xf32, #tpu.memory_space<vmem>>, vector<2x32xf32>
      tpu.vector_store %arg7[%c0_149, %c0_150], %319 {strides = array<i32>} : memref<2x32xf32, #tpu.memory_space<vmem>>, vector<2x32xf32>,
      %cst_151 = arith.constant 0.000000e+00 : f32
      %321 = vector.broadcast %cst_151 : f32 to vector<2x32xf32>
      %c0_152 = arith.constant 0 : index
      %c0_153 = arith.constant 0 : index
      %322 = vector.load %arg8[%c0_152, %c0_153] : memref<2x32xf32, #tpu.memory_space<vmem>>, vector<2x32xf32>
      tpu.vector_store %arg8[%c0_152, %c0_153], %321 {strides = array<i32>} : memref<2x32xf32, #tpu.memory_space<vmem>>, vector<2x32xf32>,
      %cst_154 = arith.constant 0.000000e+00 : f32
      %323 = vector.broadcast %cst_154 : f32 to vector<2x32xf32>
      %c0_155 = arith.constant 0 : index
      %c0_156 = arith.constant 0 : index
      %324 = vector.load %arg9[%c0_155, %c0_156] : memref<2x32xf32, #tpu.memory_space<vmem>>, vector<2x32xf32>
      tpu.vector_store %arg9[%c0_155, %c0_156], %323 {strides = array<i32>} : memref<2x32xf32, #tpu.memory_space<vmem>>, vector<2x32xf32>,
      %cst_157 = arith.constant 0.000000e+00 : f32
      %325 = vector.broadcast %cst_157 : f32 to vector<2x32xf32>
      %c0_158 = arith.constant 0 : index
      %c0_159 = arith.constant 0 : index
      %326 = vector.load %arg10[%c0_158, %c0_159] : memref<2x32xf32, #tpu.memory_space<vmem>>, vector<2x32xf32>
      tpu.vector_store %arg10[%c0_158, %c0_159], %325 {strides = array<i32>} : memref<2x32xf32, #tpu.memory_space<vmem>>, vector<2x32xf32>,
    } else {
    }
    %c0_i32_1 = arith.constant 0 : i32
    %3 = arith.index_cast %c0_i32_1 : i32 to index
    %c0 = arith.constant 0 : index
    %c0_2 = arith.constant 0 : index
    %4 = vector.load %arg1[%3, %c0, %c0_2] : memref<4x2x128xf32, #tpu.memory_space<vmem>>, vector<1x2x128xf32>
    %5 = vector.shape_cast %4 : vector<1x2x128xf32> to vector<2x128xf32>
    %c0_3 = arith.constant 0 : index
    %c0_4 = arith.constant 0 : index
    %6 = vector.load %arg7[%c0_3, %c0_4] : memref<2x32xf32, #tpu.memory_space<vmem>>, vector<2x32xf32>
    %c0_5 = arith.constant 0 : index
    %c0_6 = arith.constant 0 : index
    %7 = vector.load %arg8[%c0_5, %c0_6] : memref<2x32xf32, #tpu.memory_space<vmem>>, vector<2x32xf32>
    %c0_7 = arith.constant 0 : index
    %c0_8 = arith.constant 0 : index
    %8 = vector.load %arg3[%c0_7, %c0_8] : memref<32x128xf32, #tpu.memory_space<vmem>>, vector<32x128xf32>
    %cst = arith.constant dense<0.000000e+00> : vector<2x128xf32>
    %9 = tpu.matmul %6, %8, %cst {dimension_numbers = #tpu.dot_dimension_numbers<[1], [0], [0], [1], [0, 0, 1, 1], [], []>} : vector<2x32xf32>, vector<32x128xf32>, vector<2x128xf32> -> vector<2x128xf32>
    %10 = arith.addf %5, %9 : vector<2x128xf32>
    %11 = vector.extract_strided_slice %10 {offsets = [0, 0], sizes = [2, 32], strides = [1, 1]} : vector<2x128xf32> to vector<2x32xf32>
    %12 = arith.negf %11 : vector<2x32xf32>
    %13 = math.exp %12 : vector<2x32xf32>
    %cst_9 = arith.constant 1.000000e+00 : f32
    %14 = vector.broadcast %cst_9 : f32 to vector<2x32xf32>
    %15 = arith.addf %14, %13 : vector<2x32xf32>
    %16 = arith.divf %14, %15 : vector<2x32xf32>
    %17 = vector.extract_strided_slice %10 {offsets = [0, 32], sizes = [2, 32], strides = [1, 1]} : vector<2x128xf32> to vector<2x32xf32>
    %18 = arith.negf %17 : vector<2x32xf32>
    %19 = math.exp %18 : vector<2x32xf32>
    %cst_10 = arith.constant 1.000000e+00 : f32
    %20 = vector.broadcast %cst_10 : f32 to vector<2x32xf32>
    %21 = arith.addf %20, %19 : vector<2x32xf32>
    %22 = arith.divf %20, %21 : vector<2x32xf32>
    %23 = vector.extract_strided_slice %10 {offsets = [0, 64], sizes = [2, 32], strides = [1, 1]} : vector<2x128xf32> to vector<2x32xf32>
    %24 = math.tanh %23 : vector<2x32xf32>
    %25 = vector.extract_strided_slice %10 {offsets = [0, 96], sizes = [2, 32], strides = [1, 1]} : vector<2x128xf32> to vector<2x32xf32>
    %26 = arith.negf %25 : vector<2x32xf32>
    %27 = math.exp %26 : vector<2x32xf32>
    %cst_11 = arith.constant 1.000000e+00 : f32
    %28 = vector.broadcast %cst_11 : f32 to vector<2x32xf32>
    %29 = arith.addf %28, %27 : vector<2x32xf32>
    %30 = arith.divf %28, %29 : vector<2x32xf32>
    %31 = arith.mulf %22, %7 : vector<2x32xf32>
    %32 = arith.mulf %16, %24 : vector<2x32xf32>
    %33 = arith.addf %31, %32 : vector<2x32xf32>
    %34 = math.tanh %33 : vector<2x32xf32>
    %35 = arith.mulf %30, %34 : vector<2x32xf32>
    %c0_12 = arith.constant 0 : index
    %c0_13 = arith.constant 0 : index
    %36 = vector.load %arg7[%c0_12, %c0_13] : memref<2x32xf32, #tpu.memory_space<vmem>>, vector<2x32xf32>
    tpu.vector_store %arg7[%c0_12, %c0_13], %35 {strides = array<i32>} : memref<2x32xf32, #tpu.memory_space<vmem>>, vector<2x32xf32>,
    %c0_14 = arith.constant 0 : index
    %c0_15 = arith.constant 0 : index
    %37 = vector.load %arg8[%c0_14, %c0_15] : memref<2x32xf32, #tpu.memory_space<vmem>>, vector<2x32xf32>
    tpu.vector_store %arg8[%c0_14, %c0_15], %33 {strides = array<i32>} : memref<2x32xf32, #tpu.memory_space<vmem>>, vector<2x32xf32>,
    %38 = arith.index_cast %c0_i32_1 : i32 to index
    %c0_16 = arith.constant 0 : index
    %c0_17 = arith.constant 0 : index
    %39 = vector.load %arg5[%38, %c0_16, %c0_17] : memref<4x2x32xf32, #tpu.memory_space<vmem>>, vector<1x2x32xf32>
    %40 = vector.shape_cast %39 : vector<1x2x32xf32> to vector<2x32xf32>
    %41 = vector.shape_cast %35 : vector<2x32xf32> to vector<1x2x32xf32>
    tpu.vector_store %arg5[%38, %c0_16, %c0_17], %41 {strides = array<i32>} : memref<4x2x32xf32, #tpu.memory_space<vmem>>, vector<1x2x32xf32>,
    %c3_i32 = arith.constant 3 : i32
    %42 = arith.subi %c3_i32, %c0_i32_1 : i32
    %43 = arith.index_cast %42 : i32 to index
    %c0_18 = arith.constant 0 : index
    %c0_19 = arith.constant 0 : index
    %44 = vector.load %arg2[%43, %c0_18, %c0_19] : memref<4x2x128xf32, #tpu.memory_space<vmem>>, vector<1x2x128xf32>
    %45 = vector.shape_cast %44 : vector<1x2x128xf32> to vector<2x128xf32>
    %c0_20 = arith.constant 0 : index
    %c0_21 = arith.constant 0 : index
    %46 = vector.load %arg9[%c0_20, %c0_21] : memref<2x32xf32, #tpu.memory_space<vmem>>, vector<2x32xf32>
    %c0_22 = arith.constant 0 : index
    %c0_23 = arith.constant 0 : index
    %47 = vector.load %arg10[%c0_22, %c0_23] : memref<2x32xf32, #tpu.memory_space<vmem>>, vector<2x32xf32>
    %c0_24 = arith.constant 0 : index
    %c0_25 = arith.constant 0 : index
    %48 = vector.load %arg4[%c0_24, %c0_25] : memref<32x128xf32, #tpu.memory_space<vmem>>, vector<32x128xf32>
    %cst_26 = arith.constant dense<0.000000e+00> : vector<2x128xf32>
    %49 = tpu.matmul %46, %48, %cst_26 {dimension_numbers = #tpu.dot_dimension_numbers<[1], [0], [0], [1], [0, 0, 1, 1], [], []>} : vector<2x32xf32>, vector<32x128xf32>, vector<2x128xf32> -> vector<2x128xf32>
    %50 = arith.addf %45, %49 : vector<2x128xf32>
    %51 = vector.extract_strided_slice %50 {offsets = [0, 0], sizes = [2, 32], strides = [1, 1]} : vector<2x128xf32> to vector<2x32xf32>
    %52 = arith.negf %51 : vector<2x32xf32>
    %53 = math.exp %52 : vector<2x32xf32>
    %cst_27 = arith.constant 1.000000e+00 : f32
    %54 = vector.broadcast %cst_27 : f32 to vector<2x32xf32>
    %55 = arith.addf %54, %53 : vector<2x32xf32>
    %56 = arith.divf %54, %55 : vector<2x32xf32>
    %57 = vector.extract_strided_slice %50 {offsets = [0, 32], sizes = [2, 32], strides = [1, 1]} : vector<2x128xf32> to vector<2x32xf32>
    %58 = arith.negf %57 : vector<2x32xf32>
    %59 = math.exp %58 : vector<2x32xf32>
    %cst_28 = arith.constant 1.000000e+00 : f32
    %60 = vector.broadcast %cst_28 : f32 to vector<2x32xf32>
    %61 = arith.addf %60, %59 : vector<2x32xf32>
    %62 = arith.divf %60, %61 : vector<2x32xf32>
    %63 = vector.extract_strided_slice %50 {offsets = [0, 64], sizes = [2, 32], strides = [1, 1]} : vector<2x128xf32> to vector<2x32xf32>
    %64 = math.tanh %63 : vector<2x32xf32>
    %65 = vector.extract_strided_slice %50 {offsets = [0, 96], sizes = [2, 32], strides = [1, 1]} : vector<2x128xf32> to vector<2x32xf32>
    %66 = arith.negf %65 : vector<2x32xf32>
    %67 = math.exp %66 : vector<2x32xf32>
    %cst_29 = arith.constant 1.000000e+00 : f32
    %68 = vector.broadcast %cst_29 : f32 to vector<2x32xf32>
    %69 = arith.addf %68, %67 : vector<2x32xf32>
    %70 = arith.divf %68, %69 : vector<2x32xf32>
    %71 = arith.mulf %62, %47 : vector<2x32xf32>
    %72 = arith.mulf %56, %64 : vector<2x32xf32>
    %73 = arith.addf %71, %72 : vector<2x32xf32>
    %74 = math.tanh %73 : vector<2x32xf32>
    %75 = arith.mulf %70, %74 : vector<2x32xf32>
    %c0_30 = arith.constant 0 : index
    %c0_31 = arith.constant 0 : index
    %76 = vector.load %arg9[%c0_30, %c0_31] : memref<2x32xf32, #tpu.memory_space<vmem>>, vector<2x32xf32>
    tpu.vector_store %arg9[%c0_30, %c0_31], %75 {strides = array<i32>} : memref<2x32xf32, #tpu.memory_space<vmem>>, vector<2x32xf32>,
    %c0_32 = arith.constant 0 : index
    %c0_33 = arith.constant 0 : index
    %77 = vector.load %arg10[%c0_32, %c0_33] : memref<2x32xf32, #tpu.memory_space<vmem>>, vector<2x32xf32>
    tpu.vector_store %arg10[%c0_32, %c0_33], %73 {strides = array<i32>} : memref<2x32xf32, #tpu.memory_space<vmem>>, vector<2x32xf32>,
    %78 = arith.index_cast %42 : i32 to index
    %c0_34 = arith.constant 0 : index
    %c0_35 = arith.constant 0 : index
    %79 = vector.load %arg6[%78, %c0_34, %c0_35] : memref<4x2x32xf32, #tpu.memory_space<vmem>>, vector<1x2x32xf32>
    %80 = vector.shape_cast %79 : vector<1x2x32xf32> to vector<2x32xf32>
    %81 = vector.shape_cast %75 : vector<2x32xf32> to vector<1x2x32xf32>
    tpu.vector_store %arg6[%78, %c0_34, %c0_35], %81 {strides = array<i32>} : memref<4x2x32xf32, #tpu.memory_space<vmem>>, vector<1x2x32xf32>,
    %c1_i32 = arith.constant 1 : i32
    %82 = arith.index_cast %c1_i32 : i32 to index
    %c0_36 = arith.constant 0 : index
    %c0_37 = arith.constant 0 : index
    %83 = vector.load %arg1[%82, %c0_36, %c0_37] : memref<4x2x128xf32, #tpu.memory_space<vmem>>, vector<1x2x128xf32>
    %84 = vector.shape_cast %83 : vector<1x2x128xf32> to vector<2x128xf32>
    %c0_38 = arith.constant 0 : index
    %c0_39 = arith.constant 0 : index
    %85 = vector.load %arg7[%c0_38, %c0_39] : memref<2x32xf32, #tpu.memory_space<vmem>>, vector<2x32xf32>
    %c0_40 = arith.constant 0 : index
    %c0_41 = arith.constant 0 : index
    %86 = vector.load %arg8[%c0_40, %c0_41] : memref<2x32xf32, #tpu.memory_space<vmem>>, vector<2x32xf32>
    %c0_42 = arith.constant 0 : index
    %c0_43 = arith.constant 0 : index
    %87 = vector.load %arg3[%c0_42, %c0_43] : memref<32x128xf32, #tpu.memory_space<vmem>>, vector<32x128xf32>
    %cst_44 = arith.constant dense<0.000000e+00> : vector<2x128xf32>
    %88 = tpu.matmul %85, %87, %cst_44 {dimension_numbers = #tpu.dot_dimension_numbers<[1], [0], [0], [1], [0, 0, 1, 1], [], []>} : vector<2x32xf32>, vector<32x128xf32>, vector<2x128xf32> -> vector<2x128xf32>
    %89 = arith.addf %84, %88 : vector<2x128xf32>
    %90 = vector.extract_strided_slice %89 {offsets = [0, 0], sizes = [2, 32], strides = [1, 1]} : vector<2x128xf32> to vector<2x32xf32>
    %91 = arith.negf %90 : vector<2x32xf32>
    %92 = math.exp %91 : vector<2x32xf32>
    %cst_45 = arith.constant 1.000000e+00 : f32
    %93 = vector.broadcast %cst_45 : f32 to vector<2x32xf32>
    %94 = arith.addf %93, %92 : vector<2x32xf32>
    %95 = arith.divf %93, %94 : vector<2x32xf32>
    %96 = vector.extract_strided_slice %89 {offsets = [0, 32], sizes = [2, 32], strides = [1, 1]} : vector<2x128xf32> to vector<2x32xf32>
    %97 = arith.negf %96 : vector<2x32xf32>
    %98 = math.exp %97 : vector<2x32xf32>
    %cst_46 = arith.constant 1.000000e+00 : f32
    %99 = vector.broadcast %cst_46 : f32 to vector<2x32xf32>
    %100 = arith.addf %99, %98 : vector<2x32xf32>
    %101 = arith.divf %99, %100 : vector<2x32xf32>
    %102 = vector.extract_strided_slice %89 {offsets = [0, 64], sizes = [2, 32], strides = [1, 1]} : vector<2x128xf32> to vector<2x32xf32>
    %103 = math.tanh %102 : vector<2x32xf32>
    %104 = vector.extract_strided_slice %89 {offsets = [0, 96], sizes = [2, 32], strides = [1, 1]} : vector<2x128xf32> to vector<2x32xf32>
    %105 = arith.negf %104 : vector<2x32xf32>
    %106 = math.exp %105 : vector<2x32xf32>
    %cst_47 = arith.constant 1.000000e+00 : f32
    %107 = vector.broadcast %cst_47 : f32 to vector<2x32xf32>
    %108 = arith.addf %107, %106 : vector<2x32xf32>
    %109 = arith.divf %107, %108 : vector<2x32xf32>
    %110 = arith.mulf %101, %86 : vector<2x32xf32>
    %111 = arith.mulf %95, %103 : vector<2x32xf32>
    %112 = arith.addf %110, %111 : vector<2x32xf32>
    %113 = math.tanh %112 : vector<2x32xf32>
    %114 = arith.mulf %109, %113 : vector<2x32xf32>
    %c0_48 = arith.constant 0 : index
    %c0_49 = arith.constant 0 : index
    %115 = vector.load %arg7[%c0_48, %c0_49] : memref<2x32xf32, #tpu.memory_space<vmem>>, vector<2x32xf32>
    tpu.vector_store %arg7[%c0_48, %c0_49], %114 {strides = array<i32>} : memref<2x32xf32, #tpu.memory_space<vmem>>, vector<2x32xf32>,
    %c0_50 = arith.constant 0 : index
    %c0_51 = arith.constant 0 : index
    %116 = vector.load %arg8[%c0_50, %c0_51] : memref<2x32xf32, #tpu.memory_space<vmem>>, vector<2x32xf32>
    tpu.vector_store %arg8[%c0_50, %c0_51], %112 {strides = array<i32>} : memref<2x32xf32, #tpu.memory_space<vmem>>, vector<2x32xf32>,
    %117 = arith.index_cast %c1_i32 : i32 to index
    %c0_52 = arith.constant 0 : index
    %c0_53 = arith.constant 0 : index
    %118 = vector.load %arg5[%117, %c0_52, %c0_53] : memref<4x2x32xf32, #tpu.memory_space<vmem>>, vector<1x2x32xf32>
    %119 = vector.shape_cast %118 : vector<1x2x32xf32> to vector<2x32xf32>
    %120 = vector.shape_cast %114 : vector<2x32xf32> to vector<1x2x32xf32>
    tpu.vector_store %arg5[%117, %c0_52, %c0_53], %120 {strides = array<i32>} : memref<4x2x32xf32, #tpu.memory_space<vmem>>, vector<1x2x32xf32>,
    %c3_i32_54 = arith.constant 3 : i32
    %121 = arith.subi %c3_i32_54, %c1_i32 : i32
    %122 = arith.index_cast %121 : i32 to index
    %c0_55 = arith.constant 0 : index
    %c0_56 = arith.constant 0 : index
    %123 = vector.load %arg2[%122, %c0_55, %c0_56] : memref<4x2x128xf32, #tpu.memory_space<vmem>>, vector<1x2x128xf32>
    %124 = vector.shape_cast %123 : vector<1x2x128xf32> to vector<2x128xf32>
    %c0_57 = arith.constant 0 : index
    %c0_58 = arith.constant 0 : index
    %125 = vector.load %arg9[%c0_57, %c0_58] : memref<2x32xf32, #tpu.memory_space<vmem>>, vector<2x32xf32>
    %c0_59 = arith.constant 0 : index
    %c0_60 = arith.constant 0 : index
    %126 = vector.load %arg10[%c0_59, %c0_60] : memref<2x32xf32, #tpu.memory_space<vmem>>, vector<2x32xf32>
    %c0_61 = arith.constant 0 : index
    %c0_62 = arith.constant 0 : index
    %127 = vector.load %arg4[%c0_61, %c0_62] : memref<32x128xf32, #tpu.memory_space<vmem>>, vector<32x128xf32>
    %cst_63 = arith.constant dense<0.000000e+00> : vector<2x128xf32>
    %128 = tpu.matmul %125, %127, %cst_63 {dimension_numbers = #tpu.dot_dimension_numbers<[1], [0], [0], [1], [0, 0, 1, 1], [], []>} : vector<2x32xf32>, vector<32x128xf32>, vector<2x128xf32> -> vector<2x128xf32>
    %129 = arith.addf %124, %128 : vector<2x128xf32>
    %130 = vector.extract_strided_slice %129 {offsets = [0, 0], sizes = [2, 32], strides = [1, 1]} : vector<2x128xf32> to vector<2x32xf32>
    %131 = arith.negf %130 : vector<2x32xf32>
    %132 = math.exp %131 : vector<2x32xf32>
    %cst_64 = arith.constant 1.000000e+00 : f32
    %133 = vector.broadcast %cst_64 : f32 to vector<2x32xf32>
    %134 = arith.addf %133, %132 : vector<2x32xf32>
    %135 = arith.divf %133, %134 : vector<2x32xf32>
    %136 = vector.extract_strided_slice %129 {offsets = [0, 32], sizes = [2, 32], strides = [1, 1]} : vector<2x128xf32> to vector<2x32xf32>
    %137 = arith.negf %136 : vector<2x32xf32>
    %138 = math.exp %137 : vector<2x32xf32>
    %cst_65 = arith.constant 1.000000e+00 : f32
    %139 = vector.broadcast %cst_65 : f32 to vector<2x32xf32>
    %140 = arith.addf %139, %138 : vector<2x32xf32>
    %141 = arith.divf %139, %140 : vector<2x32xf32>
    %142 = vector.extract_strided_slice %129 {offsets = [0, 64], sizes = [2, 32], strides = [1, 1]} : vector<2x128xf32> to vector<2x32xf32>
    %143 = math.tanh %142 : vector<2x32xf32>
    %144 = vector.extract_strided_slice %129 {offsets = [0, 96], sizes = [2, 32], strides = [1, 1]} : vector<2x128xf32> to vector<2x32xf32>
    %145 = arith.negf %144 : vector<2x32xf32>
    %146 = math.exp %145 : vector<2x32xf32>
    %cst_66 = arith.constant 1.000000e+00 : f32
    %147 = vector.broadcast %cst_66 : f32 to vector<2x32xf32>
    %148 = arith.addf %147, %146 : vector<2x32xf32>
    %149 = arith.divf %147, %148 : vector<2x32xf32>
    %150 = arith.mulf %141, %126 : vector<2x32xf32>
    %151 = arith.mulf %135, %143 : vector<2x32xf32>
    %152 = arith.addf %150, %151 : vector<2x32xf32>
    %153 = math.tanh %152 : vector<2x32xf32>
    %154 = arith.mulf %149, %153 : vector<2x32xf32>
    %c0_67 = arith.constant 0 : index
    %c0_68 = arith.constant 0 : index
    %155 = vector.load %arg9[%c0_67, %c0_68] : memref<2x32xf32, #tpu.memory_space<vmem>>, vector<2x32xf32>
    tpu.vector_store %arg9[%c0_67, %c0_68], %154 {strides = array<i32>} : memref<2x32xf32, #tpu.memory_space<vmem>>, vector<2x32xf32>,
    %c0_69 = arith.constant 0 : index
    %c0_70 = arith.constant 0 : index
    %156 = vector.load %arg10[%c0_69, %c0_70] : memref<2x32xf32, #tpu.memory_space<vmem>>, vector<2x32xf32>
    tpu.vector_store %arg10[%c0_69, %c0_70], %152 {strides = array<i32>} : memref<2x32xf32, #tpu.memory_space<vmem>>, vector<2x32xf32>,
    %157 = arith.index_cast %121 : i32 to index
    %c0_71 = arith.constant 0 : index
    %c0_72 = arith.constant 0 : index
    %158 = vector.load %arg6[%157, %c0_71, %c0_72] : memref<4x2x32xf32, #tpu.memory_space<vmem>>, vector<1x2x32xf32>
    %159 = vector.shape_cast %158 : vector<1x2x32xf32> to vector<2x32xf32>
    %160 = vector.shape_cast %154 : vector<2x32xf32> to vector<1x2x32xf32>
    tpu.vector_store %arg6[%157, %c0_71, %c0_72], %160 {strides = array<i32>} : memref<4x2x32xf32, #tpu.memory_space<vmem>>, vector<1x2x32xf32>,
    %c2_i32 = arith.constant 2 : i32
    %161 = arith.index_cast %c2_i32 : i32 to index
    %c0_73 = arith.constant 0 : index
    %c0_74 = arith.constant 0 : index
    %162 = vector.load %arg1[%161, %c0_73, %c0_74] : memref<4x2x128xf32, #tpu.memory_space<vmem>>, vector<1x2x128xf32>
    %163 = vector.shape_cast %162 : vector<1x2x128xf32> to vector<2x128xf32>
    %c0_75 = arith.constant 0 : index
    %c0_76 = arith.constant 0 : index
    %164 = vector.load %arg7[%c0_75, %c0_76] : memref<2x32xf32, #tpu.memory_space<vmem>>, vector<2x32xf32>
    %c0_77 = arith.constant 0 : index
    %c0_78 = arith.constant 0 : index
    %165 = vector.load %arg8[%c0_77, %c0_78] : memref<2x32xf32, #tpu.memory_space<vmem>>, vector<2x32xf32>
    %c0_79 = arith.constant 0 : index
    %c0_80 = arith.constant 0 : index
    %166 = vector.load %arg3[%c0_79, %c0_80] : memref<32x128xf32, #tpu.memory_space<vmem>>, vector<32x128xf32>
    %cst_81 = arith.constant dense<0.000000e+00> : vector<2x128xf32>
    %167 = tpu.matmul %164, %166, %cst_81 {dimension_numbers = #tpu.dot_dimension_numbers<[1], [0], [0], [1], [0, 0, 1, 1], [], []>} : vector<2x32xf32>, vector<32x128xf32>, vector<2x128xf32> -> vector<2x128xf32>
    %168 = arith.addf %163, %167 : vector<2x128xf32>
    %169 = vector.extract_strided_slice %168 {offsets = [0, 0], sizes = [2, 32], strides = [1, 1]} : vector<2x128xf32> to vector<2x32xf32>
    %170 = arith.negf %169 : vector<2x32xf32>
    %171 = math.exp %170 : vector<2x32xf32>
    %cst_82 = arith.constant 1.000000e+00 : f32
    %172 = vector.broadcast %cst_82 : f32 to vector<2x32xf32>
    %173 = arith.addf %172, %171 : vector<2x32xf32>
    %174 = arith.divf %172, %173 : vector<2x32xf32>
    %175 = vector.extract_strided_slice %168 {offsets = [0, 32], sizes = [2, 32], strides = [1, 1]} : vector<2x128xf32> to vector<2x32xf32>
    %176 = arith.negf %175 : vector<2x32xf32>
    %177 = math.exp %176 : vector<2x32xf32>
    %cst_83 = arith.constant 1.000000e+00 : f32
    %178 = vector.broadcast %cst_83 : f32 to vector<2x32xf32>
    %179 = arith.addf %178, %177 : vector<2x32xf32>
    %180 = arith.divf %178, %179 : vector<2x32xf32>
    %181 = vector.extract_strided_slice %168 {offsets = [0, 64], sizes = [2, 32], strides = [1, 1]} : vector<2x128xf32> to vector<2x32xf32>
    %182 = math.tanh %181 : vector<2x32xf32>
    %183 = vector.extract_strided_slice %168 {offsets = [0, 96], sizes = [2, 32], strides = [1, 1]} : vector<2x128xf32> to vector<2x32xf32>
    %184 = arith.negf %183 : vector<2x32xf32>
    %185 = math.exp %184 : vector<2x32xf32>
    %cst_84 = arith.constant 1.000000e+00 : f32
    %186 = vector.broadcast %cst_84 : f32 to vector<2x32xf32>
    %187 = arith.addf %186, %185 : vector<2x32xf32>
    %188 = arith.divf %186, %187 : vector<2x32xf32>
    %189 = arith.mulf %180, %165 : vector<2x32xf32>
    %190 = arith.mulf %174, %182 : vector<2x32xf32>
    %191 = arith.addf %189, %190 : vector<2x32xf32>
    %192 = math.tanh %191 : vector<2x32xf32>
    %193 = arith.mulf %188, %192 : vector<2x32xf32>
    %c0_85 = arith.constant 0 : index
    %c0_86 = arith.constant 0 : index
    %194 = vector.load %arg7[%c0_85, %c0_86] : memref<2x32xf32, #tpu.memory_space<vmem>>, vector<2x32xf32>
    tpu.vector_store %arg7[%c0_85, %c0_86], %193 {strides = array<i32>} : memref<2x32xf32, #tpu.memory_space<vmem>>, vector<2x32xf32>,
    %c0_87 = arith.constant 0 : index
    %c0_88 = arith.constant 0 : index
    %195 = vector.load %arg8[%c0_87, %c0_88] : memref<2x32xf32, #tpu.memory_space<vmem>>, vector<2x32xf32>
    tpu.vector_store %arg8[%c0_87, %c0_88], %191 {strides = array<i32>} : memref<2x32xf32, #tpu.memory_space<vmem>>, vector<2x32xf32>,
    %196 = arith.index_cast %c2_i32 : i32 to index
    %c0_89 = arith.constant 0 : index
    %c0_90 = arith.constant 0 : index
    %197 = vector.load %arg5[%196, %c0_89, %c0_90] : memref<4x2x32xf32, #tpu.memory_space<vmem>>, vector<1x2x32xf32>
    %198 = vector.shape_cast %197 : vector<1x2x32xf32> to vector<2x32xf32>
    %199 = vector.shape_cast %193 : vector<2x32xf32> to vector<1x2x32xf32>
    tpu.vector_store %arg5[%196, %c0_89, %c0_90], %199 {strides = array<i32>} : memref<4x2x32xf32, #tpu.memory_space<vmem>>, vector<1x2x32xf32>,
    %c3_i32_91 = arith.constant 3 : i32
    %200 = arith.subi %c3_i32_91, %c2_i32 : i32
    %201 = arith.index_cast %200 : i32 to index
    %c0_92 = arith.constant 0 : index
    %c0_93 = arith.constant 0 : index
    %202 = vector.load %arg2[%201, %c0_92, %c0_93] : memref<4x2x128xf32, #tpu.memory_space<vmem>>, vector<1x2x128xf32>
    %203 = vector.shape_cast %202 : vector<1x2x128xf32> to vector<2x128xf32>
    %c0_94 = arith.constant 0 : index
    %c0_95 = arith.constant 0 : index
    %204 = vector.load %arg9[%c0_94, %c0_95] : memref<2x32xf32, #tpu.memory_space<vmem>>, vector<2x32xf32>
    %c0_96 = arith.constant 0 : index
    %c0_97 = arith.constant 0 : index
    %205 = vector.load %arg10[%c0_96, %c0_97] : memref<2x32xf32, #tpu.memory_space<vmem>>, vector<2x32xf32>
    %c0_98 = arith.constant 0 : index
    %c0_99 = arith.constant 0 : index
    %206 = vector.load %arg4[%c0_98, %c0_99] : memref<32x128xf32, #tpu.memory_space<vmem>>, vector<32x128xf32>
    %cst_100 = arith.constant dense<0.000000e+00> : vector<2x128xf32>
    %207 = tpu.matmul %204, %206, %cst_100 {dimension_numbers = #tpu.dot_dimension_numbers<[1], [0], [0], [1], [0, 0, 1, 1], [], []>} : vector<2x32xf32>, vector<32x128xf32>, vector<2x128xf32> -> vector<2x128xf32>
    %208 = arith.addf %203, %207 : vector<2x128xf32>
    %209 = vector.extract_strided_slice %208 {offsets = [0, 0], sizes = [2, 32], strides = [1, 1]} : vector<2x128xf32> to vector<2x32xf32>
    %210 = arith.negf %209 : vector<2x32xf32>
    %211 = math.exp %210 : vector<2x32xf32>
    %cst_101 = arith.constant 1.000000e+00 : f32
    %212 = vector.broadcast %cst_101 : f32 to vector<2x32xf32>
    %213 = arith.addf %212, %211 : vector<2x32xf32>
    %214 = arith.divf %212, %213 : vector<2x32xf32>
    %215 = vector.extract_strided_slice %208 {offsets = [0, 32], sizes = [2, 32], strides = [1, 1]} : vector<2x128xf32> to vector<2x32xf32>
    %216 = arith.negf %215 : vector<2x32xf32>
    %217 = math.exp %216 : vector<2x32xf32>
    %cst_102 = arith.constant 1.000000e+00 : f32
    %218 = vector.broadcast %cst_102 : f32 to vector<2x32xf32>
    %219 = arith.addf %218, %217 : vector<2x32xf32>
    %220 = arith.divf %218, %219 : vector<2x32xf32>
    %221 = vector.extract_strided_slice %208 {offsets = [0, 64], sizes = [2, 32], strides = [1, 1]} : vector<2x128xf32> to vector<2x32xf32>
    %222 = math.tanh %221 : vector<2x32xf32>
    %223 = vector.extract_strided_slice %208 {offsets = [0, 96], sizes = [2, 32], strides = [1, 1]} : vector<2x128xf32> to vector<2x32xf32>
    %224 = arith.negf %223 : vector<2x32xf32>
    %225 = math.exp %224 : vector<2x32xf32>
    %cst_103 = arith.constant 1.000000e+00 : f32
    %226 = vector.broadcast %cst_103 : f32 to vector<2x32xf32>
    %227 = arith.addf %226, %225 : vector<2x32xf32>
    %228 = arith.divf %226, %227 : vector<2x32xf32>
    %229 = arith.mulf %220, %205 : vector<2x32xf32>
    %230 = arith.mulf %214, %222 : vector<2x32xf32>
    %231 = arith.addf %229, %230 : vector<2x32xf32>
    %232 = math.tanh %231 : vector<2x32xf32>
    %233 = arith.mulf %228, %232 : vector<2x32xf32>
    %c0_104 = arith.constant 0 : index
    %c0_105 = arith.constant 0 : index
    %234 = vector.load %arg9[%c0_104, %c0_105] : memref<2x32xf32, #tpu.memory_space<vmem>>, vector<2x32xf32>
    tpu.vector_store %arg9[%c0_104, %c0_105], %233 {strides = array<i32>} : memref<2x32xf32, #tpu.memory_space<vmem>>, vector<2x32xf32>,
    %c0_106 = arith.constant 0 : index
    %c0_107 = arith.constant 0 : index
    %235 = vector.load %arg10[%c0_106, %c0_107] : memref<2x32xf32, #tpu.memory_space<vmem>>, vector<2x32xf32>
    tpu.vector_store %arg10[%c0_106, %c0_107], %231 {strides = array<i32>} : memref<2x32xf32, #tpu.memory_space<vmem>>, vector<2x32xf32>,
    %236 = arith.index_cast %200 : i32 to index
    %c0_108 = arith.constant 0 : index
    %c0_109 = arith.constant 0 : index
    %237 = vector.load %arg6[%236, %c0_108, %c0_109] : memref<4x2x32xf32, #tpu.memory_space<vmem>>, vector<1x2x32xf32>
    %238 = vector.shape_cast %237 : vector<1x2x32xf32> to vector<2x32xf32>
    %239 = vector.shape_cast %233 : vector<2x32xf32> to vector<1x2x32xf32>
    tpu.vector_store %arg6[%236, %c0_108, %c0_109], %239 {strides = array<i32>} : memref<4x2x32xf32, #tpu.memory_space<vmem>>, vector<1x2x32xf32>,
    %c3_i32_110 = arith.constant 3 : i32
    %240 = arith.index_cast %c3_i32_110 : i32 to index
    %c0_111 = arith.constant 0 : index
    %c0_112 = arith.constant 0 : index
    %241 = vector.load %arg1[%240, %c0_111, %c0_112] : memref<4x2x128xf32, #tpu.memory_space<vmem>>, vector<1x2x128xf32>
    %242 = vector.shape_cast %241 : vector<1x2x128xf32> to vector<2x128xf32>
    %c0_113 = arith.constant 0 : index
    %c0_114 = arith.constant 0 : index
    %243 = vector.load %arg7[%c0_113, %c0_114] : memref<2x32xf32, #tpu.memory_space<vmem>>, vector<2x32xf32>
    %c0_115 = arith.constant 0 : index
    %c0_116 = arith.constant 0 : index
    %244 = vector.load %arg8[%c0_115, %c0_116] : memref<2x32xf32, #tpu.memory_space<vmem>>, vector<2x32xf32>
    %c0_117 = arith.constant 0 : index
    %c0_118 = arith.constant 0 : index
    %245 = vector.load %arg3[%c0_117, %c0_118] : memref<32x128xf32, #tpu.memory_space<vmem>>, vector<32x128xf32>
    %cst_119 = arith.constant dense<0.000000e+00> : vector<2x128xf32>
    %246 = tpu.matmul %243, %245, %cst_119 {dimension_numbers = #tpu.dot_dimension_numbers<[1], [0], [0], [1], [0, 0, 1, 1], [], []>} : vector<2x32xf32>, vector<32x128xf32>, vector<2x128xf32> -> vector<2x128xf32>
    %247 = arith.addf %242, %246 : vector<2x128xf32>
    %248 = vector.extract_strided_slice %247 {offsets = [0, 0], sizes = [2, 32], strides = [1, 1]} : vector<2x128xf32> to vector<2x32xf32>
    %249 = arith.negf %248 : vector<2x32xf32>
    %250 = math.exp %249 : vector<2x32xf32>
    %cst_120 = arith.constant 1.000000e+00 : f32
    %251 = vector.broadcast %cst_120 : f32 to vector<2x32xf32>
    %252 = arith.addf %251, %250 : vector<2x32xf32>
    %253 = arith.divf %251, %252 : vector<2x32xf32>
    %254 = vector.extract_strided_slice %247 {offsets = [0, 32], sizes = [2, 32], strides = [1, 1]} : vector<2x128xf32> to vector<2x32xf32>
    %255 = arith.negf %254 : vector<2x32xf32>
    %256 = math.exp %255 : vector<2x32xf32>
    %cst_121 = arith.constant 1.000000e+00 : f32
    %257 = vector.broadcast %cst_121 : f32 to vector<2x32xf32>
    %258 = arith.addf %257, %256 : vector<2x32xf32>
    %259 = arith.divf %257, %258 : vector<2x32xf32>
    %260 = vector.extract_strided_slice %247 {offsets = [0, 64], sizes = [2, 32], strides = [1, 1]} : vector<2x128xf32> to vector<2x32xf32>
    %261 = math.tanh %260 : vector<2x32xf32>
    %262 = vector.extract_strided_slice %247 {offsets = [0, 96], sizes = [2, 32], strides = [1, 1]} : vector<2x128xf32> to vector<2x32xf32>
    %263 = arith.negf %262 : vector<2x32xf32>
    %264 = math.exp %263 : vector<2x32xf32>
    %cst_122 = arith.constant 1.000000e+00 : f32
    %265 = vector.broadcast %cst_122 : f32 to vector<2x32xf32>
    %266 = arith.addf %265, %264 : vector<2x32xf32>
    %267 = arith.divf %265, %266 : vector<2x32xf32>
    %268 = arith.mulf %259, %244 : vector<2x32xf32>
    %269 = arith.mulf %253, %261 : vector<2x32xf32>
    %270 = arith.addf %268, %269 : vector<2x32xf32>
    %271 = math.tanh %270 : vector<2x32xf32>
    %272 = arith.mulf %267, %271 : vector<2x32xf32>
    %c0_123 = arith.constant 0 : index
    %c0_124 = arith.constant 0 : index
    %273 = vector.load %arg7[%c0_123, %c0_124] : memref<2x32xf32, #tpu.memory_space<vmem>>, vector<2x32xf32>
    tpu.vector_store %arg7[%c0_123, %c0_124], %272 {strides = array<i32>} : memref<2x32xf32, #tpu.memory_space<vmem>>, vector<2x32xf32>,
    %c0_125 = arith.constant 0 : index
    %c0_126 = arith.constant 0 : index
    %274 = vector.load %arg8[%c0_125, %c0_126] : memref<2x32xf32, #tpu.memory_space<vmem>>, vector<2x32xf32>
    tpu.vector_store %arg8[%c0_125, %c0_126], %270 {strides = array<i32>} : memref<2x32xf32, #tpu.memory_space<vmem>>, vector<2x32xf32>,
    %275 = arith.index_cast %c3_i32_110 : i32 to index
    %c0_127 = arith.constant 0 : index
    %c0_128 = arith.constant 0 : index
    %276 = vector.load %arg5[%275, %c0_127, %c0_128] : memref<4x2x32xf32, #tpu.memory_space<vmem>>, vector<1x2x32xf32>
    %277 = vector.shape_cast %276 : vector<1x2x32xf32> to vector<2x32xf32>
    %278 = vector.shape_cast %272 : vector<2x32xf32> to vector<1x2x32xf32>
    tpu.vector_store %arg5[%275, %c0_127, %c0_128], %278 {strides = array<i32>} : memref<4x2x32xf32, #tpu.memory_space<vmem>>, vector<1x2x32xf32>,
    %c3_i32_129 = arith.constant 3 : i32
    %279 = arith.subi %c3_i32_129, %c3_i32_110 : i32
    %280 = arith.index_cast %279 : i32 to index
    %c0_130 = arith.constant 0 : index
    %c0_131 = arith.constant 0 : index
    %281 = vector.load %arg2[%280, %c0_130, %c0_131] : memref<4x2x128xf32, #tpu.memory_space<vmem>>, vector<1x2x128xf32>
    %282 = vector.shape_cast %281 : vector<1x2x128xf32> to vector<2x128xf32>
    %c0_132 = arith.constant 0 : index
    %c0_133 = arith.constant 0 : index
    %283 = vector.load %arg9[%c0_132, %c0_133] : memref<2x32xf32, #tpu.memory_space<vmem>>, vector<2x32xf32>
    %c0_134 = arith.constant 0 : index
    %c0_135 = arith.constant 0 : index
    %284 = vector.load %arg10[%c0_134, %c0_135] : memref<2x32xf32, #tpu.memory_space<vmem>>, vector<2x32xf32>
    %c0_136 = arith.constant 0 : index
    %c0_137 = arith.constant 0 : index
    %285 = vector.load %arg4[%c0_136, %c0_137] : memref<32x128xf32, #tpu.memory_space<vmem>>, vector<32x128xf32>
    %cst_138 = arith.constant dense<0.000000e+00> : vector<2x128xf32>
    %286 = tpu.matmul %283, %285, %cst_138 {dimension_numbers = #tpu.dot_dimension_numbers<[1], [0], [0], [1], [0, 0, 1, 1], [], []>} : vector<2x32xf32>, vector<32x128xf32>, vector<2x128xf32> -> vector<2x128xf32>
    %287 = arith.addf %282, %286 : vector<2x128xf32>
    %288 = vector.extract_strided_slice %287 {offsets = [0, 0], sizes = [2, 32], strides = [1, 1]} : vector<2x128xf32> to vector<2x32xf32>
    %289 = arith.negf %288 : vector<2x32xf32>
    %290 = math.exp %289 : vector<2x32xf32>
    %cst_139 = arith.constant 1.000000e+00 : f32
    %291 = vector.broadcast %cst_139 : f32 to vector<2x32xf32>
    %292 = arith.addf %291, %290 : vector<2x32xf32>
    %293 = arith.divf %291, %292 : vector<2x32xf32>
    %294 = vector.extract_strided_slice %287 {offsets = [0, 32], sizes = [2, 32], strides = [1, 1]} : vector<2x128xf32> to vector<2x32xf32>
    %295 = arith.negf %294 : vector<2x32xf32>
    %296 = math.exp %295 : vector<2x32xf32>
    %cst_140 = arith.constant 1.000000e+00 : f32
    %297 = vector.broadcast %cst_140 : f32 to vector<2x32xf32>
    %298 = arith.addf %297, %296 : vector<2x32xf32>
    %299 = arith.divf %297, %298 : vector<2x32xf32>
    %300 = vector.extract_strided_slice %287 {offsets = [0, 64], sizes = [2, 32], strides = [1, 1]} : vector<2x128xf32> to vector<2x32xf32>
    %301 = math.tanh %300 : vector<2x32xf32>
    %302 = vector.extract_strided_slice %287 {offsets = [0, 96], sizes = [2, 32], strides = [1, 1]} : vector<2x128xf32> to vector<2x32xf32>
    %303 = arith.negf %302 : vector<2x32xf32>
    %304 = math.exp %303 : vector<2x32xf32>
    %cst_141 = arith.constant 1.000000e+00 : f32
    %305 = vector.broadcast %cst_141 : f32 to vector<2x32xf32>
    %306 = arith.addf %305, %304 : vector<2x32xf32>
    %307 = arith.divf %305, %306 : vector<2x32xf32>
    %308 = arith.mulf %299, %284 : vector<2x32xf32>
    %309 = arith.mulf %293, %301 : vector<2x32xf32>
    %310 = arith.addf %308, %309 : vector<2x32xf32>
    %311 = math.tanh %310 : vector<2x32xf32>
    %312 = arith.mulf %307, %311 : vector<2x32xf32>
    %c0_142 = arith.constant 0 : index
    %c0_143 = arith.constant 0 : index
    %313 = vector.load %arg9[%c0_142, %c0_143] : memref<2x32xf32, #tpu.memory_space<vmem>>, vector<2x32xf32>
    tpu.vector_store %arg9[%c0_142, %c0_143], %312 {strides = array<i32>} : memref<2x32xf32, #tpu.memory_space<vmem>>, vector<2x32xf32>,
    %c0_144 = arith.constant 0 : index
    %c0_145 = arith.constant 0 : index
    %314 = vector.load %arg10[%c0_144, %c0_145] : memref<2x32xf32, #tpu.memory_space<vmem>>, vector<2x32xf32>
    tpu.vector_store %arg10[%c0_144, %c0_145], %310 {strides = array<i32>} : memref<2x32xf32, #tpu.memory_space<vmem>>, vector<2x32xf32>,
    %315 = arith.index_cast %279 : i32 to index
    %c0_146 = arith.constant 0 : index
    %c0_147 = arith.constant 0 : index
    %316 = vector.load %arg6[%315, %c0_146, %c0_147] : memref<4x2x32xf32, #tpu.memory_space<vmem>>, vector<1x2x32xf32>
    %317 = vector.shape_cast %316 : vector<1x2x32xf32> to vector<2x32xf32>
    %318 = vector.shape_cast %312 : vector<2x32xf32> to vector<1x2x32xf32>
    tpu.vector_store %arg6[%315, %c0_146, %c0_147], %318 {strides = array<i32>} : memref<4x2x32xf32, #tpu.memory_space<vmem>>, vector<1x2x32xf32>,
    %c4_i32 = arith.constant 4 : i32
    return
  }
  func.func @transform_0(%arg0: i32) -> (i32, i32, i32) {
    %c0_i32 = arith.constant 0 : i32
    %c0_i32_0 = arith.constant 0 : i32
    %c0_i32_1 = arith.constant 0 : i32
    return %arg0, %c0_i32, %c0_i32_0 : i32, i32, i32
  }
  func.func @transform_1(%arg0: i32) -> (i32, i32, i32) {
    %c1_i32 = arith.constant 1 : i32
    %0 = arith.subi %c1_i32, %arg0 : i32
    %c0_i32 = arith.constant 0 : i32
    %c0_i32_0 = arith.constant 0 : i32
    %c0_i32_1 = arith.constant 0 : i32
    return %0, %c0_i32, %c0_i32_0 : i32, i32, i32
  }
  func.func @transform_2(%arg0: i32) -> (i32, i32) {
    %c0_i32 = arith.constant 0 : i32
    %c0_i32_0 = arith.constant 0 : i32
    %c0_i32_1 = arith.constant 0 : i32
    return %c0_i32, %c0_i32_0 : i32, i32
  }
  func.func @transform_3(%arg0: i32) -> (i32, i32) {
    %c0_i32 = arith.constant 0 : i32
    %c0_i32_0 = arith.constant 0 : i32
    %c0_i32_1 = arith.constant 0 : i32
    return %c0_i32, %c0_i32_0 : i32, i32
  }
  func.func @transform_4(%arg0: i32) -> (i32, i32, i32) {
    %c0_i32 = arith.constant 0 : i32
    %c0_i32_0 = arith.constant 0 : i32
    %c0_i32_1 = arith.constant 0 : i32
    return %arg0, %c0_i32, %c0_i32_0 : i32, i32, i32
  }
  func.func @transform_5(%arg0: i32) -> (i32, i32, i32) {
    %c1_i32 = arith.constant 1 : i32
    %0 = arith.subi %c1_i32, %arg0 : i32
    %c0_i32 = arith.constant 0 : i32
    %c0_i32_0 = arith.constant 0 : i32
    %c0_i32_1 = arith.constant 0 : i32
    return %0, %c0_i32, %c0_i32_0 : i32, i32, i32
  }
}

module attributes {stable_mosaic.version = 11 : i64} {
  func.func @_bilstm_chunk_kernel(%arg0: i32, %arg1: memref<4x2x128xf32, #tpu.memory_space<vmem>>, %arg2: memref<4x2x128xf32, #tpu.memory_space<vmem>>, %arg3: memref<32x128xf32, #tpu.memory_space<vmem>>, %arg4: memref<32x128xf32, #tpu.memory_space<vmem>>, %arg5: memref<4x2x32xf32, #tpu.memory_space<vmem>>, %arg6: memref<4x2x32xf32, #tpu.memory_space<vmem>>, %arg7: memref<2x32xf32, #tpu.memory_space<vmem>>, %arg8: memref<2x32xf32, #tpu.memory_space<vmem>>, %arg9: memref<2x32xf32, #tpu.memory_space<vmem>>, %arg10: memref<2x32xf32, #tpu.memory_space<vmem>>) attributes {dimension_semantics = [#tpu.dimension_semantics<arbitrary>], iteration_bounds = array<i64: 2>, scalar_prefetch = 0 : i64, scratch_operands = 4 : i64, tpu.core_type = #tpu.core_type<tc>, window_params = [{transform_indices = @transform_0, window_bounds = array<i64: 4, 2, 128>}, {transform_indices = @transform_1, window_bounds = array<i64: 4, 2, 128>}, {pipeline_mode = #tpu.pipeline_mode<synchronous>, transform_indices = @transform_2, window_bounds = array<i64: 32, 128>}, {pipeline_mode = #tpu.pipeline_mode<synchronous>, transform_indices = @transform_3, window_bounds = array<i64: 32, 128>}, {transform_indices = @transform_4, window_bounds = array<i64: 4, 2, 32>}, {transform_indices = @transform_5, window_bounds = array<i64: 4, 2, 32>}]} {
    %c0_i32 = arith.constant 0 : i32
    %0 = arith.cmpi eq, %arg0, %c0_i32 : i32
    %1 = arith.extui %0 : i1 to i32
    %c0_i32_0 = arith.constant 0 : i32
    %2 = arith.cmpi ne, %1, %c0_i32_0 : i32
    scf.if %2 {
      %cst_148 = arith.constant 0.000000e+00 : f32
      %319 = vector.broadcast %cst_148 : f32 to vector<2x32xf32>
      %c0_149 = arith.constant 0 : index
      %c0_150 = arith.constant 0 : index
      %320 = vector.load %arg7[%c0_149, %c0_150] : memref<2x32xf32, #tpu.memory_space<vmem>>, vector<2x32xf32>
      tpu.vector_store %arg7[%c0_149, %c0_150], %319 {strides = array<i32>} : memref<2x32xf32, #tpu.memory_space<vmem>>, vector<2x32xf32>,
      %cst_151 = arith.constant 0.000000e+00 : f32
      %321 = vector.broadcast %cst_151 : f32 to vector<2x32xf32>
      %c0_152 = arith.constant 0 : index
      %c0_153 = arith.constant 0 : index
      %322 = vector.load %arg8[%c0_152, %c0_153] : memref<2x32xf32, #tpu.memory_space<vmem>>, vector<2x32xf32>
      tpu.vector_store %arg8[%c0_152, %c0_153], %321 {strides = array<i32>} : memref<2x32xf32, #tpu.memory_space<vmem>>, vector<2x32xf32>,
      %cst_154 = arith.constant 0.000000e+00 : f32
      %323 = vector.broadcast %cst_154 : f32 to vector<2x32xf32>
      %c0_155 = arith.constant 0 : index
      %c0_156 = arith.constant 0 : index
      %324 = vector.load %arg9[%c0_155, %c0_156] : memref<2x32xf32, #tpu.memory_space<vmem>>, vector<2x32xf32>
      tpu.vector_store %arg9[%c0_155, %c0_156], %323 {strides = array<i32>} : memref<2x32xf32, #tpu.memory_space<vmem>>, vector<2x32xf32>,
      %cst_157 = arith.constant 0.000000e+00 : f32
      %325 = vector.broadcast %cst_157 : f32 to vector<2x32xf32>
      %c0_158 = arith.constant 0 : index
      %c0_159 = arith.constant 0 : index
      %326 = vector.load %arg10[%c0_158, %c0_159] : memref<2x32xf32, #tpu.memory_space<vmem>>, vector<2x32xf32>
      tpu.vector_store %arg10[%c0_158, %c0_159], %325 {strides = array<i32>} : memref<2x32xf32, #tpu.memory_space<vmem>>, vector<2x32xf32>,
    } else {
    }
    %c0_i32_1 = arith.constant 0 : i32
    %3 = arith.index_cast %c0_i32_1 : i32 to index
    %c0 = arith.constant 0 : index
    %c0_2 = arith.constant 0 : index
    %4 = vector.load %arg1[%3, %c0, %c0_2] : memref<4x2x128xf32, #tpu.memory_space<vmem>>, vector<1x2x128xf32>
    %5 = vector.shape_cast %4 : vector<1x2x128xf32> to vector<2x128xf32>
    %c0_3 = arith.constant 0 : index
    %c0_4 = arith.constant 0 : index
    %6 = vector.load %arg7[%c0_3, %c0_4] : memref<2x32xf32, #tpu.memory_space<vmem>>, vector<2x32xf32>
    %c0_5 = arith.constant 0 : index
    %c0_6 = arith.constant 0 : index
    %7 = vector.load %arg8[%c0_5, %c0_6] : memref<2x32xf32, #tpu.memory_space<vmem>>, vector<2x32xf32>
    %c0_7 = arith.constant 0 : index
    %c0_8 = arith.constant 0 : index
    %8 = vector.load %arg3[%c0_7, %c0_8] : memref<32x128xf32, #tpu.memory_space<vmem>>, vector<32x128xf32>
    %cst = arith.constant dense<0.000000e+00> : vector<2x128xf32>
    %9 = tpu.matmul %6, %8, %cst {dimension_numbers = #tpu.dot_dimension_numbers<[1], [0], [0], [1], [0, 0, 1, 1], [], []>} : vector<2x32xf32>, vector<32x128xf32>, vector<2x128xf32> -> vector<2x128xf32>
    %10 = arith.addf %5, %9 : vector<2x128xf32>
    %11 = vector.extract_strided_slice %10 {offsets = [0, 0], sizes = [2, 32], strides = [1, 1]} : vector<2x128xf32> to vector<2x32xf32>
    %12 = arith.negf %11 : vector<2x32xf32>
    %13 = math.exp %12 : vector<2x32xf32>
    %cst_9 = arith.constant 1.000000e+00 : f32
    %14 = vector.broadcast %cst_9 : f32 to vector<2x32xf32>
    %15 = arith.addf %14, %13 : vector<2x32xf32>
    %16 = arith.divf %14, %15 : vector<2x32xf32>
    %17 = vector.extract_strided_slice %10 {offsets = [0, 32], sizes = [2, 32], strides = [1, 1]} : vector<2x128xf32> to vector<2x32xf32>
    %18 = arith.negf %17 : vector<2x32xf32>
    %19 = math.exp %18 : vector<2x32xf32>
    %cst_10 = arith.constant 1.000000e+00 : f32
    %20 = vector.broadcast %cst_10 : f32 to vector<2x32xf32>
    %21 = arith.addf %20, %19 : vector<2x32xf32>
    %22 = arith.divf %20, %21 : vector<2x32xf32>
    %23 = vector.extract_strided_slice %10 {offsets = [0, 64], sizes = [2, 32], strides = [1, 1]} : vector<2x128xf32> to vector<2x32xf32>
    %24 = math.tanh %23 : vector<2x32xf32>
    %25 = vector.extract_strided_slice %10 {offsets = [0, 96], sizes = [2, 32], strides = [1, 1]} : vector<2x128xf32> to vector<2x32xf32>
    %26 = arith.negf %25 : vector<2x32xf32>
    %27 = math.exp %26 : vector<2x32xf32>
    %cst_11 = arith.constant 1.000000e+00 : f32
    %28 = vector.broadcast %cst_11 : f32 to vector<2x32xf32>
    %29 = arith.addf %28, %27 : vector<2x32xf32>
    %30 = arith.divf %28, %29 : vector<2x32xf32>
    %31 = arith.mulf %22, %7 : vector<2x32xf32>
    %32 = arith.mulf %16, %24 : vector<2x32xf32>
    %33 = arith.addf %31, %32 : vector<2x32xf32>
    %34 = math.tanh %33 : vector<2x32xf32>
    %35 = arith.mulf %30, %34 : vector<2x32xf32>
    %c0_12 = arith.constant 0 : index
    %c0_13 = arith.constant 0 : index
    %36 = vector.load %arg7[%c0_12, %c0_13] : memref<2x32xf32, #tpu.memory_space<vmem>>, vector<2x32xf32>
    tpu.vector_store %arg7[%c0_12, %c0_13], %35 {strides = array<i32>} : memref<2x32xf32, #tpu.memory_space<vmem>>, vector<2x32xf32>,
    %c0_14 = arith.constant 0 : index
    %c0_15 = arith.constant 0 : index
    %37 = vector.load %arg8[%c0_14, %c0_15] : memref<2x32xf32, #tpu.memory_space<vmem>>, vector<2x32xf32>
    tpu.vector_store %arg8[%c0_14, %c0_15], %33 {strides = array<i32>} : memref<2x32xf32, #tpu.memory_space<vmem>>, vector<2x32xf32>,
    %38 = arith.index_cast %c0_i32_1 : i32 to index
    %c0_16 = arith.constant 0 : index
    %c0_17 = arith.constant 0 : index
    %39 = vector.load %arg5[%38, %c0_16, %c0_17] : memref<4x2x32xf32, #tpu.memory_space<vmem>>, vector<1x2x32xf32>
    %40 = vector.shape_cast %39 : vector<1x2x32xf32> to vector<2x32xf32>
    %41 = vector.shape_cast %35 : vector<2x32xf32> to vector<1x2x32xf32>
    tpu.vector_store %arg5[%38, %c0_16, %c0_17], %41 {strides = array<i32>} : memref<4x2x32xf32, #tpu.memory_space<vmem>>, vector<1x2x32xf32>,
    %c3_i32 = arith.constant 3 : i32
    %42 = arith.subi %c3_i32, %c0_i32_1 : i32
    %43 = arith.index_cast %42 : i32 to index
    %c0_18 = arith.constant 0 : index
    %c0_19 = arith.constant 0 : index
    %44 = vector.load %arg2[%43, %c0_18, %c0_19] : memref<4x2x128xf32, #tpu.memory_space<vmem>>, vector<1x2x128xf32>
    %45 = vector.shape_cast %44 : vector<1x2x128xf32> to vector<2x128xf32>
    %c0_20 = arith.constant 0 : index
    %c0_21 = arith.constant 0 : index
    %46 = vector.load %arg9[%c0_20, %c0_21] : memref<2x32xf32, #tpu.memory_space<vmem>>, vector<2x32xf32>
    %c0_22 = arith.constant 0 : index
    %c0_23 = arith.constant 0 : index
    %47 = vector.load %arg10[%c0_22, %c0_23] : memref<2x32xf32, #tpu.memory_space<vmem>>, vector<2x32xf32>
    %c0_24 = arith.constant 0 : index
    %c0_25 = arith.constant 0 : index
    %48 = vector.load %arg4[%c0_24, %c0_25] : memref<32x128xf32, #tpu.memory_space<vmem>>, vector<32x128xf32>
    %cst_26 = arith.constant dense<0.000000e+00> : vector<2x128xf32>
    %49 = tpu.matmul %46, %48, %cst_26 {dimension_numbers = #tpu.dot_dimension_numbers<[1], [0], [0], [1], [0, 0, 1, 1], [], []>} : vector<2x32xf32>, vector<32x128xf32>, vector<2x128xf32> -> vector<2x128xf32>
    %50 = arith.addf %45, %49 : vector<2x128xf32>
    %51 = vector.extract_strided_slice %50 {offsets = [0, 0], sizes = [2, 32], strides = [1, 1]} : vector<2x128xf32> to vector<2x32xf32>
    %52 = arith.negf %51 : vector<2x32xf32>
    %53 = math.exp %52 : vector<2x32xf32>
    %cst_27 = arith.constant 1.000000e+00 : f32
    %54 = vector.broadcast %cst_27 : f32 to vector<2x32xf32>
    %55 = arith.addf %54, %53 : vector<2x32xf32>
    %56 = arith.divf %54, %55 : vector<2x32xf32>
    %57 = vector.extract_strided_slice %50 {offsets = [0, 32], sizes = [2, 32], strides = [1, 1]} : vector<2x128xf32> to vector<2x32xf32>
    %58 = arith.negf %57 : vector<2x32xf32>
    %59 = math.exp %58 : vector<2x32xf32>
    %cst_28 = arith.constant 1.000000e+00 : f32
    %60 = vector.broadcast %cst_28 : f32 to vector<2x32xf32>
    %61 = arith.addf %60, %59 : vector<2x32xf32>
    %62 = arith.divf %60, %61 : vector<2x32xf32>
    %63 = vector.extract_strided_slice %50 {offsets = [0, 64], sizes = [2, 32], strides = [1, 1]} : vector<2x128xf32> to vector<2x32xf32>
    %64 = math.tanh %63 : vector<2x32xf32>
    %65 = vector.extract_strided_slice %50 {offsets = [0, 96], sizes = [2, 32], strides = [1, 1]} : vector<2x128xf32> to vector<2x32xf32>
    %66 = arith.negf %65 : vector<2x32xf32>
    %67 = math.exp %66 : vector<2x32xf32>
    %cst_29 = arith.constant 1.000000e+00 : f32
    %68 = vector.broadcast %cst_29 : f32 to vector<2x32xf32>
    %69 = arith.addf %68, %67 : vector<2x32xf32>
    %70 = arith.divf %68, %69 : vector<2x32xf32>
    %71 = arith.mulf %62, %47 : vector<2x32xf32>
    %72 = arith.mulf %56, %64 : vector<2x32xf32>
    %73 = arith.addf %71, %72 : vector<2x32xf32>
    %74 = math.tanh %73 : vector<2x32xf32>
    %75 = arith.mulf %70, %74 : vector<2x32xf32>
    %c0_30 = arith.constant 0 : index
    %c0_31 = arith.constant 0 : index
    %76 = vector.load %arg9[%c0_30, %c0_31] : memref<2x32xf32, #tpu.memory_space<vmem>>, vector<2x32xf32>
    tpu.vector_store %arg9[%c0_30, %c0_31], %75 {strides = array<i32>} : memref<2x32xf32, #tpu.memory_space<vmem>>, vector<2x32xf32>,
    %c0_32 = arith.constant 0 : index
    %c0_33 = arith.constant 0 : index
    %77 = vector.load %arg10[%c0_32, %c0_33] : memref<2x32xf32, #tpu.memory_space<vmem>>, vector<2x32xf32>
    tpu.vector_store %arg10[%c0_32, %c0_33], %73 {strides = array<i32>} : memref<2x32xf32, #tpu.memory_space<vmem>>, vector<2x32xf32>,
    %78 = arith.index_cast %42 : i32 to index
    %c0_34 = arith.constant 0 : index
    %c0_35 = arith.constant 0 : index
    %79 = vector.load %arg6[%78, %c0_34, %c0_35] : memref<4x2x32xf32, #tpu.memory_space<vmem>>, vector<1x2x32xf32>
    %80 = vector.shape_cast %79 : vector<1x2x32xf32> to vector<2x32xf32>
    %81 = vector.shape_cast %75 : vector<2x32xf32> to vector<1x2x32xf32>
    tpu.vector_store %arg6[%78, %c0_34, %c0_35], %81 {strides = array<i32>} : memref<4x2x32xf32, #tpu.memory_space<vmem>>, vector<1x2x32xf32>,
    %c1_i32 = arith.constant 1 : i32
    %82 = arith.index_cast %c1_i32 : i32 to index
    %c0_36 = arith.constant 0 : index
    %c0_37 = arith.constant 0 : index
    %83 = vector.load %arg1[%82, %c0_36, %c0_37] : memref<4x2x128xf32, #tpu.memory_space<vmem>>, vector<1x2x128xf32>
    %84 = vector.shape_cast %83 : vector<1x2x128xf32> to vector<2x128xf32>
    %c0_38 = arith.constant 0 : index
    %c0_39 = arith.constant 0 : index
    %85 = vector.load %arg7[%c0_38, %c0_39] : memref<2x32xf32, #tpu.memory_space<vmem>>, vector<2x32xf32>
    %c0_40 = arith.constant 0 : index
    %c0_41 = arith.constant 0 : index
    %86 = vector.load %arg8[%c0_40, %c0_41] : memref<2x32xf32, #tpu.memory_space<vmem>>, vector<2x32xf32>
    %c0_42 = arith.constant 0 : index
    %c0_43 = arith.constant 0 : index
    %87 = vector.load %arg3[%c0_42, %c0_43] : memref<32x128xf32, #tpu.memory_space<vmem>>, vector<32x128xf32>
    %cst_44 = arith.constant dense<0.000000e+00> : vector<2x128xf32>
    %88 = tpu.matmul %85, %87, %cst_44 {dimension_numbers = #tpu.dot_dimension_numbers<[1], [0], [0], [1], [0, 0, 1, 1], [], []>} : vector<2x32xf32>, vector<32x128xf32>, vector<2x128xf32> -> vector<2x128xf32>
    %89 = arith.addf %84, %88 : vector<2x128xf32>
    %90 = vector.extract_strided_slice %89 {offsets = [0, 0], sizes = [2, 32], strides = [1, 1]} : vector<2x128xf32> to vector<2x32xf32>
    %91 = arith.negf %90 : vector<2x32xf32>
    %92 = math.exp %91 : vector<2x32xf32>
    %cst_45 = arith.constant 1.000000e+00 : f32
    %93 = vector.broadcast %cst_45 : f32 to vector<2x32xf32>
    %94 = arith.addf %93, %92 : vector<2x32xf32>
    %95 = arith.divf %93, %94 : vector<2x32xf32>
    %96 = vector.extract_strided_slice %89 {offsets = [0, 32], sizes = [2, 32], strides = [1, 1]} : vector<2x128xf32> to vector<2x32xf32>
    %97 = arith.negf %96 : vector<2x32xf32>
    %98 = math.exp %97 : vector<2x32xf32>
    %cst_46 = arith.constant 1.000000e+00 : f32
    %99 = vector.broadcast %cst_46 : f32 to vector<2x32xf32>
    %100 = arith.addf %99, %98 : vector<2x32xf32>
    %101 = arith.divf %99, %100 : vector<2x32xf32>
    %102 = vector.extract_strided_slice %89 {offsets = [0, 64], sizes = [2, 32], strides = [1, 1]} : vector<2x128xf32> to vector<2x32xf32>
    %103 = math.tanh %102 : vector<2x32xf32>
    %104 = vector.extract_strided_slice %89 {offsets = [0, 96], sizes = [2, 32], strides = [1, 1]} : vector<2x128xf32> to vector<2x32xf32>
    %105 = arith.negf %104 : vector<2x32xf32>
    %106 = math.exp %105 : vector<2x32xf32>
    %cst_47 = arith.constant 1.000000e+00 : f32
    %107 = vector.broadcast %cst_47 : f32 to vector<2x32xf32>
    %108 = arith.addf %107, %106 : vector<2x32xf32>
    %109 = arith.divf %107, %108 : vector<2x32xf32>
    %110 = arith.mulf %101, %86 : vector<2x32xf32>
    %111 = arith.mulf %95, %103 : vector<2x32xf32>
    %112 = arith.addf %110, %111 : vector<2x32xf32>
    %113 = math.tanh %112 : vector<2x32xf32>
    %114 = arith.mulf %109, %113 : vector<2x32xf32>
    %c0_48 = arith.constant 0 : index
    %c0_49 = arith.constant 0 : index
    %115 = vector.load %arg7[%c0_48, %c0_49] : memref<2x32xf32, #tpu.memory_space<vmem>>, vector<2x32xf32>
    tpu.vector_store %arg7[%c0_48, %c0_49], %114 {strides = array<i32>} : memref<2x32xf32, #tpu.memory_space<vmem>>, vector<2x32xf32>,
    %c0_50 = arith.constant 0 : index
    %c0_51 = arith.constant 0 : index
    %116 = vector.load %arg8[%c0_50, %c0_51] : memref<2x32xf32, #tpu.memory_space<vmem>>, vector<2x32xf32>
    tpu.vector_store %arg8[%c0_50, %c0_51], %112 {strides = array<i32>} : memref<2x32xf32, #tpu.memory_space<vmem>>, vector<2x32xf32>,
    %117 = arith.index_cast %c1_i32 : i32 to index
    %c0_52 = arith.constant 0 : index
    %c0_53 = arith.constant 0 : index
    %118 = vector.load %arg5[%117, %c0_52, %c0_53] : memref<4x2x32xf32, #tpu.memory_space<vmem>>, vector<1x2x32xf32>
    %119 = vector.shape_cast %118 : vector<1x2x32xf32> to vector<2x32xf32>
    %120 = vector.shape_cast %114 : vector<2x32xf32> to vector<1x2x32xf32>
    tpu.vector_store %arg5[%117, %c0_52, %c0_53], %120 {strides = array<i32>} : memref<4x2x32xf32, #tpu.memory_space<vmem>>, vector<1x2x32xf32>,
    %c3_i32_54 = arith.constant 3 : i32
    %121 = arith.subi %c3_i32_54, %c1_i32 : i32
    %122 = arith.index_cast %121 : i32 to index
    %c0_55 = arith.constant 0 : index
    %c0_56 = arith.constant 0 : index
    %123 = vector.load %arg2[%122, %c0_55, %c0_56] : memref<4x2x128xf32, #tpu.memory_space<vmem>>, vector<1x2x128xf32>
    %124 = vector.shape_cast %123 : vector<1x2x128xf32> to vector<2x128xf32>
    %c0_57 = arith.constant 0 : index
    %c0_58 = arith.constant 0 : index
    %125 = vector.load %arg9[%c0_57, %c0_58] : memref<2x32xf32, #tpu.memory_space<vmem>>, vector<2x32xf32>
    %c0_59 = arith.constant 0 : index
    %c0_60 = arith.constant 0 : index
    %126 = vector.load %arg10[%c0_59, %c0_60] : memref<2x32xf32, #tpu.memory_space<vmem>>, vector<2x32xf32>
    %c0_61 = arith.constant 0 : index
    %c0_62 = arith.constant 0 : index
    %127 = vector.load %arg4[%c0_61, %c0_62] : memref<32x128xf32, #tpu.memory_space<vmem>>, vector<32x128xf32>
    %cst_63 = arith.constant dense<0.000000e+00> : vector<2x128xf32>
    %128 = tpu.matmul %125, %127, %cst_63 {dimension_numbers = #tpu.dot_dimension_numbers<[1], [0], [0], [1], [0, 0, 1, 1], [], []>} : vector<2x32xf32>, vector<32x128xf32>, vector<2x128xf32> -> vector<2x128xf32>
    %129 = arith.addf %124, %128 : vector<2x128xf32>
    %130 = vector.extract_strided_slice %129 {offsets = [0, 0], sizes = [2, 32], strides = [1, 1]} : vector<2x128xf32> to vector<2x32xf32>
    %131 = arith.negf %130 : vector<2x32xf32>
    %132 = math.exp %131 : vector<2x32xf32>
    %cst_64 = arith.constant 1.000000e+00 : f32
    %133 = vector.broadcast %cst_64 : f32 to vector<2x32xf32>
    %134 = arith.addf %133, %132 : vector<2x32xf32>
    %135 = arith.divf %133, %134 : vector<2x32xf32>
    %136 = vector.extract_strided_slice %129 {offsets = [0, 32], sizes = [2, 32], strides = [1, 1]} : vector<2x128xf32> to vector<2x32xf32>
    %137 = arith.negf %136 : vector<2x32xf32>
    %138 = math.exp %137 : vector<2x32xf32>
    %cst_65 = arith.constant 1.000000e+00 : f32
    %139 = vector.broadcast %cst_65 : f32 to vector<2x32xf32>
    %140 = arith.addf %139, %138 : vector<2x32xf32>
    %141 = arith.divf %139, %140 : vector<2x32xf32>
    %142 = vector.extract_strided_slice %129 {offsets = [0, 64], sizes = [2, 32], strides = [1, 1]} : vector<2x128xf32> to vector<2x32xf32>
    %143 = math.tanh %142 : vector<2x32xf32>
    %144 = vector.extract_strided_slice %129 {offsets = [0, 96], sizes = [2, 32], strides = [1, 1]} : vector<2x128xf32> to vector<2x32xf32>
    %145 = arith.negf %144 : vector<2x32xf32>
    %146 = math.exp %145 : vector<2x32xf32>
    %cst_66 = arith.constant 1.000000e+00 : f32
    %147 = vector.broadcast %cst_66 : f32 to vector<2x32xf32>
    %148 = arith.addf %147, %146 : vector<2x32xf32>
    %149 = arith.divf %147, %148 : vector<2x32xf32>
    %150 = arith.mulf %141, %126 : vector<2x32xf32>
    %151 = arith.mulf %135, %143 : vector<2x32xf32>
    %152 = arith.addf %150, %151 : vector<2x32xf32>
    %153 = math.tanh %152 : vector<2x32xf32>
    %154 = arith.mulf %149, %153 : vector<2x32xf32>
    %c0_67 = arith.constant 0 : index
    %c0_68 = arith.constant 0 : index
    %155 = vector.load %arg9[%c0_67, %c0_68] : memref<2x32xf32, #tpu.memory_space<vmem>>, vector<2x32xf32>
    tpu.vector_store %arg9[%c0_67, %c0_68], %154 {strides = array<i32>} : memref<2x32xf32, #tpu.memory_space<vmem>>, vector<2x32xf32>,
    %c0_69 = arith.constant 0 : index
    %c0_70 = arith.constant 0 : index
    %156 = vector.load %arg10[%c0_69, %c0_70] : memref<2x32xf32, #tpu.memory_space<vmem>>, vector<2x32xf32>
    tpu.vector_store %arg10[%c0_69, %c0_70], %152 {strides = array<i32>} : memref<2x32xf32, #tpu.memory_space<vmem>>, vector<2x32xf32>,
    %157 = arith.index_cast %121 : i32 to index
    %c0_71 = arith.constant 0 : index
    %c0_72 = arith.constant 0 : index
    %158 = vector.load %arg6[%157, %c0_71, %c0_72] : memref<4x2x32xf32, #tpu.memory_space<vmem>>, vector<1x2x32xf32>
    %159 = vector.shape_cast %158 : vector<1x2x32xf32> to vector<2x32xf32>
    %160 = vector.shape_cast %154 : vector<2x32xf32> to vector<1x2x32xf32>
    tpu.vector_store %arg6[%157, %c0_71, %c0_72], %160 {strides = array<i32>} : memref<4x2x32xf32, #tpu.memory_space<vmem>>, vector<1x2x32xf32>,
    %c2_i32 = arith.constant 2 : i32
    %161 = arith.index_cast %c2_i32 : i32 to index
    %c0_73 = arith.constant 0 : index
    %c0_74 = arith.constant 0 : index
    %162 = vector.load %arg1[%161, %c0_73, %c0_74] : memref<4x2x128xf32, #tpu.memory_space<vmem>>, vector<1x2x128xf32>
    %163 = vector.shape_cast %162 : vector<1x2x128xf32> to vector<2x128xf32>
    %c0_75 = arith.constant 0 : index
    %c0_76 = arith.constant 0 : index
    %164 = vector.load %arg7[%c0_75, %c0_76] : memref<2x32xf32, #tpu.memory_space<vmem>>, vector<2x32xf32>
    %c0_77 = arith.constant 0 : index
    %c0_78 = arith.constant 0 : index
    %165 = vector.load %arg8[%c0_77, %c0_78] : memref<2x32xf32, #tpu.memory_space<vmem>>, vector<2x32xf32>
    %c0_79 = arith.constant 0 : index
    %c0_80 = arith.constant 0 : index
    %166 = vector.load %arg3[%c0_79, %c0_80] : memref<32x128xf32, #tpu.memory_space<vmem>>, vector<32x128xf32>
    %cst_81 = arith.constant dense<0.000000e+00> : vector<2x128xf32>
    %167 = tpu.matmul %164, %166, %cst_81 {dimension_numbers = #tpu.dot_dimension_numbers<[1], [0], [0], [1], [0, 0, 1, 1], [], []>} : vector<2x32xf32>, vector<32x128xf32>, vector<2x128xf32> -> vector<2x128xf32>
    %168 = arith.addf %163, %167 : vector<2x128xf32>
    %169 = vector.extract_strided_slice %168 {offsets = [0, 0], sizes = [2, 32], strides = [1, 1]} : vector<2x128xf32> to vector<2x32xf32>
    %170 = arith.negf %169 : vector<2x32xf32>
    %171 = math.exp %170 : vector<2x32xf32>
    %cst_82 = arith.constant 1.000000e+00 : f32
    %172 = vector.broadcast %cst_82 : f32 to vector<2x32xf32>
    %173 = arith.addf %172, %171 : vector<2x32xf32>
    %174 = arith.divf %172, %173 : vector<2x32xf32>
    %175 = vector.extract_strided_slice %168 {offsets = [0, 32], sizes = [2, 32], strides = [1, 1]} : vector<2x128xf32> to vector<2x32xf32>
    %176 = arith.negf %175 : vector<2x32xf32>
    %177 = math.exp %176 : vector<2x32xf32>
    %cst_83 = arith.constant 1.000000e+00 : f32
    %178 = vector.broadcast %cst_83 : f32 to vector<2x32xf32>
    %179 = arith.addf %178, %177 : vector<2x32xf32>
    %180 = arith.divf %178, %179 : vector<2x32xf32>
    %181 = vector.extract_strided_slice %168 {offsets = [0, 64], sizes = [2, 32], strides = [1, 1]} : vector<2x128xf32> to vector<2x32xf32>
    %182 = math.tanh %181 : vector<2x32xf32>
    %183 = vector.extract_strided_slice %168 {offsets = [0, 96], sizes = [2, 32], strides = [1, 1]} : vector<2x128xf32> to vector<2x32xf32>
    %184 = arith.negf %183 : vector<2x32xf32>
    %185 = math.exp %184 : vector<2x32xf32>
    %cst_84 = arith.constant 1.000000e+00 : f32
    %186 = vector.broadcast %cst_84 : f32 to vector<2x32xf32>
    %187 = arith.addf %186, %185 : vector<2x32xf32>
    %188 = arith.divf %186, %187 : vector<2x32xf32>
    %189 = arith.mulf %180, %165 : vector<2x32xf32>
    %190 = arith.mulf %174, %182 : vector<2x32xf32>
    %191 = arith.addf %189, %190 : vector<2x32xf32>
    %192 = math.tanh %191 : vector<2x32xf32>
    %193 = arith.mulf %188, %192 : vector<2x32xf32>
    %c0_85 = arith.constant 0 : index
    %c0_86 = arith.constant 0 : index
    %194 = vector.load %arg7[%c0_85, %c0_86] : memref<2x32xf32, #tpu.memory_space<vmem>>, vector<2x32xf32>
    tpu.vector_store %arg7[%c0_85, %c0_86], %193 {strides = array<i32>} : memref<2x32xf32, #tpu.memory_space<vmem>>, vector<2x32xf32>,
    %c0_87 = arith.constant 0 : index
    %c0_88 = arith.constant 0 : index
    %195 = vector.load %arg8[%c0_87, %c0_88] : memref<2x32xf32, #tpu.memory_space<vmem>>, vector<2x32xf32>
    tpu.vector_store %arg8[%c0_87, %c0_88], %191 {strides = array<i32>} : memref<2x32xf32, #tpu.memory_space<vmem>>, vector<2x32xf32>,
    %196 = arith.index_cast %c2_i32 : i32 to index
    %c0_89 = arith.constant 0 : index
    %c0_90 = arith.constant 0 : index
    %197 = vector.load %arg5[%196, %c0_89, %c0_90] : memref<4x2x32xf32, #tpu.memory_space<vmem>>, vector<1x2x32xf32>
    %198 = vector.shape_cast %197 : vector<1x2x32xf32> to vector<2x32xf32>
    %199 = vector.shape_cast %193 : vector<2x32xf32> to vector<1x2x32xf32>
    tpu.vector_store %arg5[%196, %c0_89, %c0_90], %199 {strides = array<i32>} : memref<4x2x32xf32, #tpu.memory_space<vmem>>, vector<1x2x32xf32>,
    %c3_i32_91 = arith.constant 3 : i32
    %200 = arith.subi %c3_i32_91, %c2_i32 : i32
    %201 = arith.index_cast %200 : i32 to index
    %c0_92 = arith.constant 0 : index
    %c0_93 = arith.constant 0 : index
    %202 = vector.load %arg2[%201, %c0_92, %c0_93] : memref<4x2x128xf32, #tpu.memory_space<vmem>>, vector<1x2x128xf32>
    %203 = vector.shape_cast %202 : vector<1x2x128xf32> to vector<2x128xf32>
    %c0_94 = arith.constant 0 : index
    %c0_95 = arith.constant 0 : index
    %204 = vector.load %arg9[%c0_94, %c0_95] : memref<2x32xf32, #tpu.memory_space<vmem>>, vector<2x32xf32>
    %c0_96 = arith.constant 0 : index
    %c0_97 = arith.constant 0 : index
    %205 = vector.load %arg10[%c0_96, %c0_97] : memref<2x32xf32, #tpu.memory_space<vmem>>, vector<2x32xf32>
    %c0_98 = arith.constant 0 : index
    %c0_99 = arith.constant 0 : index
    %206 = vector.load %arg4[%c0_98, %c0_99] : memref<32x128xf32, #tpu.memory_space<vmem>>, vector<32x128xf32>
    %cst_100 = arith.constant dense<0.000000e+00> : vector<2x128xf32>
    %207 = tpu.matmul %204, %206, %cst_100 {dimension_numbers = #tpu.dot_dimension_numbers<[1], [0], [0], [1], [0, 0, 1, 1], [], []>} : vector<2x32xf32>, vector<32x128xf32>, vector<2x128xf32> -> vector<2x128xf32>
    %208 = arith.addf %203, %207 : vector<2x128xf32>
    %209 = vector.extract_strided_slice %208 {offsets = [0, 0], sizes = [2, 32], strides = [1, 1]} : vector<2x128xf32> to vector<2x32xf32>
    %210 = arith.negf %209 : vector<2x32xf32>
    %211 = math.exp %210 : vector<2x32xf32>
    %cst_101 = arith.constant 1.000000e+00 : f32
    %212 = vector.broadcast %cst_101 : f32 to vector<2x32xf32>
    %213 = arith.addf %212, %211 : vector<2x32xf32>
    %214 = arith.divf %212, %213 : vector<2x32xf32>
    %215 = vector.extract_strided_slice %208 {offsets = [0, 32], sizes = [2, 32], strides = [1, 1]} : vector<2x128xf32> to vector<2x32xf32>
    %216 = arith.negf %215 : vector<2x32xf32>
    %217 = math.exp %216 : vector<2x32xf32>
    %cst_102 = arith.constant 1.000000e+00 : f32
    %218 = vector.broadcast %cst_102 : f32 to vector<2x32xf32>
    %219 = arith.addf %218, %217 : vector<2x32xf32>
    %220 = arith.divf %218, %219 : vector<2x32xf32>
    %221 = vector.extract_strided_slice %208 {offsets = [0, 64], sizes = [2, 32], strides = [1, 1]} : vector<2x128xf32> to vector<2x32xf32>
    %222 = math.tanh %221 : vector<2x32xf32>
    %223 = vector.extract_strided_slice %208 {offsets = [0, 96], sizes = [2, 32], strides = [1, 1]} : vector<2x128xf32> to vector<2x32xf32>
    %224 = arith.negf %223 : vector<2x32xf32>
    %225 = math.exp %224 : vector<2x32xf32>
    %cst_103 = arith.constant 1.000000e+00 : f32
    %226 = vector.broadcast %cst_103 : f32 to vector<2x32xf32>
    %227 = arith.addf %226, %225 : vector<2x32xf32>
    %228 = arith.divf %226, %227 : vector<2x32xf32>
    %229 = arith.mulf %220, %205 : vector<2x32xf32>
    %230 = arith.mulf %214, %222 : vector<2x32xf32>
    %231 = arith.addf %229, %230 : vector<2x32xf32>
    %232 = math.tanh %231 : vector<2x32xf32>
    %233 = arith.mulf %228, %232 : vector<2x32xf32>
    %c0_104 = arith.constant 0 : index
    %c0_105 = arith.constant 0 : index
    %234 = vector.load %arg9[%c0_104, %c0_105] : memref<2x32xf32, #tpu.memory_space<vmem>>, vector<2x32xf32>
    tpu.vector_store %arg9[%c0_104, %c0_105], %233 {strides = array<i32>} : memref<2x32xf32, #tpu.memory_space<vmem>>, vector<2x32xf32>,
    %c0_106 = arith.constant 0 : index
    %c0_107 = arith.constant 0 : index
    %235 = vector.load %arg10[%c0_106, %c0_107] : memref<2x32xf32, #tpu.memory_space<vmem>>, vector<2x32xf32>
    tpu.vector_store %arg10[%c0_106, %c0_107], %231 {strides = array<i32>} : memref<2x32xf32, #tpu.memory_space<vmem>>, vector<2x32xf32>,
    %236 = arith.index_cast %200 : i32 to index
    %c0_108 = arith.constant 0 : index
    %c0_109 = arith.constant 0 : index
    %237 = vector.load %arg6[%236, %c0_108, %c0_109] : memref<4x2x32xf32, #tpu.memory_space<vmem>>, vector<1x2x32xf32>
    %238 = vector.shape_cast %237 : vector<1x2x32xf32> to vector<2x32xf32>
    %239 = vector.shape_cast %233 : vector<2x32xf32> to vector<1x2x32xf32>
    tpu.vector_store %arg6[%236, %c0_108, %c0_109], %239 {strides = array<i32>} : memref<4x2x32xf32, #tpu.memory_space<vmem>>, vector<1x2x32xf32>,
    %c3_i32_110 = arith.constant 3 : i32
    %240 = arith.index_cast %c3_i32_110 : i32 to index
    %c0_111 = arith.constant 0 : index
    %c0_112 = arith.constant 0 : index
    %241 = vector.load %arg1[%240, %c0_111, %c0_112] : memref<4x2x128xf32, #tpu.memory_space<vmem>>, vector<1x2x128xf32>
    %242 = vector.shape_cast %241 : vector<1x2x128xf32> to vector<2x128xf32>
    %c0_113 = arith.constant 0 : index
    %c0_114 = arith.constant 0 : index
    %243 = vector.load %arg7[%c0_113, %c0_114] : memref<2x32xf32, #tpu.memory_space<vmem>>, vector<2x32xf32>
    %c0_115 = arith.constant 0 : index
    %c0_116 = arith.constant 0 : index
    %244 = vector.load %arg8[%c0_115, %c0_116] : memref<2x32xf32, #tpu.memory_space<vmem>>, vector<2x32xf32>
    %c0_117 = arith.constant 0 : index
    %c0_118 = arith.constant 0 : index
    %245 = vector.load %arg3[%c0_117, %c0_118] : memref<32x128xf32, #tpu.memory_space<vmem>>, vector<32x128xf32>
    %cst_119 = arith.constant dense<0.000000e+00> : vector<2x128xf32>
    %246 = tpu.matmul %243, %245, %cst_119 {dimension_numbers = #tpu.dot_dimension_numbers<[1], [0], [0], [1], [0, 0, 1, 1], [], []>} : vector<2x32xf32>, vector<32x128xf32>, vector<2x128xf32> -> vector<2x128xf32>
    %247 = arith.addf %242, %246 : vector<2x128xf32>
    %248 = vector.extract_strided_slice %247 {offsets = [0, 0], sizes = [2, 32], strides = [1, 1]} : vector<2x128xf32> to vector<2x32xf32>
    %249 = arith.negf %248 : vector<2x32xf32>
    %250 = math.exp %249 : vector<2x32xf32>
    %cst_120 = arith.constant 1.000000e+00 : f32
    %251 = vector.broadcast %cst_120 : f32 to vector<2x32xf32>
    %252 = arith.addf %251, %250 : vector<2x32xf32>
    %253 = arith.divf %251, %252 : vector<2x32xf32>
    %254 = vector.extract_strided_slice %247 {offsets = [0, 32], sizes = [2, 32], strides = [1, 1]} : vector<2x128xf32> to vector<2x32xf32>
    %255 = arith.negf %254 : vector<2x32xf32>
    %256 = math.exp %255 : vector<2x32xf32>
    %cst_121 = arith.constant 1.000000e+00 : f32
    %257 = vector.broadcast %cst_121 : f32 to vector<2x32xf32>
    %258 = arith.addf %257, %256 : vector<2x32xf32>
    %259 = arith.divf %257, %258 : vector<2x32xf32>
    %260 = vector.extract_strided_slice %247 {offsets = [0, 64], sizes = [2, 32], strides = [1, 1]} : vector<2x128xf32> to vector<2x32xf32>
    %261 = math.tanh %260 : vector<2x32xf32>
    %262 = vector.extract_strided_slice %247 {offsets = [0, 96], sizes = [2, 32], strides = [1, 1]} : vector<2x128xf32> to vector<2x32xf32>
    %263 = arith.negf %262 : vector<2x32xf32>
    %264 = math.exp %263 : vector<2x32xf32>
    %cst_122 = arith.constant 1.000000e+00 : f32
    %265 = vector.broadcast %cst_122 : f32 to vector<2x32xf32>
    %266 = arith.addf %265, %264 : vector<2x32xf32>
    %267 = arith.divf %265, %266 : vector<2x32xf32>
    %268 = arith.mulf %259, %244 : vector<2x32xf32>
    %269 = arith.mulf %253, %261 : vector<2x32xf32>
    %270 = arith.addf %268, %269 : vector<2x32xf32>
    %271 = math.tanh %270 : vector<2x32xf32>
    %272 = arith.mulf %267, %271 : vector<2x32xf32>
    %c0_123 = arith.constant 0 : index
    %c0_124 = arith.constant 0 : index
    %273 = vector.load %arg7[%c0_123, %c0_124] : memref<2x32xf32, #tpu.memory_space<vmem>>, vector<2x32xf32>
    tpu.vector_store %arg7[%c0_123, %c0_124], %272 {strides = array<i32>} : memref<2x32xf32, #tpu.memory_space<vmem>>, vector<2x32xf32>,
    %c0_125 = arith.constant 0 : index
    %c0_126 = arith.constant 0 : index
    %274 = vector.load %arg8[%c0_125, %c0_126] : memref<2x32xf32, #tpu.memory_space<vmem>>, vector<2x32xf32>
    tpu.vector_store %arg8[%c0_125, %c0_126], %270 {strides = array<i32>} : memref<2x32xf32, #tpu.memory_space<vmem>>, vector<2x32xf32>,
    %275 = arith.index_cast %c3_i32_110 : i32 to index
    %c0_127 = arith.constant 0 : index
    %c0_128 = arith.constant 0 : index
    %276 = vector.load %arg5[%275, %c0_127, %c0_128] : memref<4x2x32xf32, #tpu.memory_space<vmem>>, vector<1x2x32xf32>
    %277 = vector.shape_cast %276 : vector<1x2x32xf32> to vector<2x32xf32>
    %278 = vector.shape_cast %272 : vector<2x32xf32> to vector<1x2x32xf32>
    tpu.vector_store %arg5[%275, %c0_127, %c0_128], %278 {strides = array<i32>} : memref<4x2x32xf32, #tpu.memory_space<vmem>>, vector<1x2x32xf32>,
    %c3_i32_129 = arith.constant 3 : i32
    %279 = arith.subi %c3_i32_129, %c3_i32_110 : i32
    %280 = arith.index_cast %279 : i32 to index
    %c0_130 = arith.constant 0 : index
    %c0_131 = arith.constant 0 : index
    %281 = vector.load %arg2[%280, %c0_130, %c0_131] : memref<4x2x128xf32, #tpu.memory_space<vmem>>, vector<1x2x128xf32>
    %282 = vector.shape_cast %281 : vector<1x2x128xf32> to vector<2x128xf32>
    %c0_132 = arith.constant 0 : index
    %c0_133 = arith.constant 0 : index
    %283 = vector.load %arg9[%c0_132, %c0_133] : memref<2x32xf32, #tpu.memory_space<vmem>>, vector<2x32xf32>
    %c0_134 = arith.constant 0 : index
    %c0_135 = arith.constant 0 : index
    %284 = vector.load %arg10[%c0_134, %c0_135] : memref<2x32xf32, #tpu.memory_space<vmem>>, vector<2x32xf32>
    %c0_136 = arith.constant 0 : index
    %c0_137 = arith.constant 0 : index
    %285 = vector.load %arg4[%c0_136, %c0_137] : memref<32x128xf32, #tpu.memory_space<vmem>>, vector<32x128xf32>
    %cst_138 = arith.constant dense<0.000000e+00> : vector<2x128xf32>
    %286 = tpu.matmul %283, %285, %cst_138 {dimension_numbers = #tpu.dot_dimension_numbers<[1], [0], [0], [1], [0, 0, 1, 1], [], []>} : vector<2x32xf32>, vector<32x128xf32>, vector<2x128xf32> -> vector<2x128xf32>
    %287 = arith.addf %282, %286 : vector<2x128xf32>
    %288 = vector.extract_strided_slice %287 {offsets = [0, 0], sizes = [2, 32], strides = [1, 1]} : vector<2x128xf32> to vector<2x32xf32>
    %289 = arith.negf %288 : vector<2x32xf32>
    %290 = math.exp %289 : vector<2x32xf32>
    %cst_139 = arith.constant 1.000000e+00 : f32
    %291 = vector.broadcast %cst_139 : f32 to vector<2x32xf32>
    %292 = arith.addf %291, %290 : vector<2x32xf32>
    %293 = arith.divf %291, %292 : vector<2x32xf32>
    %294 = vector.extract_strided_slice %287 {offsets = [0, 32], sizes = [2, 32], strides = [1, 1]} : vector<2x128xf32> to vector<2x32xf32>
    %295 = arith.negf %294 : vector<2x32xf32>
    %296 = math.exp %295 : vector<2x32xf32>
    %cst_140 = arith.constant 1.000000e+00 : f32
    %297 = vector.broadcast %cst_140 : f32 to vector<2x32xf32>
    %298 = arith.addf %297, %296 : vector<2x32xf32>
    %299 = arith.divf %297, %298 : vector<2x32xf32>
    %300 = vector.extract_strided_slice %287 {offsets = [0, 64], sizes = [2, 32], strides = [1, 1]} : vector<2x128xf32> to vector<2x32xf32>
    %301 = math.tanh %300 : vector<2x32xf32>
    %302 = vector.extract_strided_slice %287 {offsets = [0, 96], sizes = [2, 32], strides = [1, 1]} : vector<2x128xf32> to vector<2x32xf32>
    %303 = arith.negf %302 : vector<2x32xf32>
    %304 = math.exp %303 : vector<2x32xf32>
    %cst_141 = arith.constant 1.000000e+00 : f32
    %305 = vector.broadcast %cst_141 : f32 to vector<2x32xf32>
    %306 = arith.addf %305, %304 : vector<2x32xf32>
    %307 = arith.divf %305, %306 : vector<2x32xf32>
    %308 = arith.mulf %299, %284 : vector<2x32xf32>
    %309 = arith.mulf %293, %301 : vector<2x32xf32>
    %310 = arith.addf %308, %309 : vector<2x32xf32>
    %311 = math.tanh %310 : vector<2x32xf32>
    %312 = arith.mulf %307, %311 : vector<2x32xf32>
    %c0_142 = arith.constant 0 : index
    %c0_143 = arith.constant 0 : index
    %313 = vector.load %arg9[%c0_142, %c0_143] : memref<2x32xf32, #tpu.memory_space<vmem>>, vector<2x32xf32>
    tpu.vector_store %arg9[%c0_142, %c0_143], %312 {strides = array<i32>} : memref<2x32xf32, #tpu.memory_space<vmem>>, vector<2x32xf32>,
    %c0_144 = arith.constant 0 : index
    %c0_145 = arith.constant 0 : index
    %314 = vector.load %arg10[%c0_144, %c0_145] : memref<2x32xf32, #tpu.memory_space<vmem>>, vector<2x32xf32>
    tpu.vector_store %arg10[%c0_144, %c0_145], %310 {strides = array<i32>} : memref<2x32xf32, #tpu.memory_space<vmem>>, vector<2x32xf32>,
    %315 = arith.index_cast %279 : i32 to index
    %c0_146 = arith.constant 0 : index
    %c0_147 = arith.constant 0 : index
    %316 = vector.load %arg6[%315, %c0_146, %c0_147] : memref<4x2x32xf32, #tpu.memory_space<vmem>>, vector<1x2x32xf32>
    %317 = vector.shape_cast %316 : vector<1x2x32xf32> to vector<2x32xf32>
    %318 = vector.shape_cast %312 : vector<2x32xf32> to vector<1x2x32xf32>
    tpu.vector_store %arg6[%315, %c0_146, %c0_147], %318 {strides = array<i32>} : memref<4x2x32xf32, #tpu.memory_space<vmem>>, vector<1x2x32xf32>,
    %c4_i32 = arith.constant 4 : i32
    return
  }
  func.func @transform_0(%arg0: i32) -> (i32, i32, i32) {
    %c0_i32 = arith.constant 0 : i32
    %c0_i32_0 = arith.constant 0 : i32
    %c0_i32_1 = arith.constant 0 : i32
    return %arg0, %c0_i32, %c0_i32_0 : i32, i32, i32
  }
  func.func @transform_1(%arg0: i32) -> (i32, i32, i32) {
    %c1_i32 = arith.constant 1 : i32
    %0 = arith.subi %c1_i32, %arg0 : i32
    %c0_i32 = arith.constant 0 : i32
    %c0_i32_0 = arith.constant 0 : i32
    %c0_i32_1 = arith.constant 0 : i32
    return %0, %c0_i32, %c0_i32_0 : i32, i32, i32
  }
  func.func @transform_2(%arg0: i32) -> (i32, i32) {
    %c0_i32 = arith.constant 0 : i32
    %c0_i32_0 = arith.constant 0 : i32
    %c0_i32_1 = arith.constant 0 : i32
    return %c0_i32, %c0_i32_0 : i32, i32
  }
  func.func @transform_3(%arg0: i32) -> (i32, i32) {
    %c0_i32 = arith.constant 0 : i32
    %c0_i32_0 = arith.constant 0 : i32
    %c0_i32_1 = arith.constant 0 : i32
    return %c0_i32, %c0_i32_0 : i32, i32
  }
  func.func @transform_4(%arg0: i32) -> (i32, i32, i32) {
    %c0_i32 = arith.constant 0 : i32
    %c0_i32_0 = arith.constant 0 : i32
    %c0_i32_1 = arith.constant 0 : i32
    return %arg0, %c0_i32, %c0_i32_0 : i32, i32, i32
  }
  func.func @transform_5(%arg0: i32) -> (i32, i32, i32) {
    %c1_i32 = arith.constant 1 : i32
    %0 = arith.subi %c1_i32, %arg0 : i32
    %c0_i32 = arith.constant 0 : i32
    %c0_i32_0 = arith.constant 0 : i32
    %c0_i32_1 = arith.constant 0 : i32
    return %0, %c0_i32, %c0_i32_0 : i32, i32, i32
  }
}

module attributes {stable_mosaic.version = 11 : i64} {
  func.func @_classifier_kernel(%arg0: i32, %arg1: memref<8x32xf32, #tpu.memory_space<vmem>>, %arg2: memref<8x32xf32, #tpu.memory_space<vmem>>, %arg3: memref<32x128xf32, #tpu.memory_space<vmem>>, %arg4: memref<1x128xf32, #tpu.memory_space<vmem>>, %arg5: memref<8x128xf32, #tpu.memory_space<vmem>>) attributes {dimension_semantics = [#tpu.dimension_semantics<parallel>], iteration_bounds = array<i64: 2>, scalar_prefetch = 0 : i64, scratch_operands = 0 : i64, tpu.core_type = #tpu.core_type<tc>, window_params = [{transform_indices = @transform_0, window_bounds = array<i64: 8, 32>}, {transform_indices = @transform_1, window_bounds = array<i64: 8, 32>}, {pipeline_mode = #tpu.pipeline_mode<synchronous>, transform_indices = @transform_2, window_bounds = array<i64: 32, 128>}, {pipeline_mode = #tpu.pipeline_mode<synchronous>, transform_indices = @transform_3, window_bounds = array<i64: 1, 128>}, {transform_indices = @transform_4, window_bounds = array<i64: 8, 128>}]} {
    %c0 = arith.constant 0 : index
    %c0_0 = arith.constant 0 : index
    %0 = vector.load %arg1[%c0, %c0_0] : memref<8x32xf32, #tpu.memory_space<vmem>>, vector<8x32xf32>
    %c0_1 = arith.constant 0 : index
    %c0_2 = arith.constant 0 : index
    %1 = vector.load %arg2[%c0_1, %c0_2] : memref<8x32xf32, #tpu.memory_space<vmem>>, vector<8x32xf32>
    %2 = arith.addf %0, %1 : vector<8x32xf32>
    %c0_3 = arith.constant 0 : index
    %c0_4 = arith.constant 0 : index
    %3 = vector.load %arg3[%c0_3, %c0_4] : memref<32x128xf32, #tpu.memory_space<vmem>>, vector<32x128xf32>
    %cst = arith.constant dense<0.000000e+00> : vector<8x128xf32>
    %4 = tpu.matmul %2, %3, %cst {dimension_numbers = #tpu.dot_dimension_numbers<[1], [0], [0], [1], [0, 0, 1, 1], [], []>} : vector<8x32xf32>, vector<32x128xf32>, vector<8x128xf32> -> vector<8x128xf32>
    %c0_5 = arith.constant 0 : index
    %c0_6 = arith.constant 0 : index
    %5 = vector.load %arg4[%c0_5, %c0_6] : memref<1x128xf32, #tpu.memory_space<vmem>>, vector<1x128xf32>
    %6 = vector.broadcast %5 : vector<1x128xf32> to vector<8x128xf32>
    %7 = arith.addf %4, %6 : vector<8x128xf32>
    %c0_7 = arith.constant 0 : index
    %c0_8 = arith.constant 0 : index
    %8 = vector.load %arg5[%c0_7, %c0_8] : memref<8x128xf32, #tpu.memory_space<vmem>>, vector<8x128xf32>
    tpu.vector_store %arg5[%c0_7, %c0_8], %7 {strides = array<i32>} : memref<8x128xf32, #tpu.memory_space<vmem>>, vector<8x128xf32>,
    return
  }
  func.func @transform_0(%arg0: i32) -> (i32, i32) {
    %c0_i32 = arith.constant 0 : i32
    %c0_i32_0 = arith.constant 0 : i32
    return %arg0, %c0_i32 : i32, i32
  }
  func.func @transform_1(%arg0: i32) -> (i32, i32) {
    %c0_i32 = arith.constant 0 : i32
    %c0_i32_0 = arith.constant 0 : i32
    return %arg0, %c0_i32 : i32, i32
  }
  func.func @transform_2(%arg0: i32) -> (i32, i32) {
    %c0_i32 = arith.constant 0 : i32
    %c0_i32_0 = arith.constant 0 : i32
    %c0_i32_1 = arith.constant 0 : i32
    return %c0_i32, %c0_i32_0 : i32, i32
  }
  func.func @transform_3(%arg0: i32) -> (i32, i32) {
    %c0_i32 = arith.constant 0 : i32
    %c0_i32_0 = arith.constant 0 : i32
    %c0_i32_1 = arith.constant 0 : i32
    return %c0_i32, %c0_i32_0 : i32, i32
  }
  func.func @transform_4(%arg0: i32) -> (i32, i32) {
    %c0_i32 = arith.constant 0 : i32
    %c0_i32_0 = arith.constant 0 : i32
    return %arg0, %c0_i32 : i32, i32
  }
}

</mosaic_0001>

<llo_original>
// kernel: deep_lstm_forward.5
$region0: #{deep_lstm_forward.5}
  #allocation0 [shape = 'u32[]', space=smem, size = 0x4, offset = 0x4, fixed_abs, tag = 'smem constant byte address 0x4 - core index']
  #allocation1 [shape = 'u32[144,128]{1,0:T(1,128)}', space=vmem, size = 0x12000, scoped, tag = 'internal scratch']
  %s0 = inlined_call_operand.vmem [shape: f32[16,16], index: 0, kind: input, shape index: {}]
  %s1 = inlined_call_operand.hbm [shape: f32[16,256], index: 1, kind: input, shape index: {}]
  %s2 = inlined_call_operand.hbm [shape: f32[1,256], index: 2, kind: input, shape index: {}]
  %s3 = inlined_call_operand.vmem [shape: f32[16,128], index: 3, kind: output, shape index: {0}]
  %s4 = inlined_call_operand.vmem [shape: f32[16,128], index: 4, kind: output, shape index: {1}]
  %5 = xla_tuple %s3, %s4
  %s6 = sld [smem:[#allocation0]]
  $region61: #{deep_lstm_forward.5} parent=0
    _
  %s8 = ssub.s32 1, %s6
  %s9 = scalar_select 0, %s8, %s6
  $region1: #{deep_lstm_forward.5} parent=0
    #allocation2 [shape = 'u8[16384]{0}', space=vmem, size = 0x4000, scoped, tag = 'input window, operand 1, single buffered']
    #allocation3 [shape = 's32[2]{0}', space=sflag, size = 0x8, scoped, tag = 'scoped memory for deep_lstm_forward.5']
    #allocation4 [shape = 'u8[1024]{0}', space=vmem, size = 0x400, scoped, tag = 'input window, operand 2, single buffered']
    #allocation5 [shape = 's32[1]{0}', space=sflag, size = 0x4, scoped, tag = 'scoped memory for deep_lstm_forward.5']
    %10 = vsyncpa [#allocation3], 0
    %11 = vsyncpa [#allocation5], 0
    loop: start=0, step=1, limit=4
    $region2: #{deep_lstm_forward.5} parent=1 // loop_pre_header
      _
    $region3: #{deep_lstm_forward.5} parent=1 // loop_header
      %s13 = sphi 0, %s17
      %p14 = scmp.ge.s32.totalorder %s13, 4
      %s23 = sphi 0, %s25
      %s26 = sphi 0, %s23
      %s27 = sphi 0, %s26
      %s43 = sphi 0, %s27
      %s47 = sphi 0, %s47
      %s49 = sphi 0, %s47
      %s50 = sphi 0, %s49
      %s64 = sphi 0, %s50
      %s68 = sphi 0, %s68
      %s70 = sphi 0, %s68
      %s71 = sphi 0, %s70
      %s85 = sphi 0, %s71
      %s91 = sphi 0, %s93
      %s94 = sphi 0, %s91
      %s95 = sphi 0, %s94
      %s111 = sphi 0, %s95
      %s117 = sphi 0, %s119
      %s120 = sphi 0, %s117
      %s121 = sphi 0, %s120
      %s137 = sphi 0, %s121
    $region4: #{deep_lstm_forward.5} parent=1 // loop_header_branch
      %16 = sbr.rel (%p14) target = $region8
    $region5: #{deep_lstm_forward.5} parent=1 // loop_body
      %s18 = ssub.s32 %s13, 1
      %s19 = ssub.s32 %s13, 2
      %s20 = sadd.s32 %s13, 1
      %s21 = ssub.s32 %s13, %s20
      %p22 = scmp.eq.s32.totalorder %s21, 0
      %s24 = sadd.s32 %s23, 1
      %s25 = scalar_select %p22, %s23, %s24
      %p28 = pneg %p22
      %p29 = scmp.eq.s32.totalorder %s13, 1
      %p30 = por %p28, %p29
      %p31 = scmp.ne.s32.totalorder %s23, %s26
      %p32 = scmp.eq.s32.totalorder %s13, 0
      %p33 = por %p31, %p32
      %p34 = scmp.ne.s32.totalorder %s23, %s26
      %p35 = scmp.eq.s32.totalorder %s18, 1
      %p36 = por %p34, %p35
      %p37 = scmp.ne.s32.totalorder %s26, %s27
      %p38 = scmp.eq.s32.totalorder %s18, 0
      %p39 = por %p37, %p38
      %p40 = scmp.ne.s32.totalorder %s26, %s27
      %p41 = scmp.eq.s32.totalorder %s19, 1
      %p42 = por %p40, %p41
      %p44 = scmp.ne.s32.totalorder %s27, %s43
      %p45 = scmp.eq.s32.totalorder %s19, 0
      %p46 = por %p44, %p45
      %s48 = sadd.s32 %s47, 1
      %p51 = scmp.eq.s32.totalorder %s13, 1
      %p52 = scmp.ne.s32.totalorder %s47, %s49
      %p53 = scmp.eq.s32.totalorder %s13, 0
      %p54 = por %p52, %p53
      %p55 = scmp.ne.s32.totalorder %s47, %s49
      %p56 = scmp.eq.s32.totalorder %s18, 1
      %p57 = por %p55, %p56
      %p58 = scmp.ne.s32.totalorder %s49, %s50
      %p59 = scmp.eq.s32.totalorder %s18, 0
      %p60 = por %p58, %p59
      %p61 = scmp.ne.s32.totalorder %s49, %s50
      %p62 = scmp.eq.s32.totalorder %s19, 1
      %p63 = por %p61, %p62
      %p65 = scmp.ne.s32.totalorder %s50, %s64
      %p66 = scmp.eq.s32.totalorder %s19, 0
      %p67 = por %p65, %p66
      %s69 = sadd.s32 %s68, 1
      %p72 = scmp.eq.s32.totalorder %s13, 1
      %p73 = scmp.ne.s32.totalorder %s68, %s70
      %p74 = scmp.eq.s32.totalorder %s13, 0
      %p75 = por %p73, %p74
      %p76 = scmp.ne.s32.totalorder %s68, %s70
      %p77 = scmp.eq.s32.totalorder %s18, 1
      %p78 = por %p76, %p77
      %p79 = scmp.ne.s32.totalorder %s70, %s71
      %p80 = scmp.eq.s32.totalorder %s18, 0
      %p81 = por %p79, %p80
      %p82 = scmp.ne.s32.totalorder %s70, %s71
      %p83 = scmp.eq.s32.totalorder %s19, 1
      %p84 = por %p82, %p83
      %p86 = scmp.ne.s32.totalorder %s71, %s85
      %p87 = scmp.eq.s32.totalorder %s19, 0
      %p88 = por %p86, %p87
      %s89 = ssub.s32 %s13, %s20
      %p90 = scmp.eq.s32.totalorder %s89, 0
      %s92 = sadd.s32 %s91, 1
      %s93 = scalar_select %p90, %s91, %s92
      %p96 = pneg %p90
      %p97 = scmp.eq.s32.totalorder %s13, 1
      %p98 = por %p96, %p97
      %p99 = scmp.ne.s32.totalorder %s91, %s94
      %p100 = scmp.eq.s32.totalorder %s13, 0
      %p101 = por %p99, %p100
      %p102 = scmp.ne.s32.totalorder %s91, %s94
      %p103 = scmp.eq.s32.totalorder %s18, 1
      %p104 = por %p102, %p103
      %p105 = scmp.ne.s32.totalorder %s94, %s95
      %p106 = scmp.eq.s32.totalorder %s18, 0
      %p107 = por %p105, %p106
      %p108 = scmp.ne.s32.totalorder %s94, %s95
      %p109 = scmp.eq.s32.totalorder %s19, 1
      %p110 = por %p108, %p109
      %p112 = scmp.ne.s32.totalorder %s95, %s111
      %p113 = scmp.eq.s32.totalorder %s19, 0
      %p114 = por %p112, %p113
      %s115 = ssub.s32 %s13, %s20
      %p116 = scmp.eq.s32.totalorder %s115, 0
      %s118 = sadd.s32 %s117, 1
      %s119 = scalar_select %p116, %s117, %s118
      %p122 = pneg %p116
      %p123 = scmp.eq.s32.totalorder %s13, 1
      %p124 = por %p122, %p123
      %p125 = scmp.ne.s32.totalorder %s117, %s120
      %p126 = scmp.eq.s32.totalorder %s13, 0
      %p127 = por %p125, %p126
      %p128 = scmp.ne.s32.totalorder %s117, %s120
      %p129 = scmp.eq.s32.totalorder %s18, 1
      %p130 = por %p128, %p129
      %p131 = scmp.ne.s32.totalorder %s120, %s121
      %p132 = scmp.eq.s32.totalorder %s18, 0
      %p133 = por %p131, %p132
      %p134 = scmp.ne.s32.totalorder %s120, %s121
      %p135 = scmp.eq.s32.totalorder %s19, 1
      %p136 = por %p134, %p135
      %p138 = scmp.ne.s32.totalorder %s121, %s137
      %p139 = scmp.eq.s32.totalorder %s19, 0
      %p140 = por %p138, %p139
      %p141 = scmp.le.s32.totalorder 1, %s13
      %p142 = scmp.lt.s32.totalorder %s13, 3
      %p143 = pnand %p141, %p142
      %p144 = pneg %p143
      // Predicated region
      $region9: #{deep_lstm_forward.5} parent=5 // pred_check
        _
      $region10: #{deep_lstm_forward.5} parent=5 // pred_check_branch
        %146 = sbr.rel (%p143) target = $region12
      $region11: #{deep_lstm_forward.5} parent=5 // pred_region
        %s147 = ssub.s32 %s13, 1
        // Predicated region
        $region13: #{deep_lstm_forward.5} parent=11 // pred_check
          %p148 = pneg %p60
        $region14: #{deep_lstm_forward.5} parent=11 // pred_check_branch
          %150 = sbr.rel (%p148) target = $region16
        $region15: #{deep_lstm_forward.5} parent=11 // pred_region
          %s152 = ssub.s32 512, 512
          %153 = vsyncadd [#allocation3], %s152
          %s154 = sshll.u32 [#allocation2], 4
          %s155 = int_to_ptr.vmem [resolvable:$true] %s154
          %160 = dma.hbm_to_vmem [thread:$0]  %s1, 512, %s155, [#allocation3], 256, 256, 16
        $region16: #{deep_lstm_forward.5} parent=11 // pred_fallthru
          _
        // Predicated region
        $region17: #{deep_lstm_forward.5} parent=11 // pred_check
          %p161 = pneg %p81
        $region18: #{deep_lstm_forward.5} parent=11 // pred_check_branch
          %163 = sbr.rel (%p161) target = $region20
        $region19: #{deep_lstm_forward.5} parent=11 // pred_region
          %s165 = ssub.s32 32, 32
          %166 = vsyncadd [#allocation5], %s165
          %s168 = sshll.u32 [#allocation4], 4
          %s169 = int_to_ptr.vmem [resolvable:$true] %s168
          %171 = dma.hbm_to_vmem [thread:$0]  %s2, 32, %s169, [#allocation5]
        $region20: #{deep_lstm_forward.5} parent=11 // pred_fallthru
          _
      $region12: #{deep_lstm_forward.5} parent=5 // pred_fallthru
        _
      %p172 = scmp.lt.s32.totalorder %s13, 2
      // Predicated region
      $region21: #{deep_lstm_forward.5} parent=5 // pred_check
        %p173 = pneg %p172
      $region22: #{deep_lstm_forward.5} parent=5 // pred_check_branch
        %175 = sbr.rel (%p173) target = $region24
      $region23: #{deep_lstm_forward.5} parent=5 // pred_region
        // Predicated region
        $region25: #{deep_lstm_forward.5} parent=23 // pred_check
          %p176 = pneg %p33
        $region26: #{deep_lstm_forward.5} parent=23 // pred_check_branch
          %178 = sbr.rel (%p176) target = $region28
        $region27: #{deep_lstm_forward.5} parent=23 // pred_region
          %p179 = scmp.lt.s32.totalorder %s13, 1
          %s180 = scalar_select %p179, %s13, 1
          %s181 = smul.addr %s180, 8
          %s182 = scalar_lea.vmem %s0, %s181
        $region28: #{deep_lstm_forward.5} parent=23 // pred_fallthru
          _
      $region24: #{deep_lstm_forward.5} parent=5 // pred_fallthru
        _
      %p183 = scmp.le.s32.totalorder 1, %s13
      %p184 = scmp.lt.s32.totalorder %s13, 3
      %p185 = pnand %p183, %p184
      %p186 = pneg %p185
      // Predicated region
      $region29: #{deep_lstm_forward.5} parent=5 // pred_check
        _
      $region30: #{deep_lstm_forward.5} parent=5 // pred_check_branch
        %188 = sbr.rel (%p185) target = $region32
      $region31: #{deep_lstm_forward.5} parent=5 // pred_region
        %s189 = ssub.s32 %s13, 1
        // Predicated region
        $region33: #{deep_lstm_forward.5} parent=31 // pred_check
          %p190 = pneg %p60
        $region34: #{deep_lstm_forward.5} parent=31 // pred_check_branch
          %192 = sbr.rel (%p190) target = $region36
        $region35: #{deep_lstm_forward.5} parent=31 // pred_region
          %193 = dma.done [#allocation3], 512
        $region36: #{deep_lstm_forward.5} parent=31 // pred_fallthru
          _
        // Predicated region
        $region37: #{deep_lstm_forward.5} parent=31 // pred_check
          %p194 = pneg %p81
        $region38: #{deep_lstm_forward.5} parent=31 // pred_check_branch
          %196 = sbr.rel (%p194) target = $region40
        $region39: #{deep_lstm_forward.5} parent=31 // pred_region
          %197 = dma.done [#allocation5], 32
        $region40: #{deep_lstm_forward.5} parent=31 // pred_fallthru
          _
        %p198 = scmp.lt.s32.totalorder %s18, 1
        %s199 = scalar_select %p198, %s18, 1
        %s200 = smul.addr %s199, 8
        %s201 = scalar_lea.vmem %s0, %s200
        %p202 = pneg %p39
        %p203 = pneg %p36
        %p204 = pneg %p60
        %p205 = pneg %p57
        %p206 = pneg %p81
        %p207 = pneg %p78
        %p208 = pneg %p107
        %p209 = pneg %p104
        %p210 = scmp.lt.s32.totalorder %s18, 1
        %s211 = scalar_select %p210, %s18, 1
        %s212 = smul.addr %s211, 8
        %s213 = scalar_lea.vmem %s3, %s212
        %p214 = pneg %p133
        %p215 = pneg %p130
        %p216 = scmp.lt.s32.totalorder %s18, 1
        %s217 = scalar_select %p216, %s18, 1
        %s218 = smul.addr %s217, 8
        %s219 = scalar_lea.vmem %s4, %s218
        %p220 = scmp.lt.s32.totalorder %s18, 1
        %s221 = scalar_select %p220, %s18, 1
        %s222 = smul.addr %s221, 8
        %s223 = scalar_lea.vmem %s0, %s222
        %p224 = scmp.lt.s32.totalorder %s18, 1
        %s225 = scalar_select %p224, %s18, 1
        %s226 = smul.addr %s225, 8
        %s227 = scalar_lea.vmem %s3, %s226
        %p228 = scmp.lt.s32.totalorder %s18, 1
        %s229 = scalar_select %p228, %s18, 1
        %s230 = smul.addr %s229, 8
        %s231 = scalar_lea.vmem %s4, %s230
        %v232 = vld [vmem:[%s223] sm:$0xff]
        %v233 = vld [vmem:[#allocation2] sm:$0xff]
        %v234 = vld [vmem:[#allocation2 + $0x8] sm:$0xff]
        %v235 = vld [vmem:[#allocation2 + $0x10] sm:$0xff]
        %v236 = vld [vmem:[#allocation2 + $0x18] sm:$0xff]
        %v237 = vld [vmem:[#allocation4] sm:$0x3]
        %v239 = vlaneseq
        %v240 = vshrl.u32 %v239, 7
        %v241 = vsub.s32 0, %v240
        %v242 = vrot.slane %v237, %v241
        %v243 = vlaneseq
        %v244 = vshrl.u32 %v243, 7
        %v245 = vsub.s32 1, %v244
        %v246 = vrot.slane %v237, %v245
        %vm249 = vcmask 130048
        %v251 = vsel %vm249, %v232, 0
        %253 = vmatprep.subr.mxu0 0.0
        %254 = vmatpush1.msra.mxu0 0.0
        %255 = vmatprep.subr.mxu0 0.0
        %256 = vmatpush1.msra.mxu0 0.0
        %257 = vmatprep.subr.mxu0 0.0
        %258 = vmatpush1.msra.mxu0 0.0
        %259 = vmatprep.subr.mxu0 0.0
        %260 = vmatpush1.msra.mxu0 0.0
        %261 = vmatprep.subr.mxu0 0.0
        %262 = vmatpush1.msra.mxu0 0.0
        %263 = vmatprep.subr.mxu0 0.0
        %264 = vmatpush1.msra.mxu0 0.0
        %265 = vmatprep.subr.mxu0 0.0
        %266 = vmatpush1.msra.mxu0 0.0
        %267 = vmatprep.subr.mxu0 0.0
        %268 = vmatpush1.msra.mxu0 0.0
        %269 = vmatprep.subr.mxu0 0.0
        %270 = vmatpush1.msra.mxu0 0.0
        %271 = vmatprep.subr.mxu0 0.0
        %272 = vmatpush1.msra.mxu0 0.0
        %273 = vmatprep.subr.mxu0 0.0
        %274 = vmatpush1.msra.mxu0 0.0
        %275 = vmatprep.subr.mxu0 0.0
        %276 = vmatpush1.msra.mxu0 0.0
        %277 = vmatprep.subr.mxu0 0.0
        %278 = vmatpush1.msra.mxu0 0.0
        %279 = vmatprep.subr.mxu0 0.0
        %280 = vmatpush1.msra.mxu0 0.0
        %281 = vmatprep.subr.mxu0 %v236
        %282 = vmatpush1.msra.mxu0 %v235
        %283 = vmatprep.subr.mxu0 %v234
        %284 = vmatpush1.msra.mxu0 %v233
        %285 = vmatprep.subr.mxu0 0.0
        %286 = vmatpush2.msra.mxu0 0.0
        %287 = vmatprep.subr.mxu0 0.0
        %288 = vmatpush2.msra.mxu0 0.0
        %289 = vmatprep.subr.mxu0 0.0
        %290 = vmatpush2.msra.mxu0 0.0
        %291 = vmatprep.subr.mxu0 0.0
        %292 = vmatpush2.msra.mxu0 0.0
        %293 = vmatprep.subr.mxu0 0.0
        %294 = vmatpush2.msra.mxu0 0.0
        %295 = vmatprep.subr.mxu0 0.0
        %296 = vmatpush2.msra.mxu0 0.0
        %297 = vmatprep.subr.mxu0 0.0
        %298 = vmatpush2.msra.mxu0 0.0
        %299 = vmatprep.subr.mxu0 0.0
        %300 = vmatpush2.msra.mxu0 0.0
        %301 = vmatprep.subr.mxu0 0.0
        %302 = vmatpush2.msra.mxu0 0.0
        %303 = vmatprep.subr.mxu0 0.0
        %304 = vmatpush2.msra.mxu0 0.0
        %305 = vmatprep.subr.mxu0 0.0
        %306 = vmatpush2.msra.mxu0 0.0
        %307 = vmatprep.subr.mxu0 0.0
        %308 = vmatpush2.msra.mxu0 0.0
        %309 = vmatprep.subr.mxu0 0.0
        %310 = vmatpush2.msra.mxu0 0.0
        %311 = vmatprep.subr.mxu0 0.0
        %312 = vmatpush2.msra.mxu0 0.0
        %313 = vmatprep.subr.mxu0 0.0
        %314 = vmatpush2.msra.mxu0 0.0
        %315 = vmatprep.subr.mxu0 0.0
        %316 = vmatpush2.msra.mxu0 0.0
        %317 = vmatprep.mubr.f32.mxu0 0.0
        %318 = vmatmul.mubr.f32.gmra.mxu0 %v251
        %v319 = vpop.f32.mrf.mxu0
        %v320 = vadd.f32 %v242, %v319
        %v321 = vpop.f32.mrf.mxu0
        %v322 = vadd.f32 %v246, %v321
        %323 = vdwg.mxu0
        %324 = vst [vmem:[%s227] sm:$0xff] %v320
        %325 = vst [vmem:[%s231] sm:$0xff] %v322
        %p326 = scmp.lt.s32.totalorder %s18, 1
        %s327 = scalar_select %p326, %s18, 1
        %s328 = smul.addr %s327, 8
        %s329 = scalar_lea.vmem %s3, %s328
        %p330 = scmp.lt.s32.totalorder %s18, 1
        %s331 = scalar_select %p330, %s18, 1
        %s332 = smul.addr %s331, 8
        %s333 = scalar_lea.vmem %s4, %s332
        // Predicated region
        $region41: #{deep_lstm_forward.5} parent=31 // pred_check
          %p334 = pneg %p104
        $region42: #{deep_lstm_forward.5} parent=31 // pred_check_branch
          %336 = sbr.rel (%p334) target = $region44
        $region43: #{deep_lstm_forward.5} parent=31 // pred_region
          _
        $region44: #{deep_lstm_forward.5} parent=31 // pred_fallthru
          _
        // Predicated region
        $region45: #{deep_lstm_forward.5} parent=31 // pred_check
          %p337 = pneg %p130
        $region46: #{deep_lstm_forward.5} parent=31 // pred_check_branch
          %339 = sbr.rel (%p337) target = $region48
        $region47: #{deep_lstm_forward.5} parent=31 // pred_region
          _
        $region48: #{deep_lstm_forward.5} parent=31 // pred_fallthru
          _
      $region32: #{deep_lstm_forward.5} parent=5 // pred_fallthru
        _
      %p340 = scmp.le.s32.totalorder 2, %s13
      // Predicated region
      $region49: #{deep_lstm_forward.5} parent=5 // pred_check
        %p341 = pneg %p340
      $region50: #{deep_lstm_forward.5} parent=5 // pred_check_branch
        %343 = sbr.rel (%p341) target = $region52
      $region51: #{deep_lstm_forward.5} parent=5 // pred_region
        %s344 = ssub.s32 %s13, 2
        // Predicated region
        $region53: #{deep_lstm_forward.5} parent=51 // pred_check
          %p345 = pneg %p110
        $region54: #{deep_lstm_forward.5} parent=51 // pred_check_branch
          %347 = sbr.rel (%p345) target = $region56
        $region55: #{deep_lstm_forward.5} parent=51 // pred_region
          %p348 = scmp.lt.s32.totalorder %s19, 1
          %s349 = scalar_select %p348, %s19, 1
          %s350 = smul.addr %s349, 8
          %s351 = scalar_lea.vmem %s3, %s350
        $region56: #{deep_lstm_forward.5} parent=51 // pred_fallthru
          _
        // Predicated region
        $region57: #{deep_lstm_forward.5} parent=51 // pred_check
          %p352 = pneg %p136
        $region58: #{deep_lstm_forward.5} parent=51 // pred_check_branch
          %354 = sbr.rel (%p352) target = $region60
        $region59: #{deep_lstm_forward.5} parent=51 // pred_region
          %p355 = scmp.lt.s32.totalorder %s19, 1
          %s356 = scalar_select %p355, %s19, 1
          %s357 = smul.addr %s356, 8
          %s358 = scalar_lea.vmem %s4, %s357
        $region60: #{deep_lstm_forward.5} parent=51 // pred_fallthru
          _
      $region52: #{deep_lstm_forward.5} parent=5 // pred_fallthru
        _
    $region6: #{deep_lstm_forward.5} parent=1 // loop_footer
      %s17 = sadd.s32 1, %s13
    $region7: #{deep_lstm_forward.5} parent=1 // loop_footer_branch
      %12 = sbr.rel target = $region3
    $region8: #{deep_lstm_forward.5} parent=1 // loop_exit
      _
    %359 = vsyncpa [#allocation3], 1
    %s360 = scalar_lea.sflag [#allocation3], 1
    %361 = vsyncpa %s360, 1
    %362 = vsyncpa [#allocation5], 1

// kernel: deep_lstm_forward.7
$region0: #{deep_lstm_forward.7}
  #allocation0 [shape = 'u32[]', space=smem, size = 0x4, offset = 0x4, fixed_abs, tag = 'smem constant byte address 0x4 - core index']
  #allocation1 [shape = 'u32[144,128]{1,0:T(1,128)}', space=vmem, size = 0x12000, scoped, tag = 'internal scratch']
  %s0 = inlined_call_operand.vmem [shape: f32[16,32], index: 0, kind: input, shape index: {}]
  %s1 = inlined_call_operand.vmem [shape: f32[16,32], index: 1, kind: input, shape index: {}]
  %s2 = inlined_call_operand.vmem [shape: f32[64,256], index: 2, kind: input, shape index: {}]
  %s3 = inlined_call_operand.vmem [shape: f32[1,256], index: 3, kind: input, shape index: {}]
  %s4 = inlined_call_operand.vmem [shape: f32[16,128], index: 4, kind: output, shape index: {0}]
  %s5 = inlined_call_operand.vmem [shape: f32[16,128], index: 5, kind: output, shape index: {1}]
  %6 = xla_tuple %s4, %s5
  %s7 = sld [smem:[#allocation0]]
  $region57: #{deep_lstm_forward.7} parent=0
    _
  %s9 = ssub.s32 1, %s7
  %s10 = scalar_select 0, %s9, %s7
  loop: start=0, step=1, limit=4
  $region2: #{deep_lstm_forward.7} parent=0 // loop_pre_header
    _
  $region3: #{deep_lstm_forward.7} parent=0 // loop_header
    %s12 = sphi 0, %s16
    %p13 = scmp.ge.s32.totalorder %s12, 4
    %s22 = sphi 0, %s24
    %s25 = sphi 0, %s22
    %s26 = sphi 0, %s25
    %s42 = sphi 0, %s26
    %s48 = sphi 0, %s50
    %s51 = sphi 0, %s48
    %s52 = sphi 0, %s51
    %s68 = sphi 0, %s52
    %s72 = sphi 0, %s72
    %s74 = sphi 0, %s72
    %s75 = sphi 0, %s74
    %s89 = sphi 0, %s75
    %s93 = sphi 0, %s93
    %s95 = sphi 0, %s93
    %s96 = sphi 0, %s95
    %s110 = sphi 0, %s96
    %s116 = sphi 0, %s118
    %s119 = sphi 0, %s116
    %s120 = sphi 0, %s119
    %s136 = sphi 0, %s120
    %s142 = sphi 0, %s144
    %s145 = sphi 0, %s142
    %s146 = sphi 0, %s145
    %s162 = sphi 0, %s146
  $region4: #{deep_lstm_forward.7} parent=0 // loop_header_branch
    %15 = sbr.rel (%p13) target = $region8
  $region5: #{deep_lstm_forward.7} parent=0 // loop_body
    %s17 = ssub.s32 %s12, 1
    %s18 = ssub.s32 %s12, 2
    %s19 = sadd.s32 %s12, 1
    %s20 = ssub.s32 %s12, %s19
    %p21 = scmp.eq.s32.totalorder %s20, 0
    %s23 = sadd.s32 %s22, 1
    %s24 = scalar_select %p21, %s22, %s23
    %p27 = pneg %p21
    %p28 = scmp.eq.s32.totalorder %s12, 1
    %p29 = por %p27, %p28
    %p30 = scmp.ne.s32.totalorder %s22, %s25
    %p31 = scmp.eq.s32.totalorder %s12, 0
    %p32 = por %p30, %p31
    %p33 = scmp.ne.s32.totalorder %s22, %s25
    %p34 = scmp.eq.s32.totalorder %s17, 1
    %p35 = por %p33, %p34
    %p36 = scmp.ne.s32.totalorder %s25, %s26
    %p37 = scmp.eq.s32.totalorder %s17, 0
    %p38 = por %p36, %p37
    %p39 = scmp.ne.s32.totalorder %s25, %s26
    %p40 = scmp.eq.s32.totalorder %s18, 1
    %p41 = por %p39, %p40
    %p43 = scmp.ne.s32.totalorder %s26, %s42
    %p44 = scmp.eq.s32.totalorder %s18, 0
    %p45 = por %p43, %p44
    %s46 = ssub.s32 %s12, %s19
    %p47 = scmp.eq.s32.totalorder %s46, 0
    %s49 = sadd.s32 %s48, 1
    %s50 = scalar_select %p47, %s48, %s49
    %p53 = pneg %p47
    %p54 = scmp.eq.s32.totalorder %s12, 1
    %p55 = por %p53, %p54
    %p56 = scmp.ne.s32.totalorder %s48, %s51
    %p57 = scmp.eq.s32.totalorder %s12, 0
    %p58 = por %p56, %p57
    %p59 = scmp.ne.s32.totalorder %s48, %s51
    %p60 = scmp.eq.s32.totalorder %s17, 1
    %p61 = por %p59, %p60
    %p62 = scmp.ne.s32.totalorder %s51, %s52
    %p63 = scmp.eq.s32.totalorder %s17, 0
    %p64 = por %p62, %p63
    %p65 = scmp.ne.s32.totalorder %s51, %s52
    %p66 = scmp.eq.s32.totalorder %s18, 1
    %p67 = por %p65, %p66
    %p69 = scmp.ne.s32.totalorder %s52, %s68
    %p70 = scmp.eq.s32.totalorder %s18, 0
    %p71 = por %p69, %p70
    %s73 = sadd.s32 %s72, 1
    %p76 = scmp.eq.s32.totalorder %s12, 1
    %p77 = scmp.ne.s32.totalorder %s72, %s74
    %p78 = scmp.eq.s32.totalorder %s12, 0
    %p79 = por %p77, %p78
    %p80 = scmp.ne.s32.totalorder %s72, %s74
    %p81 = scmp.eq.s32.totalorder %s17, 1
    %p82 = por %p80, %p81
    %p83 = scmp.ne.s32.totalorder %s74, %s75
    %p84 = scmp.eq.s32.totalorder %s17, 0
    %p85 = por %p83, %p84
    %p86 = scmp.ne.s32.totalorder %s74, %s75
    %p87 = scmp.eq.s32.totalorder %s18, 1
    %p88 = por %p86, %p87
    %p90 = scmp.ne.s32.totalorder %s75, %s89
    %p91 = scmp.eq.s32.totalorder %s18, 0
    %p92 = por %p90, %p91
    %s94 = sadd.s32 %s93, 1
    %p97 = scmp.eq.s32.totalorder %s12, 1
    %p98 = scmp.ne.s32.totalorder %s93, %s95
    %p99 = scmp.eq.s32.totalorder %s12, 0
    %p100 = por %p98, %p99
    %p101 = scmp.ne.s32.totalorder %s93, %s95
    %p102 = scmp.eq.s32.totalorder %s17, 1
    %p103 = por %p101, %p102
    %p104 = scmp.ne.s32.totalorder %s95, %s96
    %p105 = scmp.eq.s32.totalorder %s17, 0
    %p106 = por %p104, %p105
    %p107 = scmp.ne.s32.totalorder %s95, %s96
    %p108 = scmp.eq.s32.totalorder %s18, 1
    %p109 = por %p107, %p108
    %p111 = scmp.ne.s32.totalorder %s96, %s110
    %p112 = scmp.eq.s32.totalorder %s18, 0
    %p113 = por %p111, %p112
    %s114 = ssub.s32 %s12, %s19
    %p115 = scmp.eq.s32.totalorder %s114, 0
    %s117 = sadd.s32 %s116, 1
    %s118 = scalar_select %p115, %s116, %s117
    %p121 = pneg %p115
    %p122 = scmp.eq.s32.totalorder %s12, 1
    %p123 = por %p121, %p122
    %p124 = scmp.ne.s32.totalorder %s116, %s119
    %p125 = scmp.eq.s32.totalorder %s12, 0
    %p126 = por %p124, %p125
    %p127 = scmp.ne.s32.totalorder %s116, %s119
    %p128 = scmp.eq.s32.totalorder %s17, 1
    %p129 = por %p127, %p128
    %p130 = scmp.ne.s32.totalorder %s119, %s120
    %p131 = scmp.eq.s32.totalorder %s17, 0
    %p132 = por %p130, %p131
    %p133 = scmp.ne.s32.totalorder %s119, %s120
    %p134 = scmp.eq.s32.totalorder %s18, 1
    %p135 = por %p133, %p134
    %p137 = scmp.ne.s32.totalorder %s120, %s136
    %p138 = scmp.eq.s32.totalorder %s18, 0
    %p139 = por %p137, %p138
    %s140 = ssub.s32 %s12, %s19
    %p141 = scmp.eq.s32.totalorder %s140, 0
    %s143 = sadd.s32 %s142, 1
    %s144 = scalar_select %p141, %s142, %s143
    %p147 = pneg %p141
    %p148 = scmp.eq.s32.totalorder %s12, 1
    %p149 = por %p147, %p148
    %p150 = scmp.ne.s32.totalorder %s142, %s145
    %p151 = scmp.eq.s32.totalorder %s12, 0
    %p152 = por %p150, %p151
    %p153 = scmp.ne.s32.totalorder %s142, %s145
    %p154 = scmp.eq.s32.totalorder %s17, 1
    %p155 = por %p153, %p154
    %p156 = scmp.ne.s32.totalorder %s145, %s146
    %p157 = scmp.eq.s32.totalorder %s17, 0
    %p158 = por %p156, %p157
    %p159 = scmp.ne.s32.totalorder %s145, %s146
    %p160 = scmp.eq.s32.totalorder %s18, 1
    %p161 = por %p159, %p160
    %p163 = scmp.ne.s32.totalorder %s146, %s162
    %p164 = scmp.eq.s32.totalorder %s18, 0
    %p165 = por %p163, %p164
    %p166 = scmp.le.s32.totalorder 1, %s12
    %p167 = scmp.lt.s32.totalorder %s12, 3
    %p168 = pnand %p166, %p167
    %p169 = pneg %p168
    // Predicated region
    $region9: #{deep_lstm_forward.7} parent=5 // pred_check
      _
    $region10: #{deep_lstm_forward.7} parent=5 // pred_check_branch
      %171 = sbr.rel (%p168) target = $region12
    $region11: #{deep_lstm_forward.7} parent=5 // pred_region
      %s172 = ssub.s32 %s12, 1
      // Predicated region
      $region13: #{deep_lstm_forward.7} parent=11 // pred_check
        %p173 = pneg %p85
      $region14: #{deep_lstm_forward.7} parent=11 // pred_check_branch
        %175 = sbr.rel (%p173) target = $region16
      $region15: #{deep_lstm_forward.7} parent=11 // pred_region
        _
      $region16: #{deep_lstm_forward.7} parent=11 // pred_fallthru
        _
      // Predicated region
      $region17: #{deep_lstm_forward.7} parent=11 // pred_check
        %p176 = pneg %p106
      $region18: #{deep_lstm_forward.7} parent=11 // pred_check_branch
        %178 = sbr.rel (%p176) target = $region20
      $region19: #{deep_lstm_forward.7} parent=11 // pred_region
        _
      $region20: #{deep_lstm_forward.7} parent=11 // pred_fallthru
        _
    $region12: #{deep_lstm_forward.7} parent=5 // pred_fallthru
      _
    %p179 = scmp.lt.s32.totalorder %s12, 2
    // Predicated region
    $region21: #{deep_lstm_forward.7} parent=5 // pred_check
      %p180 = pneg %p179
    $region22: #{deep_lstm_forward.7} parent=5 // pred_check_branch
      %182 = sbr.rel (%p180) target = $region24
    $region23: #{deep_lstm_forward.7} parent=5 // pred_region
      // Predicated region
      $region25: #{deep_lstm_forward.7} parent=23 // pred_check
        %p183 = pneg %p32
      $region26: #{deep_lstm_forward.7} parent=23 // pred_check_branch
        %185 = sbr.rel (%p183) target = $region28
      $region27: #{deep_lstm_forward.7} parent=23 // pred_region
        %p186 = scmp.lt.s32.totalorder %s12, 1
        %s187 = scalar_select %p186, %s12, 1
        %s188 = smul.addr %s187, 8
        %s189 = scalar_lea.vmem %s0, %s188
      $region28: #{deep_lstm_forward.7} parent=23 // pred_fallthru
        _
      // Predicated region
      $region29: #{deep_lstm_forward.7} parent=23 // pred_check
        %p190 = pneg %p58
      $region30: #{deep_lstm_forward.7} parent=23 // pred_check_branch
        %192 = sbr.rel (%p190) target = $region32
      $region31: #{deep_lstm_forward.7} parent=23 // pred_region
        %p193 = scmp.lt.s32.totalorder %s12, 1
        %s194 = scalar_select %p193, %s12, 1
        %s195 = smul.addr %s194, 8
        %s196 = scalar_lea.vmem %s1, %s195
      $region32: #{deep_lstm_forward.7} parent=23 // pred_fallthru
        _
    $region24: #{deep_lstm_forward.7} parent=5 // pred_fallthru
      _
    %p197 = scmp.le.s32.totalorder 1, %s12
    %p198 = scmp.lt.s32.totalorder %s12, 3
    %p199 = pnand %p197, %p198
    %p200 = pneg %p199
    // Predicated region
    $region33: #{deep_lstm_forward.7} parent=5 // pred_check
      _
    $region34: #{deep_lstm_forward.7} parent=5 // pred_check_branch
      %202 = sbr.rel (%p199) target = $region36
    $region35: #{deep_lstm_forward.7} parent=5 // pred_region
      %s203 = ssub.s32 %s12, 1
      %p204 = scmp.lt.s32.totalorder %s17, 1
      %s205 = scalar_select %p204, %s17, 1
      %s206 = smul.addr %s205, 8
      %s207 = scalar_lea.vmem %s0, %s206
      %p208 = pneg %p38
      %p209 = pneg %p35
      %p210 = scmp.lt.s32.totalorder %s17, 1
      %s211 = scalar_select %p210, %s17, 1
      %s212 = smul.addr %s211, 8
      %s213 = scalar_lea.vmem %s1, %s212
      %p214 = pneg %p64
      %p215 = pneg %p61
      %p216 = pneg %p85
      %p217 = pneg %p82
      %p218 = pneg %p106
      %p219 = pneg %p103
      %p220 = pneg %p132
      %p221 = pneg %p129
      %p222 = scmp.lt.s32.totalorder %s17, 1
      %s223 = scalar_select %p222, %s17, 1
      %s224 = smul.addr %s223, 8
      %s225 = scalar_lea.vmem %s4, %s224
      %p226 = pneg %p158
      %p227 = pneg %p155
      %p228 = scmp.lt.s32.totalorder %s17, 1
      %s229 = scalar_select %p228, %s17, 1
      %s230 = smul.addr %s229, 8
      %s231 = scalar_lea.vmem %s5, %s230
      %p232 = scmp.lt.s32.totalorder %s17, 1
      %s233 = scalar_select %p232, %s17, 1
      %s234 = smul.addr %s233, 8
      %s235 = scalar_lea.vmem %s0, %s234
      %p236 = scmp.lt.s32.totalorder %s17, 1
      %s237 = scalar_select %p236, %s17, 1
      %s238 = smul.addr %s237, 8
      %s239 = scalar_lea.vmem %s1, %s238
      %p240 = scmp.lt.s32.totalorder %s17, 1
      %s241 = scalar_select %p240, %s17, 1
      %s242 = smul.addr %s241, 8
      %s243 = scalar_lea.vmem %s4, %s242
      %p244 = scmp.lt.s32.totalorder %s17, 1
      %s245 = scalar_select %p244, %s17, 1
      %s246 = smul.addr %s245, 8
      %s247 = scalar_lea.vmem %s5, %s246
      %v248 = vld [vmem:[%s235] sm:$0xff]
      %v249 = vld [vmem:[%s2] sm:$0xff]
      %v250 = vld [vmem:[%s2 + $0x8] sm:$0xff]
      %v251 = vld [vmem:[%s2 + $0x10] sm:$0xff]
      %v252 = vld [vmem:[%s2 + $0x18] sm:$0xff]
      %v253 = vld [vmem:[%s2 + $0x20] sm:$0xff]
      %v254 = vld [vmem:[%s2 + $0x28] sm:$0xff]
      %v255 = vld [vmem:[%s2 + $0x30] sm:$0xff]
      %v256 = vld [vmem:[%s2 + $0x38] sm:$0xff]
      %v257 = vld [vmem:[%s239] sm:$0xff]
      %v258 = vld [vmem:[%s2 + $0x40] sm:$0xff]
      %v259 = vld [vmem:[%s2 + $0x48] sm:$0xff]
      %v260 = vld [vmem:[%s2 + $0x50] sm:$0xff]
      %v261 = vld [vmem:[%s2 + $0x58] sm:$0xff]
      %v262 = vld [vmem:[%s2 + $0x60] sm:$0xff]
      %v263 = vld [vmem:[%s2 + $0x68] sm:$0xff]
      %v264 = vld [vmem:[%s2 + $0x70] sm:$0xff]
      %v265 = vld [vmem:[%s2 + $0x78] sm:$0xff]
      %vm266 = vcmask 261120
      %v268 = vsel %vm266, %v257, 0
      %270 = vmatprep.subr.mxu0 0.0
      %271 = vmatpush1.msra.mxu0 0.0
      %272 = vmatprep.subr.mxu0 0.0
      %273 = vmatpush1.msra.mxu0 0.0
      %274 = vmatprep.subr.mxu0 0.0
      %275 = vmatpush1.msra.mxu0 0.0
      %276 = vmatprep.subr.mxu0 0.0
      %277 = vmatpush1.msra.mxu0 0.0
      %278 = vmatprep.subr.mxu0 0.0
      %279 = vmatpush1.msra.mxu0 0.0
      %280 = vmatprep.subr.mxu0 0.0
      %281 = vmatpush1.msra.mxu0 0.0
      %282 = vmatprep.subr.mxu0 0.0
      %283 = vmatpush1.msra.mxu0 0.0
      %284 = vmatprep.subr.mxu0 0.0
      %285 = vmatpush1.msra.mxu0 0.0
      %286 = vmatprep.subr.mxu0 0.0
      %287 = vmatpush1.msra.mxu0 0.0
      %288 = vmatprep.subr.mxu0 0.0
      %289 = vmatpush1.msra.mxu0 0.0
      %290 = vmatprep.subr.mxu0 0.0
      %291 = vmatpush1.msra.mxu0 0.0
      %292 = vmatprep.subr.mxu0 0.0
      %293 = vmatpush1.msra.mxu0 0.0
      %294 = vmatprep.subr.mxu0 %v265
      %295 = vmatpush1.msra.mxu0 %v264
      %296 = vmatprep.subr.mxu0 %v263
      %297 = vmatpush1.msra.mxu0 %v262
      %298 = vmatprep.subr.mxu0 %v261
      %299 = vmatpush1.msra.mxu0 %v260
      %300 = vmatprep.subr.mxu0 %v259
      %301 = vmatpush1.msra.mxu0 %v258
      %302 = vmatprep.subr.mxu0 0.0
      %303 = vmatpush2.msra.mxu0 0.0
      %304 = vmatprep.subr.mxu0 0.0
      %305 = vmatpush2.msra.mxu0 0.0
      %306 = vmatprep.subr.mxu0 0.0
      %307 = vmatpush2.msra.mxu0 0.0
      %308 = vmatprep.subr.mxu0 0.0
      %309 = vmatpush2.msra.mxu0 0.0
      %310 = vmatprep.subr.mxu0 0.0
      %311 = vmatpush2.msra.mxu0 0.0
      %312 = vmatprep.subr.mxu0 0.0
      %313 = vmatpush2.msra.mxu0 0.0
      %314 = vmatprep.subr.mxu0 0.0
      %315 = vmatpush2.msra.mxu0 0.0
      %316 = vmatprep.subr.mxu0 0.0
      %317 = vmatpush2.msra.mxu0 0.0
      %318 = vmatprep.subr.mxu0 0.0
      %319 = vmatpush2.msra.mxu0 0.0
      %320 = vmatprep.subr.mxu0 0.0
      %321 = vmatpush2.msra.mxu0 0.0
      %322 = vmatprep.subr.mxu0 0.0
      %323 = vmatpush2.msra.mxu0 0.0
      %324 = vmatprep.subr.mxu0 0.0
      %325 = vmatpush2.msra.mxu0 0.0
      %326 = vmatprep.subr.mxu0 0.0
      %327 = vmatpush2.msra.mxu0 0.0
      %328 = vmatprep.subr.mxu0 0.0
      %329 = vmatpush2.msra.mxu0 0.0
      %330 = vmatprep.subr.mxu0 0.0
      %331 = vmatpush2.msra.mxu0 0.0
      %332 = vmatprep.subr.mxu0 0.0
      %333 = vmatpush2.msra.mxu0 0.0
      %334 = vmatprep.mubr.f32.mxu0 0.0
      %335 = vmatmul.mubr.f32.gmra.mxu0 %v268
      %v336 = vpop.f32.mrf.mxu0
      %v337 = vadd.f32 0.0, %v336
      %v338 = vpop.f32.mrf.mxu0
      %v339 = vadd.f32 0.0, %v338
      %340 = vdwg.mxu0
      %v342 = vsel %vm266, %v248, 0
      %344 = vmatprep.subr.mxu0 0.0
      %345 = vmatpush1.msra.mxu0 0.0
      %346 = vmatprep.subr.mxu0 0.0
      %347 = vmatpush1.msra.mxu0 0.0
      %348 = vmatprep.subr.mxu0 0.0
      %349 = vmatpush1.msra.mxu0 0.0
      %350 = vmatprep.subr.mxu0 0.0
      %351 = vmatpush1.msra.mxu0 0.0
      %352 = vmatprep.subr.mxu0 0.0
      %353 = vmatpush1.msra.mxu0 0.0
      %354 = vmatprep.subr.mxu0 0.0
      %355 = vmatpush1.msra.mxu0 0.0
      %356 = vmatprep.subr.mxu0 0.0
      %357 = vmatpush1.msra.mxu0 0.0
      %358 = vmatprep.subr.mxu0 0.0
      %359 = vmatpush1.msra.mxu0 0.0
      %360 = vmatprep.subr.mxu0 0.0
      %361 = vmatpush1.msra.mxu0 0.0
      %362 = vmatprep.subr.mxu0 0.0
      %363 = vmatpush1.msra.mxu0 0.0
      %364 = vmatprep.subr.mxu0 0.0
      %365 = vmatpush1.msra.mxu0 0.0
      %366 = vmatprep.subr.mxu0 0.0
      %367 = vmatpush1.msra.mxu0 0.0
      %368 = vmatprep.subr.mxu0 %v256
      %369 = vmatpush1.msra.mxu0 %v255
      %370 = vmatprep.subr.mxu0 %v254
      %371 = vmatpush1.msra.mxu0 %v253
      %372 = vmatprep.subr.mxu0 %v252
      %373 = vmatpush1.msra.mxu0 %v251
      %374 = vmatprep.subr.mxu0 %v250
      %375 = vmatpush1.msra.mxu0 %v249
      %376 = vmatprep.subr.mxu0 0.0
      %377 = vmatpush2.msra.mxu0 0.0
      %378 = vmatprep.subr.mxu0 0.0
      %379 = vmatpush2.msra.mxu0 0.0
      %380 = vmatprep.subr.mxu0 0.0
      %381 = vmatpush2.msra.mxu0 0.0
      %382 = vmatprep.subr.mxu0 0.0
      %383 = vmatpush2.msra.mxu0 0.0
      %384 = vmatprep.subr.mxu0 0.0
      %385 = vmatpush2.msra.mxu0 0.0
      %386 = vmatprep.subr.mxu0 0.0
      %387 = vmatpush2.msra.mxu0 0.0
      %388 = vmatprep.subr.mxu0 0.0
      %389 = vmatpush2.msra.mxu0 0.0
      %390 = vmatprep.subr.mxu0 0.0
      %391 = vmatpush2.msra.mxu0 0.0
      %392 = vmatprep.subr.mxu0 0.0
      %393 = vmatpush2.msra.mxu0 0.0
      %394 = vmatprep.subr.mxu0 0.0
      %395 = vmatpush2.msra.mxu0 0.0
      %396 = vmatprep.subr.mxu0 0.0
      %397 = vmatpush2.msra.mxu0 0.0
      %398 = vmatprep.subr.mxu0 0.0
      %399 = vmatpush2.msra.mxu0 0.0
      %400 = vmatprep.subr.mxu0 0.0
      %401 = vmatpush2.msra.mxu0 0.0
      %402 = vmatprep.subr.mxu0 0.0
      %403 = vmatpush2.msra.mxu0 0.0
      %404 = vmatprep.subr.mxu0 0.0
      %405 = vmatpush2.msra.mxu0 0.0
      %406 = vmatprep.subr.mxu0 0.0
      %407 = vmatpush2.msra.mxu0 0.0
      %408 = vmatprep.mubr.f32.mxu0 0.0
      %409 = vmatmul.mubr.f32.gmra.mxu0 %v342
      %v410 = vpop.f32.mrf.mxu0
      %v411 = vadd.f32 %v337, %v410
      %v412 = vpop.f32.mrf.mxu0
      %v413 = vadd.f32 %v339, %v412
      %414 = vdwg.mxu0
      %v415 = vld [vmem:[%s3] sm:$0x3]
      %v417 = vlaneseq
      %v418 = vshrl.u32 %v417, 7
      %v419 = vsub.s32 0, %v418
      %v420 = vrot.slane %v415, %v419
      %v421 = vlaneseq
      %v422 = vshrl.u32 %v421, 7
      %v423 = vsub.s32 1, %v422
      %v424 = vrot.slane %v415, %v423
      %v427 = vadd.f32 %v411, %v420
      %v428 = vadd.f32 %v413, %v424
      %429 = vst [vmem:[%s243] sm:$0xff] %v427
      %430 = vst [vmem:[%s247] sm:$0xff] %v428
      %p431 = scmp.lt.s32.totalorder %s17, 1
      %s432 = scalar_select %p431, %s17, 1
      %s433 = smul.addr %s432, 8
      %s434 = scalar_lea.vmem %s4, %s433
      %p435 = scmp.lt.s32.totalorder %s17, 1
      %s436 = scalar_select %p435, %s17, 1
      %s437 = smul.addr %s436, 8
      %s438 = scalar_lea.vmem %s5, %s437
      // Predicated region
      $region37: #{deep_lstm_forward.7} parent=35 // pred_check
        %p439 = pneg %p129
      $region38: #{deep_lstm_forward.7} parent=35 // pred_check_branch
        %441 = sbr.rel (%p439) target = $region40
      $region39: #{deep_lstm_forward.7} parent=35 // pred_region
        _
      $region40: #{deep_lstm_forward.7} parent=35 // pred_fallthru
        _
      // Predicated region
      $region41: #{deep_lstm_forward.7} parent=35 // pred_check
        %p442 = pneg %p155
      $region42: #{deep_lstm_forward.7} parent=35 // pred_check_branch
        %444 = sbr.rel (%p442) target = $region44
      $region43: #{deep_lstm_forward.7} parent=35 // pred_region
        _
      $region44: #{deep_lstm_forward.7} parent=35 // pred_fallthru
        _
    $region36: #{deep_lstm_forward.7} parent=5 // pred_fallthru
      _
    %p445 = scmp.le.s32.totalorder 2, %s12
    // Predicated region
    $region45: #{deep_lstm_forward.7} parent=5 // pred_check
      %p446 = pneg %p445
    $region46: #{deep_lstm_forward.7} parent=5 // pred_check_branch
      %448 = sbr.rel (%p446) target = $region48
    $region47: #{deep_lstm_forward.7} parent=5 // pred_region
      %s449 = ssub.s32 %s12, 2
      // Predicated region
      $region49: #{deep_lstm_forward.7} parent=47 // pred_check
        %p450 = pneg %p135
      $region50: #{deep_lstm_forward.7} parent=47 // pred_check_branch
        %452 = sbr.rel (%p450) target = $region52
      $region51: #{deep_lstm_forward.7} parent=47 // pred_region
        %p453 = scmp.lt.s32.totalorder %s18, 1
        %s454 = scalar_select %p453, %s18, 1
        %s455 = smul.addr %s454, 8
        %s456 = scalar_lea.vmem %s4, %s455
      $region52: #{deep_lstm_forward.7} parent=47 // pred_fallthru
        _
      // Predicated region
      $region53: #{deep_lstm_forward.7} parent=47 // pred_check
        %p457 = pneg %p161
      $region54: #{deep_lstm_forward.7} parent=47 // pred_check_branch
        %459 = sbr.rel (%p457) target = $region56
      $region55: #{deep_lstm_forward.7} parent=47 // pred_region
        %p460 = scmp.lt.s32.totalorder %s18, 1
        %s461 = scalar_select %p460, %s18, 1
        %s462 = smul.addr %s461, 8
        %s463 = scalar_lea.vmem %s5, %s462
      $region56: #{deep_lstm_forward.7} parent=47 // pred_fallthru
        _
    $region48: #{deep_lstm_forward.7} parent=5 // pred_fallthru
      _
  $region6: #{deep_lstm_forward.7} parent=0 // loop_footer
    %s16 = sadd.s32 1, %s12
  $region7: #{deep_lstm_forward.7} parent=0 // loop_footer_branch
    %11 = sbr.rel target = $region3
  $region8: #{deep_lstm_forward.7} parent=0 // loop_exit
    _

// kernel: deep_lstm_forward.6
$region0: #{deep_lstm_forward.6}
  #allocation0 [shape = 'u32[]', space=smem, size = 0x4, offset = 0x4, fixed_abs, tag = 'smem constant byte address 0x4 - core index']
  #allocation1 [shape = 'u32[144,128]{1,0:T(1,128)}', space=vmem, size = 0x12000, scoped, tag = 'internal scratch']
  #allocation2 [shape = 'f32[2,32]{1,0:T(2,128)}', space=vmem, size = 0x400, scoped, tag = 'scratch operand']
  #allocation3 [shape = 'f32[2,32]{1,0:T(2,128)}', space=vmem, size = 0x400, scoped, tag = 'scratch operand']
  #allocation4 [shape = 'f32[2,32]{1,0:T(2,128)}', space=vmem, size = 0x400, scoped, tag = 'scratch operand']
  #allocation5 [shape = 'f32[2,32]{1,0:T(2,128)}', space=vmem, size = 0x400, scoped, tag = 'scratch operand']
  %s0 = inlined_call_operand.vmem [shape: f32[8,2,128], index: 0, kind: input, shape index: {}]
  %s1 = inlined_call_operand.vmem [shape: f32[8,2,128], index: 1, kind: input, shape index: {}]
  %s2 = inlined_call_operand.hbm [shape: f32[32,128], index: 2, kind: input, shape index: {}]
  %s3 = inlined_call_operand.hbm [shape: f32[32,128], index: 3, kind: input, shape index: {}]
  %s4 = inlined_call_operand.vmem [shape: f32[8,2,32], index: 4, kind: output, shape index: {0}]
  %s5 = inlined_call_operand.vmem [shape: f32[8,2,32], index: 5, kind: output, shape index: {1}]
  %6 = xla_tuple %s4, %s5
  %s7 = sld [smem:[#allocation0]]
  $region69: #{deep_lstm_forward.6} parent=0
    _
  %s9 = ssub.s32 1, %s7
  %s10 = scalar_select 0, %s9, %s7
  $region1: #{deep_lstm_forward.6} parent=0
    #allocation6 [shape = 'u8[16384]{0}', space=vmem, size = 0x4000, scoped, tag = 'input window, operand 2, single buffered']
    #allocation7 [shape = 's32[2]{0}', space=sflag, size = 0x8, scoped, tag = 'scoped memory for deep_lstm_forward.6']
    #allocation8 [shape = 'u8[16384]{0}', space=vmem, size = 0x4000, scoped, tag = 'input window, operand 3, single buffered']
    #allocation9 [shape = 's32[1]{0}', space=sflag, size = 0x4, scoped, tag = 'scoped memory for deep_lstm_forward.6']
    %11 = vsyncpa [#allocation7], 0
    %12 = vsyncpa [#allocation9], 0
    loop: start=0, step=1, limit=4
    $region2: #{deep_lstm_forward.6} parent=1 // loop_pre_header
      _
    $region3: #{deep_lstm_forward.6} parent=1 // loop_header
      %s14 = sphi 0, %s18
      %p15 = scmp.ge.s32.totalorder %s14, 4
      %s24 = sphi 0, %s26
      %s27 = sphi 0, %s24
      %s28 = sphi 0, %s27
      %s44 = sphi 0, %s28
      %s52 = sphi 0, %s54
      %s55 = sphi 0, %s52
      %s56 = sphi 0, %s55
      %s72 = sphi 0, %s56
      %s76 = sphi 0, %s76
      %s78 = sphi 0, %s76
      %s79 = sphi 0, %s78
      %s93 = sphi 0, %s79
      %s97 = sphi 0, %s97
      %s99 = sphi 0, %s97
      %s100 = sphi 0, %s99
      %s114 = sphi 0, %s100
      %s120 = sphi 0, %s122
      %s123 = sphi 0, %s120
      %s124 = sphi 0, %s123
      %s140 = sphi 0, %s124
      %s148 = sphi 0, %s150
      %s151 = sphi 0, %s148
      %s152 = sphi 0, %s151
      %s168 = sphi 0, %s152
    $region4: #{deep_lstm_forward.6} parent=1 // loop_header_branch
      %17 = sbr.rel (%p15) target = $region8
    $region5: #{deep_lstm_forward.6} parent=1 // loop_body
      %s19 = ssub.s32 %s14, 1
      %s20 = ssub.s32 %s14, 2
      %s21 = sadd.s32 %s14, 1
      %s22 = ssub.s32 %s14, %s21
      %p23 = scmp.eq.s32.totalorder %s22, 0
      %s25 = sadd.s32 %s24, 1
      %s26 = scalar_select %p23, %s24, %s25
      %p29 = pneg %p23
      %p30 = scmp.eq.s32.totalorder %s14, 1
      %p31 = por %p29, %p30
      %p32 = scmp.ne.s32.totalorder %s24, %s27
      %p33 = scmp.eq.s32.totalorder %s14, 0
      %p34 = por %p32, %p33
      %p35 = scmp.ne.s32.totalorder %s24, %s27
      %p36 = scmp.eq.s32.totalorder %s19, 1
      %p37 = por %p35, %p36
      %p38 = scmp.ne.s32.totalorder %s27, %s28
      %p39 = scmp.eq.s32.totalorder %s19, 0
      %p40 = por %p38, %p39
      %p41 = scmp.ne.s32.totalorder %s27, %s28
      %p42 = scmp.eq.s32.totalorder %s20, 1
      %p43 = por %p41, %p42
      %p45 = scmp.ne.s32.totalorder %s28, %s44
      %p46 = scmp.eq.s32.totalorder %s20, 0
      %p47 = por %p45, %p46
      %s48 = ssub.s32 1, %s14
      %s49 = ssub.s32 1, %s21
      %s50 = ssub.s32 %s48, %s49
      %p51 = scmp.eq.s32.totalorder %s50, 0
      %s53 = sadd.s32 %s52, 1
      %s54 = scalar_select %p51, %s52, %s53
      %p57 = pneg %p51
      %p58 = scmp.eq.s32.totalorder %s14, 1
      %p59 = por %p57, %p58
      %p60 = scmp.ne.s32.totalorder %s52, %s55
      %p61 = scmp.eq.s32.totalorder %s14, 0
      %p62 = por %p60, %p61
      %p63 = scmp.ne.s32.totalorder %s52, %s55
      %p64 = scmp.eq.s32.totalorder %s19, 1
      %p65 = por %p63, %p64
      %p66 = scmp.ne.s32.totalorder %s55, %s56
      %p67 = scmp.eq.s32.totalorder %s19, 0
      %p68 = por %p66, %p67
      %p69 = scmp.ne.s32.totalorder %s55, %s56
      %p70 = scmp.eq.s32.totalorder %s20, 1
      %p71 = por %p69, %p70
      %p73 = scmp.ne.s32.totalorder %s56, %s72
      %p74 = scmp.eq.s32.totalorder %s20, 0
      %p75 = por %p73, %p74
      %s77 = sadd.s32 %s76, 1
      %p80 = scmp.eq.s32.totalorder %s14, 1
      %p81 = scmp.ne.s32.totalorder %s76, %s78
      %p82 = scmp.eq.s32.totalorder %s14, 0
      %p83 = por %p81, %p82
      %p84 = scmp.ne.s32.totalorder %s76, %s78
      %p85 = scmp.eq.s32.totalorder %s19, 1
      %p86 = por %p84, %p85
      %p87 = scmp.ne.s32.totalorder %s78, %s79
      %p88 = scmp.eq.s32.totalorder %s19, 0
      %p89 = por %p87, %p88
      %p90 = scmp.ne.s32.totalorder %s78, %s79
      %p91 = scmp.eq.s32.totalorder %s20, 1
      %p92 = por %p90, %p91
      %p94 = scmp.ne.s32.totalorder %s79, %s93
      %p95 = scmp.eq.s32.totalorder %s20, 0
      %p96 = por %p94, %p95
      %s98 = sadd.s32 %s97, 1
      %p101 = scmp.eq.s32.totalorder %s14, 1
      %p102 = scmp.ne.s32.totalorder %s97, %s99
      %p103 = scmp.eq.s32.totalorder %s14, 0
      %p104 = por %p102, %p103
      %p105 = scmp.ne.s32.totalorder %s97, %s99
      %p106 = scmp.eq.s32.totalorder %s19, 1
      %p107 = por %p105, %p106
      %p108 = scmp.ne.s32.totalorder %s99, %s100
      %p109 = scmp.eq.s32.totalorder %s19, 0
      %p110 = por %p108, %p109
      %p111 = scmp.ne.s32.totalorder %s99, %s100
      %p112 = scmp.eq.s32.totalorder %s20, 1
      %p113 = por %p111, %p112
      %p115 = scmp.ne.s32.totalorder %s100, %s114
      %p116 = scmp.eq.s32.totalorder %s20, 0
      %p117 = por %p115, %p116
      %s118 = ssub.s32 %s14, %s21
      %p119 = scmp.eq.s32.totalorder %s118, 0
      %s121 = sadd.s32 %s120, 1
      %s122 = scalar_select %p119, %s120, %s121
      %p125 = pneg %p119
      %p126 = scmp.eq.s32.totalorder %s14, 1
      %p127 = por %p125, %p126
      %p128 = scmp.ne.s32.totalorder %s120, %s123
      %p129 = scmp.eq.s32.totalorder %s14, 0
      %p130 = por %p128, %p129
      %p131 = scmp.ne.s32.totalorder %s120, %s123
      %p132 = scmp.eq.s32.totalorder %s19, 1
      %p133 = por %p131, %p132
      %p134 = scmp.ne.s32.totalorder %s123, %s124
      %p135 = scmp.eq.s32.totalorder %s19, 0
      %p136 = por %p134, %p135
      %p137 = scmp.ne.s32.totalorder %s123, %s124
      %p138 = scmp.eq.s32.totalorder %s20, 1
      %p139 = por %p137, %p138
      %p141 = scmp.ne.s32.totalorder %s124, %s140
      %p142 = scmp.eq.s32.totalorder %s20, 0
      %p143 = por %p141, %p142
      %s144 = ssub.s32 1, %s14
      %s145 = ssub.s32 1, %s21
      %s146 = ssub.s32 %s144, %s145
      %p147 = scmp.eq.s32.totalorder %s146, 0
      %s149 = sadd.s32 %s148, 1
      %s150 = scalar_select %p147, %s148, %s149
      %p153 = pneg %p147
      %p154 = scmp.eq.s32.totalorder %s14, 1
      %p155 = por %p153, %p154
      %p156 = scmp.ne.s32.totalorder %s148, %s151
      %p157 = scmp.eq.s32.totalorder %s14, 0
      %p158 = por %p156, %p157
      %p159 = scmp.ne.s32.totalorder %s148, %s151
      %p160 = scmp.eq.s32.totalorder %s19, 1
      %p161 = por %p159, %p160
      %p162 = scmp.ne.s32.totalorder %s151, %s152
      %p163 = scmp.eq.s32.totalorder %s19, 0
      %p164 = por %p162, %p163
      %p165 = scmp.ne.s32.totalorder %s151, %s152
      %p166 = scmp.eq.s32.totalorder %s20, 1
      %p167 = por %p165, %p166
      %p169 = scmp.ne.s32.totalorder %s152, %s168
      %p170 = scmp.eq.s32.totalorder %s20, 0
      %p171 = por %p169, %p170
      %p172 = scmp.le.s32.totalorder 1, %s14
      %p173 = scmp.lt.s32.totalorder %s14, 3
      %p174 = pnand %p172, %p173
      %p175 = pneg %p174
      // Predicated region
      $region9: #{deep_lstm_forward.6} parent=5 // pred_check
        _
      $region10: #{deep_lstm_forward.6} parent=5 // pred_check_branch
        %177 = sbr.rel (%p174) target = $region12
      $region11: #{deep_lstm_forward.6} parent=5 // pred_region
        %s178 = ssub.s32 %s14, 1
        // Predicated region
        $region13: #{deep_lstm_forward.6} parent=11 // pred_check
          %p179 = pneg %p89
        $region14: #{deep_lstm_forward.6} parent=11 // pred_check_branch
          %181 = sbr.rel (%p179) target = $region16
        $region15: #{deep_lstm_forward.6} parent=11 // pred_region
          %s183 = ssub.s32 512, 512
          %184 = vsyncadd [#allocation7], %s183
          %s185 = sshll.u32 [#allocation6], 4
          %s186 = int_to_ptr.vmem [resolvable:$true] %s185
          %191 = dma.hbm_to_vmem [thread:$0]  %s2, 512, %s186, [#allocation7], 128, 128, 8
        $region16: #{deep_lstm_forward.6} parent=11 // pred_fallthru
          _
        // Predicated region
        $region17: #{deep_lstm_forward.6} parent=11 // pred_check
          %p192 = pneg %p110
        $region18: #{deep_lstm_forward.6} parent=11 // pred_check_branch
          %194 = sbr.rel (%p192) target = $region20
        $region19: #{deep_lstm_forward.6} parent=11 // pred_region
          %s196 = ssub.s32 512, 512
          %197 = vsyncadd [#allocation9], %s196
          %s198 = sshll.u32 [#allocation8], 4
          %s199 = int_to_ptr.vmem [resolvable:$true] %s198
          %204 = dma.hbm_to_vmem [thread:$0]  %s3, 512, %s199, [#allocation9], 128, 128, 8
        $region20: #{deep_lstm_forward.6} parent=11 // pred_fallthru
          _
      $region12: #{deep_lstm_forward.6} parent=5 // pred_fallthru
        _
      %p205 = scmp.lt.s32.totalorder %s14, 2
      // Predicated region
      $region21: #{deep_lstm_forward.6} parent=5 // pred_check
        %p206 = pneg %p205
      $region22: #{deep_lstm_forward.6} parent=5 // pred_check_branch
        %208 = sbr.rel (%p206) target = $region24
      $region23: #{deep_lstm_forward.6} parent=5 // pred_region
        // Predicated region
        $region25: #{deep_lstm_forward.6} parent=23 // pred_check
          %p209 = pneg %p34
        $region26: #{deep_lstm_forward.6} parent=23 // pred_check_branch
          %211 = sbr.rel (%p209) target = $region28
        $region27: #{deep_lstm_forward.6} parent=23 // pred_region
          %s212 = smul.u32 4, %s14
          %p213 = scmp.lt.s32.totalorder %s212, 7
          %s214 = scalar_select %p213, %s212, 7
          %s215 = smul.addr %s214, 2
          %s216 = scalar_lea.vmem %s0, %s215
          %s217 = smul.u32 4, %s14
        $region28: #{deep_lstm_forward.6} parent=23 // pred_fallthru
          _
        // Predicated region
        $region29: #{deep_lstm_forward.6} parent=23 // pred_check
          %p218 = pneg %p62
        $region30: #{deep_lstm_forward.6} parent=23 // pred_check_branch
          %220 = sbr.rel (%p218) target = $region32
        $region31: #{deep_lstm_forward.6} parent=23 // pred_region
          %s221 = ssub.s32 1, %s14
          %s222 = smul.u32 4, %s221
          %p223 = scmp.lt.s32.totalorder %s222, 7
          %s224 = scalar_select %p223, %s222, 7
          %s225 = smul.addr %s224, 2
          %s226 = scalar_lea.vmem %s1, %s225
          %s227 = ssub.s32 1, %s14
          %s228 = smul.u32 4, %s227
        $region32: #{deep_lstm_forward.6} parent=23 // pred_fallthru
          _
      $region24: #{deep_lstm_forward.6} parent=5 // pred_fallthru
        _
      %p229 = scmp.le.s32.totalorder 1, %s14
      %p230 = scmp.lt.s32.totalorder %s14, 3
      %p231 = pnand %p229, %p230
      %p232 = pneg %p231
      // Predicated region
      $region33: #{deep_lstm_forward.6} parent=5 // pred_check
        _
      $region34: #{deep_lstm_forward.6} parent=5 // pred_check_branch
        %234 = sbr.rel (%p231) target = $region36
      $region35: #{deep_lstm_forward.6} parent=5 // pred_region
        %s235 = ssub.s32 %s14, 1
        // Predicated region
        $region37: #{deep_lstm_forward.6} parent=35 // pred_check
          %p236 = pneg %p89
        $region38: #{deep_lstm_forward.6} parent=35 // pred_check_branch
          %238 = sbr.rel (%p236) target = $region40
        $region39: #{deep_lstm_forward.6} parent=35 // pred_region
          %239 = dma.done [#allocation7], 512
        $region40: #{deep_lstm_forward.6} parent=35 // pred_fallthru
          _
        // Predicated region
        $region41: #{deep_lstm_forward.6} parent=35 // pred_check
          %p240 = pneg %p110
        $region42: #{deep_lstm_forward.6} parent=35 // pred_check_branch
          %242 = sbr.rel (%p240) target = $region44
        $region43: #{deep_lstm_forward.6} parent=35 // pred_region
          %243 = dma.done [#allocation9], 512
        $region44: #{deep_lstm_forward.6} parent=35 // pred_fallthru
          _
        %s244 = smul.u32 4, %s19
        %p245 = scmp.lt.s32.totalorder %s244, 7
        %s246 = scalar_select %p245, %s244, 7
        %s247 = smul.addr %s246, 2
        %s248 = scalar_lea.vmem %s0, %s247
        %p249 = pneg %p40
        %p250 = pneg %p37
        %s251 = ssub.s32 1, %s19
        %s252 = smul.u32 4, %s251
        %p253 = scmp.lt.s32.totalorder %s252, 7
        %s254 = scalar_select %p253, %s252, 7
        %s255 = smul.addr %s254, 2
        %s256 = scalar_lea.vmem %s1, %s255
        %p257 = pneg %p68
        %p258 = pneg %p65
        %p259 = pneg %p89
        %p260 = pneg %p86
        %p261 = pneg %p110
        %p262 = pneg %p107
        %p263 = pneg %p136
        %p264 = pneg %p133
        %s265 = smul.u32 4, %s19
        %p266 = scmp.lt.s32.totalorder %s265, 7
        %s267 = scalar_select %p266, %s265, 7
        %s268 = smul.addr %s267, 2
        %s269 = scalar_lea.vmem %s4, %s268
        %p270 = pneg %p164
        %p271 = pneg %p161
        %s272 = ssub.s32 1, %s19
        %s273 = smul.u32 4, %s272
        %p274 = scmp.lt.s32.totalorder %s273, 7
        %s275 = scalar_select %p274, %s273, 7
        %s276 = smul.addr %s275, 2
        %s277 = scalar_lea.vmem %s5, %s276
        %s278 = smul.u32 4, %s19
        %p279 = scmp.lt.s32.totalorder %s278, 7
        %s280 = scalar_select %p279, %s278, 7
        %s281 = smul.addr %s280, 2
        %s282 = scalar_lea.vmem %s0, %s281
        %s283 = smul.u32 4, %s19
        %s284 = ssub.s32 1, %s19
        %s285 = smul.u32 4, %s284
        %p286 = scmp.lt.s32.totalorder %s285, 7
        %s287 = scalar_select %p286, %s285, 7
        %s288 = smul.addr %s287, 2
        %s289 = scalar_lea.vmem %s1, %s288
        %s290 = ssub.s32 1, %s19
        %s291 = smul.u32 4, %s290
        %s292 = smul.u32 4, %s19
        %p293 = scmp.lt.s32.totalorder %s292, 7
        %s294 = scalar_select %p293, %s292, 7
        %s295 = smul.addr %s294, 2
        %s296 = scalar_lea.vmem %s4, %s295
        %s297 = smul.u32 4, %s19
        %s298 = ssub.s32 1, %s19
        %s299 = smul.u32 4, %s298
        %p300 = scmp.lt.s32.totalorder %s299, 7
        %s301 = scalar_select %p300, %s299, 7
        %s302 = smul.addr %s301, 2
        %s303 = scalar_lea.vmem %s5, %s302
        %s304 = ssub.s32 1, %s19
        %s305 = smul.u32 4, %s304
        %p306 = scmp.eq.s32.totalorder %s19, 0
        // Predicated region
        $region45: #{deep_lstm_forward.6} parent=35 // pred_check
          %p307 = pneg %p306
        $region46: #{deep_lstm_forward.6} parent=35 // pred_check_branch
          %309 = sbr.rel (%p307) target = $region48
        $region47: #{deep_lstm_forward.6} parent=35 // pred_region
          %vm310 = vcmask 254976
          %311 = vst.msk [vmem:[#allocation2] sm:$0x3] %vm310, 0.0
          %312 = vst.msk [vmem:[#allocation3] sm:$0x3] %vm310, 0.0
          %313 = vst.msk [vmem:[#allocation4] sm:$0x3] %vm310, 0.0
          %314 = vst.msk [vmem:[#allocation5] sm:$0x3] %vm310, 0.0
        $region48: #{deep_lstm_forward.6} parent=35 // pred_fallthru
          _
        %v315 = vld [vmem:[%s282] sm:$0x3]
        %v316 = vld [vmem:[#allocation2] sm:$0x3]
        %v317 = vld [vmem:[#allocation3] sm:$0x3]
        %v318 = vld [vmem:[#allocation6] sm:$0xff]
        %v319 = vld [vmem:[#allocation6 + $0x8] sm:$0xff]
        %v320 = vld [vmem:[#allocation6 + $0x10] sm:$0xff]
        %v321 = vld [vmem:[#allocation6 + $0x18] sm:$0xff]
        %vm322 = vcmask 261120
        %v324 = vsel %vm322, %v316, 0
        %326 = vmatprep.subr.mxu0 0.0
        %327 = vmatpush1.msra.mxu0 0.0
        %328 = vmatprep.subr.mxu0 0.0
        %329 = vmatpush1.msra.mxu0 0.0
        %330 = vmatprep.subr.mxu0 0.0
        %331 = vmatpush1.msra.mxu0 0.0
        %332 = vmatprep.subr.mxu0 0.0
        %333 = vmatpush1.msra.mxu0 0.0
        %334 = vmatprep.subr.mxu0 0.0
        %335 = vmatpush1.msra.mxu0 0.0
        %336 = vmatprep.subr.mxu0 0.0
        %337 = vmatpush1.msra.mxu0 0.0
        %338 = vmatprep.subr.mxu0 0.0
        %339 = vmatpush1.msra.mxu0 0.0
        %340 = vmatprep.subr.mxu0 0.0
        %341 = vmatpush1.msra.mxu0 0.0
        %342 = vmatprep.subr.mxu0 0.0
        %343 = vmatpush1.msra.mxu0 0.0
        %344 = vmatprep.subr.mxu0 0.0
        %345 = vmatpush1.msra.mxu0 0.0
        %346 = vmatprep.subr.mxu0 0.0
        %347 = vmatpush1.msra.mxu0 0.0
        %348 = vmatprep.subr.mxu0 0.0
        %349 = vmatpush1.msra.mxu0 0.0
        %350 = vmatprep.subr.mxu0 0.0
        %351 = vmatpush1.msra.mxu0 %v321
        %352 = vmatprep.subr.mxu0 0.0
        %353 = vmatpush1.msra.mxu0 %v320
        %354 = vmatprep.subr.mxu0 0.0
        %355 = vmatpush1.msra.mxu0 %v319
        %356 = vmatprep.subr.mxu0 0.0
        %357 = vmatpush1.msra.mxu0 %v318
        %358 = vmatprep.subr.mxu0 0.0
        %359 = vmatpush2.msra.mxu0 0.0
        %360 = vmatprep.subr.mxu0 0.0
        %361 = vmatpush2.msra.mxu0 0.0
        %362 = vmatprep.subr.mxu0 0.0
        %363 = vmatpush2.msra.mxu0 0.0
        %364 = vmatprep.subr.mxu0 0.0
        %365 = vmatpush2.msra.mxu0 0.0
        %366 = vmatprep.subr.mxu0 0.0
        %367 = vmatpush2.msra.mxu0 0.0
        %368 = vmatprep.subr.mxu0 0.0
        %369 = vmatpush2.msra.mxu0 0.0
        %370 = vmatprep.subr.mxu0 0.0
        %371 = vmatpush2.msra.mxu0 0.0
        %372 = vmatprep.subr.mxu0 0.0
        %373 = vmatpush2.msra.mxu0 0.0
        %374 = vmatprep.subr.mxu0 0.0
        %375 = vmatpush2.msra.mxu0 0.0
        %376 = vmatprep.subr.mxu0 0.0
        %377 = vmatpush2.msra.mxu0 0.0
        %378 = vmatprep.subr.mxu0 0.0
        %379 = vmatpush2.msra.mxu0 0.0
        %380 = vmatprep.subr.mxu0 0.0
        %381 = vmatpush2.msra.mxu0 0.0
        %382 = vmatprep.subr.mxu0 0.0
        %383 = vmatpush2.msra.mxu0 0.0
        %384 = vmatprep.subr.mxu0 0.0
        %385 = vmatpush2.msra.mxu0 0.0
        %386 = vmatprep.subr.mxu0 0.0
        %387 = vmatpush2.msra.mxu0 0.0
        %388 = vmatprep.subr.mxu0 0.0
        %389 = vmatpush2.msra.mxu0 0.0
        %390 = vmatprep.mubr.f32.mxu0 0.0
        %391 = vmatmul.mubr.f32.gmra.mxu0 %v324
        %v392 = vpop.f32.mrf.mxu0
        %v393 = vadd.f32 0.0, %v392
        %v394 = vpop.f32.mrf.mxu0
        %395 = vdwg.mxu0
        %v396 = vadd.f32 %v315, %v393
        %v397 = vxor.u32 %v396, 2147483648
        %v398 = vmul.f32 %v397, 1.442695
        %v399 = vpow.pop %v398
        %v400 = vadd.f32 %v399, 1.0
        %v401 = vrcp.pop %v400
        %v402 = vmul.f32 1.0, %v401
        %v403 = vtanh.pop %v396
        %405 = vrot.lane.b32.xlu0 %v317, 32
        %v406 = vpop.permute.xlu0 %405
        %v408 = vmul.f32 %v402, %v406
        %410 = vrot.lane.b32.xlu0 %v403, 64
        %v411 = vpop.permute.xlu0 %410
        %v413 = vmul.f32 %v402, %v411
        %415 = vrot.lane.b32.xlu0 %v413, 32
        %v416 = vpop.permute.xlu0 %415
        %v418 = vadd.f32 %v408, %v416
        %v419 = vtanh.pop %v418
        %421 = vrot.lane.b32.xlu0 %v419, 64
        %v422 = vpop.permute.xlu0 %421
        %v424 = vmul.f32 %v402, %v422
        %426 = vrot.lane.b32.xlu0 %v424, 32
        %v427 = vpop.permute.xlu0 %426
        %vm429 = vcmask 254976
        %430 = vst.msk [vmem:[#allocation2] sm:$0x3] %vm429, %v427
        %432 = vrot.lane.b32.xlu0 %v418, 96
        %v433 = vpop.permute.xlu0 %432
        %435 = vst.msk [vmem:[#allocation3] sm:$0x3] %vm429, %v433
        %436 = vst.msk [vmem:[%s296] sm:$0x3] %vm429, %v427
        %s437 = scalar_lea.vmem %s289, 6
        %v438 = vld [vmem:[%s437] sm:$0x3]
        %v439 = vld [vmem:[#allocation4] sm:$0x3]
        %v440 = vld [vmem:[#allocation5] sm:$0x3]
        %v441 = vld [vmem:[#allocation8] sm:$0xff]
        %v442 = vld [vmem:[#allocation8 + $0x8] sm:$0xff]
        %v443 = vld [vmem:[#allocation8 + $0x10] sm:$0xff]
        %v444 = vld [vmem:[#allocation8 + $0x18] sm:$0xff]
        %v446 = vsel %vm322, %v439, 0
        %448 = vmatprep.subr.mxu0 0.0
        %449 = vmatpush1.msra.mxu0 0.0
        %450 = vmatprep.subr.mxu0 0.0
        %451 = vmatpush1.msra.mxu0 0.0
        %452 = vmatprep.subr.mxu0 0.0
        %453 = vmatpush1.msra.mxu0 0.0
        %454 = vmatprep.subr.mxu0 0.0
        %455 = vmatpush1.msra.mxu0 0.0
        %456 = vmatprep.subr.mxu0 0.0
        %457 = vmatpush1.msra.mxu0 0.0
        %458 = vmatprep.subr.mxu0 0.0
        %459 = vmatpush1.msra.mxu0 0.0
        %460 = vmatprep.subr.mxu0 0.0
        %461 = vmatpush1.msra.mxu0 0.0
        %462 = vmatprep.subr.mxu0 0.0
        %463 = vmatpush1.msra.mxu0 0.0
        %464 = vmatprep.subr.mxu0 0.0
        %465 = vmatpush1.msra.mxu0 0.0
        %466 = vmatprep.subr.mxu0 0.0
        %467 = vmatpush1.msra.mxu0 0.0
        %468 = vmatprep.subr.mxu0 0.0
        %469 = vmatpush1.msra.mxu0 0.0
        %470 = vmatprep.subr.mxu0 0.0
        %471 = vmatpush1.msra.mxu0 0.0
        %472 = vmatprep.subr.mxu0 0.0
        %473 = vmatpush1.msra.mxu0 %v444
        %474 = vmatprep.subr.mxu0 0.0
        %475 = vmatpush1.msra.mxu0 %v443
        %476 = vmatprep.subr.mxu0 0.0
        %477 = vmatpush1.msra.mxu0 %v442
        %478 = vmatprep.subr.mxu0 0.0
        %479 = vmatpush1.msra.mxu0 %v441
        %480 = vmatprep.subr.mxu0 0.0
        %481 = vmatpush2.msra.mxu0 0.0
        %482 = vmatprep.subr.mxu0 0.0
        %483 = vmatpush2.msra.mxu0 0.0
        %484 = vmatprep.subr.mxu0 0.0
        %485 = vmatpush2.msra.mxu0 0.0
        %486 = vmatprep.subr.mxu0 0.0
        %487 = vmatpush2.msra.mxu0 0.0
        %488 = vmatprep.subr.mxu0 0.0
        %489 = vmatpush2.msra.mxu0 0.0
        %490 = vmatprep.subr.mxu0 0.0
        %491 = vmatpush2.msra.mxu0 0.0
        %492 = vmatprep.subr.mxu0 0.0
        %493 = vmatpush2.msra.mxu0 0.0
        %494 = vmatprep.subr.mxu0 0.0
        %495 = vmatpush2.msra.mxu0 0.0
        %496 = vmatprep.subr.mxu0 0.0
        %497 = vmatpush2.msra.mxu0 0.0
        %498 = vmatprep.subr.mxu0 0.0
        %499 = vmatpush2.msra.mxu0 0.0
        %500 = vmatprep.subr.mxu0 0.0
        %501 = vmatpush2.msra.mxu0 0.0
        %502 = vmatprep.subr.mxu0 0.0
        %503 = vmatpush2.msra.mxu0 0.0
        %504 = vmatprep.subr.mxu0 0.0
        %505 = vmatpush2.msra.mxu0 0.0
        %506 = vmatprep.subr.mxu0 0.0
        %507 = vmatpush2.msra.mxu0 0.0
        %508 = vmatprep.subr.mxu0 0.0
        %509 = vmatpush2.msra.mxu0 0.0
        %510 = vmatprep.subr.mxu0 0.0
        %511 = vmatpush2.msra.mxu0 0.0
        %512 = vmatprep.mubr.f32.mxu0 0.0
        %513 = vmatmul.mubr.f32.gmra.mxu0 %v446
        %v514 = vpop.f32.mrf.mxu0
        %v515 = vadd.f32 0.0, %v514
        %v516 = vpop.f32.mrf.mxu0
        %517 = vdwg.mxu0
        %v518 = vadd.f32 %v438, %v515
        %v519 = vxor.u32 %v518, 2147483648
        %v520 = vmul.f32 %v519, 1.442695
        %v521 = vpow.pop %v520
        %v522 = vadd.f32 %v521, 1.0
        %v523 = vrcp.pop %v522
        %v524 = vmul.f32 1.0, %v523
        %v525 = vtanh.pop %v518
        %527 = vrot.lane.b32.xlu0 %v440, 32
        %v528 = vpop.permute.xlu0 %527
        %v530 = vmul.f32 %v524, %v528
        %532 = vrot.lane.b32.xlu0 %v525, 64
        %v533 = vpop.permute.xlu0 %532
        %v535 = vmul.f32 %v524, %v533
        %537 = vrot.lane.b32.xlu0 %v535, 32
        %v538 = vpop.permute.xlu0 %537
        %v540 = vadd.f32 %v530, %v538
        %v541 = vtanh.pop %v540
        %543 = vrot.lane.b32.xlu0 %v541, 64
        %v544 = vpop.permute.xlu0 %543
        %v546 = vmul.f32 %v524, %v544
        %548 = vrot.lane.b32.xlu0 %v546, 32
        %v549 = vpop.permute.xlu0 %548
        %551 = vst.msk [vmem:[#allocation4] sm:$0x3] %vm429, %v549
        %553 = vrot.lane.b32.xlu0 %v540, 96
        %v554 = vpop.permute.xlu0 %553
        %556 = vst.msk [vmem:[#allocation5] sm:$0x3] %vm429, %v554
        %s557 = scalar_lea.vmem %s303, 6
        %558 = vst.msk [vmem:[%s557] sm:$0x3] %vm429, %v549
        %s559 = scalar_lea.vmem %s282, 2
        %v560 = vld [vmem:[%s559] sm:$0x3]
        %v561 = vld [vmem:[#allocation2] sm:$0x3]
        %v562 = vld [vmem:[#allocation3] sm:$0x3]
        %v563 = vld [vmem:[#allocation6] sm:$0xff]
        %v564 = vld [vmem:[#allocation6 + $0x8] sm:$0xff]
        %v565 = vld [vmem:[#allocation6 + $0x10] sm:$0xff]
        %v566 = vld [vmem:[#allocation6 + $0x18] sm:$0xff]
        %v568 = vsel %vm322, %v561, 0
        %570 = vmatprep.subr.mxu0 0.0
        %571 = vmatpush1.msra.mxu0 0.0
        %572 = vmatprep.subr.mxu0 0.0
        %573 = vmatpush1.msra.mxu0 0.0
        %574 = vmatprep.subr.mxu0 0.0
        %575 = vmatpush1.msra.mxu0 0.0
        %576 = vmatprep.subr.mxu0 0.0
        %577 = vmatpush1.msra.mxu0 0.0
        %578 = vmatprep.subr.mxu0 0.0
        %579 = vmatpush1.msra.mxu0 0.0
        %580 = vmatprep.subr.mxu0 0.0
        %581 = vmatpush1.msra.mxu0 0.0
        %582 = vmatprep.subr.mxu0 0.0
        %583 = vmatpush1.msra.mxu0 0.0
        %584 = vmatprep.subr.mxu0 0.0
        %585 = vmatpush1.msra.mxu0 0.0
        %586 = vmatprep.subr.mxu0 0.0
        %587 = vmatpush1.msra.mxu0 0.0
        %588 = vmatprep.subr.mxu0 0.0
        %589 = vmatpush1.msra.mxu0 0.0
        %590 = vmatprep.subr.mxu0 0.0
        %591 = vmatpush1.msra.mxu0 0.0
        %592 = vmatprep.subr.mxu0 0.0
        %593 = vmatpush1.msra.mxu0 0.0
        %594 = vmatprep.subr.mxu0 0.0
        %595 = vmatpush1.msra.mxu0 %v566
        %596 = vmatprep.subr.mxu0 0.0
        %597 = vmatpush1.msra.mxu0 %v565
        %598 = vmatprep.subr.mxu0 0.0
        %599 = vmatpush1.msra.mxu0 %v564
        %600 = vmatprep.subr.mxu0 0.0
        %601 = vmatpush1.msra.mxu0 %v563
        %602 = vmatprep.subr.mxu0 0.0
        %603 = vmatpush2.msra.mxu0 0.0
        %604 = vmatprep.subr.mxu0 0.0
        %605 = vmatpush2.msra.mxu0 0.0
        %606 = vmatprep.subr.mxu0 0.0
        %607 = vmatpush2.msra.mxu0 0.0
        %608 = vmatprep.subr.mxu0 0.0
        %609 = vmatpush2.msra.mxu0 0.0
        %610 = vmatprep.subr.mxu0 0.0
        %611 = vmatpush2.msra.mxu0 0.0
        %612 = vmatprep.subr.mxu0 0.0
        %613 = vmatpush2.msra.mxu0 0.0
        %614 = vmatprep.subr.mxu0 0.0
        %615 = vmatpush2.msra.mxu0 0.0
        %616 = vmatprep.subr.mxu0 0.0
        %617 = vmatpush2.msra.mxu0 0.0
        %618 = vmatprep.subr.mxu0 0.0
        %619 = vmatpush2.msra.mxu0 0.0
        %620 = vmatprep.subr.mxu0 0.0
        %621 = vmatpush2.msra.mxu0 0.0
        %622 = vmatprep.subr.mxu0 0.0
        %623 = vmatpush2.msra.mxu0 0.0
        %624 = vmatprep.subr.mxu0 0.0
        %625 = vmatpush2.msra.mxu0 0.0
        %626 = vmatprep.subr.mxu0 0.0
        %627 = vmatpush2.msra.mxu0 0.0
        %628 = vmatprep.subr.mxu0 0.0
        %629 = vmatpush2.msra.mxu0 0.0
        %630 = vmatprep.subr.mxu0 0.0
        %631 = vmatpush2.msra.mxu0 0.0
        %632 = vmatprep.subr.mxu0 0.0
        %633 = vmatpush2.msra.mxu0 0.0
        %634 = vmatprep.mubr.f32.mxu0 0.0
        %635 = vmatmul.mubr.f32.gmra.mxu0 %v568
        %v636 = vpop.f32.mrf.mxu0
        %v637 = vadd.f32 0.0, %v636
        %v638 = vpop.f32.mrf.mxu0
        %639 = vdwg.mxu0
        %v640 = vadd.f32 %v560, %v637
        %v641 = vxor.u32 %v640, 2147483648
        %v642 = vmul.f32 %v641, 1.442695
        %v643 = vpow.pop %v642
        %v644 = vadd.f32 %v643, 1.0
        %v645 = vrcp.pop %v644
        %v646 = vmul.f32 1.0, %v645
        %v647 = vtanh.pop %v640
        %649 = vrot.lane.b32.xlu0 %v562, 32
        %v650 = vpop.permute.xlu0 %649
        %v652 = vmul.f32 %v646, %v650
        %654 = vrot.lane.b32.xlu0 %v647, 64
        %v655 = vpop.permute.xlu0 %654
        %v657 = vmul.f32 %v646, %v655
        %659 = vrot.lane.b32.xlu0 %v657, 32
        %v660 = vpop.permute.xlu0 %659
        %v662 = vadd.f32 %v652, %v660
        %v663 = vtanh.pop %v662
        %665 = vrot.lane.b32.xlu0 %v663, 64
        %v666 = vpop.permute.xlu0 %665
        %v668 = vmul.f32 %v646, %v666
        %670 = vrot.lane.b32.xlu0 %v668, 32
        %v671 = vpop.permute.xlu0 %670
        %673 = vst.msk [vmem:[#allocation2] sm:$0x3] %vm429, %v671
        %675 = vrot.lane.b32.xlu0 %v662, 96
        %v676 = vpop.permute.xlu0 %675
        %678 = vst.msk [vmem:[#allocation3] sm:$0x3] %vm429, %v676
        %s679 = scalar_lea.vmem %s296, 2
        %680 = vst.msk [vmem:[%s679] sm:$0x3] %vm429, %v671
        %s681 = scalar_lea.vmem %s289, 4
        %v682 = vld [vmem:[%s681] sm:$0x3]
        %v683 = vld [vmem:[#allocation4] sm:$0x3]
        %v684 = vld [vmem:[#allocation5] sm:$0x3]
        %v685 = vld [vmem:[#allocation8] sm:$0xff]
        %v686 = vld [vmem:[#allocation8 + $0x8] sm:$0xff]
        %v687 = vld [vmem:[#allocation8 + $0x10] sm:$0xff]
        %v688 = vld [vmem:[#allocation8 + $0x18] sm:$0xff]
        %v690 = vsel %vm322, %v683, 0
        %692 = vmatprep.subr.mxu0 0.0
        %693 = vmatpush1.msra.mxu0 0.0
        %694 = vmatprep.subr.mxu0 0.0
        %695 = vmatpush1.msra.mxu0 0.0
        %696 = vmatprep.subr.mxu0 0.0
        %697 = vmatpush1.msra.mxu0 0.0
        %698 = vmatprep.subr.mxu0 0.0
        %699 = vmatpush1.msra.mxu0 0.0
        %700 = vmatprep.subr.mxu0 0.0
        %701 = vmatpush1.msra.mxu0 0.0
        %702 = vmatprep.subr.mxu0 0.0
        %703 = vmatpush1.msra.mxu0 0.0
        %704 = vmatprep.subr.mxu0 0.0
        %705 = vmatpush1.msra.mxu0 0.0
        %706 = vmatprep.subr.mxu0 0.0
        %707 = vmatpush1.msra.mxu0 0.0
        %708 = vmatprep.subr.mxu0 0.0
        %709 = vmatpush1.msra.mxu0 0.0
        %710 = vmatprep.subr.mxu0 0.0
        %711 = vmatpush1.msra.mxu0 0.0
        %712 = vmatprep.subr.mxu0 0.0
        %713 = vmatpush1.msra.mxu0 0.0
        %714 = vmatprep.subr.mxu0 0.0
        %715 = vmatpush1.msra.mxu0 0.0
        %716 = vmatprep.subr.mxu0 0.0
        %717 = vmatpush1.msra.mxu0 %v688
        %718 = vmatprep.subr.mxu0 0.0
        %719 = vmatpush1.msra.mxu0 %v687
        %720 = vmatprep.subr.mxu0 0.0
        %721 = vmatpush1.msra.mxu0 %v686
        %722 = vmatprep.subr.mxu0 0.0
        %723 = vmatpush1.msra.mxu0 %v685
        %724 = vmatprep.subr.mxu0 0.0
        %725 = vmatpush2.msra.mxu0 0.0
        %726 = vmatprep.subr.mxu0 0.0
        %727 = vmatpush2.msra.mxu0 0.0
        %728 = vmatprep.subr.mxu0 0.0
        %729 = vmatpush2.msra.mxu0 0.0
        %730 = vmatprep.subr.mxu0 0.0
        %731 = vmatpush2.msra.mxu0 0.0
        %732 = vmatprep.subr.mxu0 0.0
        %733 = vmatpush2.msra.mxu0 0.0
        %734 = vmatprep.subr.mxu0 0.0
        %735 = vmatpush2.msra.mxu0 0.0
        %736 = vmatprep.subr.mxu0 0.0
        %737 = vmatpush2.msra.mxu0 0.0
        %738 = vmatprep.subr.mxu0 0.0
        %739 = vmatpush2.msra.mxu0 0.0
        %740 = vmatprep.subr.mxu0 0.0
        %741 = vmatpush2.msra.mxu0 0.0
        %742 = vmatprep.subr.mxu0 0.0
        %743 = vmatpush2.msra.mxu0 0.0
        %744 = vmatprep.subr.mxu0 0.0
        %745 = vmatpush2.msra.mxu0 0.0
        %746 = vmatprep.subr.mxu0 0.0
        %747 = vmatpush2.msra.mxu0 0.0
        %748 = vmatprep.subr.mxu0 0.0
        %749 = vmatpush2.msra.mxu0 0.0
        %750 = vmatprep.subr.mxu0 0.0
        %751 = vmatpush2.msra.mxu0 0.0
        %752 = vmatprep.subr.mxu0 0.0
        %753 = vmatpush2.msra.mxu0 0.0
        %754 = vmatprep.subr.mxu0 0.0
        %755 = vmatpush2.msra.mxu0 0.0
        %756 = vmatprep.mubr.f32.mxu0 0.0
        %757 = vmatmul.mubr.f32.gmra.mxu0 %v690
        %v758 = vpop.f32.mrf.mxu0
        %v759 = vadd.f32 0.0, %v758
        %v760 = vpop.f32.mrf.mxu0
        %761 = vdwg.mxu0
        %v762 = vadd.f32 %v682, %v759
        %v763 = vxor.u32 %v762, 2147483648
        %v764 = vmul.f32 %v763, 1.442695
        %v765 = vpow.pop %v764
        %v766 = vadd.f32 %v765, 1.0
        %v767 = vrcp.pop %v766
        %v768 = vmul.f32 1.0, %v767
        %v769 = vtanh.pop %v762
        %771 = vrot.lane.b32.xlu0 %v684, 32
        %v772 = vpop.permute.xlu0 %771
        %v774 = vmul.f32 %v768, %v772
        %776 = vrot.lane.b32.xlu0 %v769, 64
        %v777 = vpop.permute.xlu0 %776
        %v779 = vmul.f32 %v768, %v777
        %781 = vrot.lane.b32.xlu0 %v779, 32
        %v782 = vpop.permute.xlu0 %781
        %v784 = vadd.f32 %v774, %v782
        %v785 = vtanh.pop %v784
        %787 = vrot.lane.b32.xlu0 %v785, 64
        %v788 = vpop.permute.xlu0 %787
        %v790 = vmul.f32 %v768, %v788
        %792 = vrot.lane.b32.xlu0 %v790, 32
        %v793 = vpop.permute.xlu0 %792
        %795 = vst.msk [vmem:[#allocation4] sm:$0x3] %vm429, %v793
        %797 = vrot.lane.b32.xlu0 %v784, 96
        %v798 = vpop.permute.xlu0 %797
        %800 = vst.msk [vmem:[#allocation5] sm:$0x3] %vm429, %v798
        %s801 = scalar_lea.vmem %s303, 4
        %802 = vst.msk [vmem:[%s801] sm:$0x3] %vm429, %v793
        %s803 = scalar_lea.vmem %s282, 4
        %v804 = vld [vmem:[%s803] sm:$0x3]
        %v805 = vld [vmem:[#allocation2] sm:$0x3]
        %v806 = vld [vmem:[#allocation3] sm:$0x3]
        %v807 = vld [vmem:[#allocation6] sm:$0xff]
        %v808 = vld [vmem:[#allocation6 + $0x8] sm:$0xff]
        %v809 = vld [vmem:[#allocation6 + $0x10] sm:$0xff]
        %v810 = vld [vmem:[#allocation6 + $0x18] sm:$0xff]
        %v812 = vsel %vm322, %v805, 0
        %814 = vmatprep.subr.mxu0 0.0
        %815 = vmatpush1.msra.mxu0 0.0
        %816 = vmatprep.subr.mxu0 0.0
        %817 = vmatpush1.msra.mxu0 0.0
        %818 = vmatprep.subr.mxu0 0.0
        %819 = vmatpush1.msra.mxu0 0.0
        %820 = vmatprep.subr.mxu0 0.0
        %821 = vmatpush1.msra.mxu0 0.0
        %822 = vmatprep.subr.mxu0 0.0
        %823 = vmatpush1.msra.mxu0 0.0
        %824 = vmatprep.subr.mxu0 0.0
        %825 = vmatpush1.msra.mxu0 0.0
        %826 = vmatprep.subr.mxu0 0.0
        %827 = vmatpush1.msra.mxu0 0.0
        %828 = vmatprep.subr.mxu0 0.0
        %829 = vmatpush1.msra.mxu0 0.0
        %830 = vmatprep.subr.mxu0 0.0
        %831 = vmatpush1.msra.mxu0 0.0
        %832 = vmatprep.subr.mxu0 0.0
        %833 = vmatpush1.msra.mxu0 0.0
        %834 = vmatprep.subr.mxu0 0.0
        %835 = vmatpush1.msra.mxu0 0.0
        %836 = vmatprep.subr.mxu0 0.0
        %837 = vmatpush1.msra.mxu0 0.0
        %838 = vmatprep.subr.mxu0 0.0
        %839 = vmatpush1.msra.mxu0 %v810
        %840 = vmatprep.subr.mxu0 0.0
        %841 = vmatpush1.msra.mxu0 %v809
        %842 = vmatprep.subr.mxu0 0.0
        %843 = vmatpush1.msra.mxu0 %v808
        %844 = vmatprep.subr.mxu0 0.0
        %845 = vmatpush1.msra.mxu0 %v807
        %846 = vmatprep.subr.mxu0 0.0
        %847 = vmatpush2.msra.mxu0 0.0
        %848 = vmatprep.subr.mxu0 0.0
        %849 = vmatpush2.msra.mxu0 0.0
        %850 = vmatprep.subr.mxu0 0.0
        %851 = vmatpush2.msra.mxu0 0.0
        %852 = vmatprep.subr.mxu0 0.0
        %853 = vmatpush2.msra.mxu0 0.0
        %854 = vmatprep.subr.mxu0 0.0
        %855 = vmatpush2.msra.mxu0 0.0
        %856 = vmatprep.subr.mxu0 0.0
        %857 = vmatpush2.msra.mxu0 0.0
        %858 = vmatprep.subr.mxu0 0.0
        %859 = vmatpush2.msra.mxu0 0.0
        %860 = vmatprep.subr.mxu0 0.0
        %861 = vmatpush2.msra.mxu0 0.0
        %862 = vmatprep.subr.mxu0 0.0
        %863 = vmatpush2.msra.mxu0 0.0
        %864 = vmatprep.subr.mxu0 0.0
        %865 = vmatpush2.msra.mxu0 0.0
        %866 = vmatprep.subr.mxu0 0.0
        %867 = vmatpush2.msra.mxu0 0.0
        %868 = vmatprep.subr.mxu0 0.0
        %869 = vmatpush2.msra.mxu0 0.0
        %870 = vmatprep.subr.mxu0 0.0
        %871 = vmatpush2.msra.mxu0 0.0
        %872 = vmatprep.subr.mxu0 0.0
        %873 = vmatpush2.msra.mxu0 0.0
        %874 = vmatprep.subr.mxu0 0.0
        %875 = vmatpush2.msra.mxu0 0.0
        %876 = vmatprep.subr.mxu0 0.0
        %877 = vmatpush2.msra.mxu0 0.0
        %878 = vmatprep.mubr.f32.mxu0 0.0
        %879 = vmatmul.mubr.f32.gmra.mxu0 %v812
        %v880 = vpop.f32.mrf.mxu0
        %v881 = vadd.f32 0.0, %v880
        %v882 = vpop.f32.mrf.mxu0
        %883 = vdwg.mxu0
        %v884 = vadd.f32 %v804, %v881
        %v885 = vxor.u32 %v884, 2147483648
        %v886 = vmul.f32 %v885, 1.442695
        %v887 = vpow.pop %v886
        %v888 = vadd.f32 %v887, 1.0
        %v889 = vrcp.pop %v888
        %v890 = vmul.f32 1.0, %v889
        %v891 = vtanh.pop %v884
        %893 = vrot.lane.b32.xlu0 %v806, 32
        %v894 = vpop.permute.xlu0 %893
        %v896 = vmul.f32 %v890, %v894
        %898 = vrot.lane.b32.xlu0 %v891, 64
        %v899 = vpop.permute.xlu0 %898
        %v901 = vmul.f32 %v890, %v899
        %903 = vrot.lane.b32.xlu0 %v901, 32
        %v904 = vpop.permute.xlu0 %903
        %v906 = vadd.f32 %v896, %v904
        %v907 = vtanh.pop %v906
        %909 = vrot.lane.b32.xlu0 %v907, 64
        %v910 = vpop.permute.xlu0 %909
        %v912 = vmul.f32 %v890, %v910
        %914 = vrot.lane.b32.xlu0 %v912, 32
        %v915 = vpop.permute.xlu0 %914
        %917 = vst.msk [vmem:[#allocation2] sm:$0x3] %vm429, %v915
        %919 = vrot.lane.b32.xlu0 %v906, 96
        %v920 = vpop.permute.xlu0 %919
        %922 = vst.msk [vmem:[#allocation3] sm:$0x3] %vm429, %v920
        %s923 = scalar_lea.vmem %s296, 4
        %924 = vst.msk [vmem:[%s923] sm:$0x3] %vm429, %v915
        %s925 = scalar_lea.vmem %s289, 2
        %v926 = vld [vmem:[%s925] sm:$0x3]
        %v927 = vld [vmem:[#allocation4] sm:$0x3]
        %v928 = vld [vmem:[#allocation5] sm:$0x3]
        %v929 = vld [vmem:[#allocation8] sm:$0xff]
        %v930 = vld [vmem:[#allocation8 + $0x8] sm:$0xff]
        %v931 = vld [vmem:[#allocation8 + $0x10] sm:$0xff]
        %v932 = vld [vmem:[#allocation8 + $0x18] sm:$0xff]
        %v934 = vsel %vm322, %v927, 0
        %936 = vmatprep.subr.mxu0 0.0
        %937 = vmatpush1.msra.mxu0 0.0
        %938 = vmatprep.subr.mxu0 0.0
        %939 = vmatpush1.msra.mxu0 0.0
        %940 = vmatprep.subr.mxu0 0.0
        %941 = vmatpush1.msra.mxu0 0.0
        %942 = vmatprep.subr.mxu0 0.0
        %943 = vmatpush1.msra.mxu0 0.0
        %944 = vmatprep.subr.mxu0 0.0
        %945 = vmatpush1.msra.mxu0 0.0
        %946 = vmatprep.subr.mxu0 0.0
        %947 = vmatpush1.msra.mxu0 0.0
        %948 = vmatprep.subr.mxu0 0.0
        %949 = vmatpush1.msra.mxu0 0.0
        %950 = vmatprep.subr.mxu0 0.0
        %951 = vmatpush1.msra.mxu0 0.0
        %952 = vmatprep.subr.mxu0 0.0
        %953 = vmatpush1.msra.mxu0 0.0
        %954 = vmatprep.subr.mxu0 0.0
        %955 = vmatpush1.msra.mxu0 0.0
        %956 = vmatprep.subr.mxu0 0.0
        %957 = vmatpush1.msra.mxu0 0.0
        %958 = vmatprep.subr.mxu0 0.0
        %959 = vmatpush1.msra.mxu0 0.0
        %960 = vmatprep.subr.mxu0 0.0
        %961 = vmatpush1.msra.mxu0 %v932
        %962 = vmatprep.subr.mxu0 0.0
        %963 = vmatpush1.msra.mxu0 %v931
        %964 = vmatprep.subr.mxu0 0.0
        %965 = vmatpush1.msra.mxu0 %v930
        %966 = vmatprep.subr.mxu0 0.0
        %967 = vmatpush1.msra.mxu0 %v929
        %968 = vmatprep.subr.mxu0 0.0
        %969 = vmatpush2.msra.mxu0 0.0
        %970 = vmatprep.subr.mxu0 0.0
        %971 = vmatpush2.msra.mxu0 0.0
        %972 = vmatprep.subr.mxu0 0.0
        %973 = vmatpush2.msra.mxu0 0.0
        %974 = vmatprep.subr.mxu0 0.0
        %975 = vmatpush2.msra.mxu0 0.0
        %976 = vmatprep.subr.mxu0 0.0
        %977 = vmatpush2.msra.mxu0 0.0
        %978 = vmatprep.subr.mxu0 0.0
        %979 = vmatpush2.msra.mxu0 0.0
        %980 = vmatprep.subr.mxu0 0.0
        %981 = vmatpush2.msra.mxu0 0.0
        %982 = vmatprep.subr.mxu0 0.0
        %983 = vmatpush2.msra.mxu0 0.0
        %984 = vmatprep.subr.mxu0 0.0
        %985 = vmatpush2.msra.mxu0 0.0
        %986 = vmatprep.subr.mxu0 0.0
        %987 = vmatpush2.msra.mxu0 0.0
        %988 = vmatprep.subr.mxu0 0.0
        %989 = vmatpush2.msra.mxu0 0.0
        %990 = vmatprep.subr.mxu0 0.0
        %991 = vmatpush2.msra.mxu0 0.0
        %992 = vmatprep.subr.mxu0 0.0
        %993 = vmatpush2.msra.mxu0 0.0
        %994 = vmatprep.subr.mxu0 0.0
        %995 = vmatpush2.msra.mxu0 0.0
        %996 = vmatprep.subr.mxu0 0.0
        %997 = vmatpush2.msra.mxu0 0.0
        %998 = vmatprep.subr.mxu0 0.0
        %999 = vmatpush2.msra.mxu0 0.0
        %1000 = vmatprep.mubr.f32.mxu0 0.0
        %1001 = vmatmul.mubr.f32.gmra.mxu0 %v934
        %v1002 = vpop.f32.mrf.mxu0
        %v1003 = vadd.f32 0.0, %v1002
        %v1004 = vpop.f32.mrf.mxu0
        %1005 = vdwg.mxu0
        %v1006 = vadd.f32 %v926, %v1003
        %v1007 = vxor.u32 %v1006, 2147483648
        %v1008 = vmul.f32 %v1007, 1.442695
        %v1009 = vpow.pop %v1008
        %v1010 = vadd.f32 %v1009, 1.0
        %v1011 = vrcp.pop %v1010
        %v1012 = vmul.f32 1.0, %v1011
        %v1013 = vtanh.pop %v1006
        %1015 = vrot.lane.b32.xlu0 %v928, 32
        %v1016 = vpop.permute.xlu0 %1015
        %v1018 = vmul.f32 %v1012, %v1016
        %1020 = vrot.lane.b32.xlu0 %v1013, 64
        %v1021 = vpop.permute.xlu0 %1020
        %v1023 = vmul.f32 %v1012, %v1021
        %1025 = vrot.lane.b32.xlu0 %v1023, 32
        %v1026 = vpop.permute.xlu0 %1025
        %v1028 = vadd.f32 %v1018, %v1026
        %v1029 = vtanh.pop %v1028
        %1031 = vrot.lane.b32.xlu0 %v1029, 64
        %v1032 = vpop.permute.xlu0 %1031
        %v1034 = vmul.f32 %v1012, %v1032
        %1036 = vrot.lane.b32.xlu0 %v1034, 32
        %v1037 = vpop.permute.xlu0 %1036
        %1039 = vst.msk [vmem:[#allocation4] sm:$0x3] %vm429, %v1037
        %1041 = vrot.lane.b32.xlu0 %v1028, 96
        %v1042 = vpop.permute.xlu0 %1041
        %1044 = vst.msk [vmem:[#allocation5] sm:$0x3] %vm429, %v1042
        %s1045 = scalar_lea.vmem %s303, 2
        %1046 = vst.msk [vmem:[%s1045] sm:$0x3] %vm429, %v1037
        %s1047 = scalar_lea.vmem %s282, 6
        %v1048 = vld [vmem:[%s1047] sm:$0x3]
        %v1049 = vld [vmem:[#allocation2] sm:$0x3]
        %v1050 = vld [vmem:[#allocation3] sm:$0x3]
        %v1051 = vld [vmem:[#allocation6] sm:$0xff]
        %v1052 = vld [vmem:[#allocation6 + $0x8] sm:$0xff]
        %v1053 = vld [vmem:[#allocation6 + $0x10] sm:$0xff]
        %v1054 = vld [vmem:[#allocation6 + $0x18] sm:$0xff]
        %v1056 = vsel %vm322, %v1049, 0
        %1058 = vmatprep.subr.mxu0 0.0
        %1059 = vmatpush1.msra.mxu0 0.0
        %1060 = vmatprep.subr.mxu0 0.0
        %1061 = vmatpush1.msra.mxu0 0.0
        %1062 = vmatprep.subr.mxu0 0.0
        %1063 = vmatpush1.msra.mxu0 0.0
        %1064 = vmatprep.subr.mxu0 0.0
        %1065 = vmatpush1.msra.mxu0 0.0
        %1066 = vmatprep.subr.mxu0 0.0
        %1067 = vmatpush1.msra.mxu0 0.0
        %1068 = vmatprep.subr.mxu0 0.0
        %1069 = vmatpush1.msra.mxu0 0.0
        %1070 = vmatprep.subr.mxu0 0.0
        %1071 = vmatpush1.msra.mxu0 0.0
        %1072 = vmatprep.subr.mxu0 0.0
        %1073 = vmatpush1.msra.mxu0 0.0
        %1074 = vmatprep.subr.mxu0 0.0
        %1075 = vmatpush1.msra.mxu0 0.0
        %1076 = vmatprep.subr.mxu0 0.0
        %1077 = vmatpush1.msra.mxu0 0.0
        %1078 = vmatprep.subr.mxu0 0.0
        %1079 = vmatpush1.msra.mxu0 0.0
        %1080 = vmatprep.subr.mxu0 0.0
        %1081 = vmatpush1.msra.mxu0 0.0
        %1082 = vmatprep.subr.mxu0 0.0
        %1083 = vmatpush1.msra.mxu0 %v1054
        %1084 = vmatprep.subr.mxu0 0.0
        %1085 = vmatpush1.msra.mxu0 %v1053
        %1086 = vmatprep.subr.mxu0 0.0
        %1087 = vmatpush1.msra.mxu0 %v1052
        %1088 = vmatprep.subr.mxu0 0.0
        %1089 = vmatpush1.msra.mxu0 %v1051
        %1090 = vmatprep.subr.mxu0 0.0
        %1091 = vmatpush2.msra.mxu0 0.0
        %1092 = vmatprep.subr.mxu0 0.0
        %1093 = vmatpush2.msra.mxu0 0.0
        %1094 = vmatprep.subr.mxu0 0.0
        %1095 = vmatpush2.msra.mxu0 0.0
        %1096 = vmatprep.subr.mxu0 0.0
        %1097 = vmatpush2.msra.mxu0 0.0
        %1098 = vmatprep.subr.mxu0 0.0
        %1099 = vmatpush2.msra.mxu0 0.0
        %1100 = vmatprep.subr.mxu0 0.0
        %1101 = vmatpush2.msra.mxu0 0.0
        %1102 = vmatprep.subr.mxu0 0.0
        %1103 = vmatpush2.msra.mxu0 0.0
        %1104 = vmatprep.subr.mxu0 0.0
        %1105 = vmatpush2.msra.mxu0 0.0
        %1106 = vmatprep.subr.mxu0 0.0
        %1107 = vmatpush2.msra.mxu0 0.0
        %1108 = vmatprep.subr.mxu0 0.0
        %1109 = vmatpush2.msra.mxu0 0.0
        %1110 = vmatprep.subr.mxu0 0.0
        %1111 = vmatpush2.msra.mxu0 0.0
        %1112 = vmatprep.subr.mxu0 0.0
        %1113 = vmatpush2.msra.mxu0 0.0
        %1114 = vmatprep.subr.mxu0 0.0
        %1115 = vmatpush2.msra.mxu0 0.0
        %1116 = vmatprep.subr.mxu0 0.0
        %1117 = vmatpush2.msra.mxu0 0.0
        %1118 = vmatprep.subr.mxu0 0.0
        %1119 = vmatpush2.msra.mxu0 0.0
        %1120 = vmatprep.subr.mxu0 0.0
        %1121 = vmatpush2.msra.mxu0 0.0
        %1122 = vmatprep.mubr.f32.mxu0 0.0
        %1123 = vmatmul.mubr.f32.gmra.mxu0 %v1056
        %v1124 = vpop.f32.mrf.mxu0
        %v1125 = vadd.f32 0.0, %v1124
        %v1126 = vpop.f32.mrf.mxu0
        %1127 = vdwg.mxu0
        %v1128 = vadd.f32 %v1048, %v1125
        %v1129 = vxor.u32 %v1128, 2147483648
        %v1130 = vmul.f32 %v1129, 1.442695
        %v1131 = vpow.pop %v1130
        %v1132 = vadd.f32 %v1131, 1.0
        %v1133 = vrcp.pop %v1132
        %v1134 = vmul.f32 1.0, %v1133
        %v1135 = vtanh.pop %v1128
        %1137 = vrot.lane.b32.xlu0 %v1050, 32
        %v1138 = vpop.permute.xlu0 %1137
        %v1140 = vmul.f32 %v1134, %v1138
        %1142 = vrot.lane.b32.xlu0 %v1135, 64
        %v1143 = vpop.permute.xlu0 %1142
        %v1145 = vmul.f32 %v1134, %v1143
        %1147 = vrot.lane.b32.xlu0 %v1145, 32
        %v1148 = vpop.permute.xlu0 %1147
        %v1150 = vadd.f32 %v1140, %v1148
        %v1151 = vtanh.pop %v1150
        %1153 = vrot.lane.b32.xlu0 %v1151, 64
        %v1154 = vpop.permute.xlu0 %1153
        %v1156 = vmul.f32 %v1134, %v1154
        %1158 = vrot.lane.b32.xlu0 %v1156, 32
        %v1159 = vpop.permute.xlu0 %1158
        %1161 = vst.msk [vmem:[#allocation2] sm:$0x3] %vm429, %v1159
        %1163 = vrot.lane.b32.xlu0 %v1150, 96
        %v1164 = vpop.permute.xlu0 %1163
        %1166 = vst.msk [vmem:[#allocation3] sm:$0x3] %vm429, %v1164
        %s1167 = scalar_lea.vmem %s296, 6
        %1168 = vst.msk [vmem:[%s1167] sm:$0x3] %vm429, %v1159
        %v1169 = vld [vmem:[%s289] sm:$0x3]
        %v1170 = vld [vmem:[#allocation4] sm:$0x3]
        %v1171 = vld [vmem:[#allocation5] sm:$0x3]
        %v1172 = vld [vmem:[#allocation8] sm:$0xff]
        %v1173 = vld [vmem:[#allocation8 + $0x8] sm:$0xff]
        %v1174 = vld [vmem:[#allocation8 + $0x10] sm:$0xff]
        %v1175 = vld [vmem:[#allocation8 + $0x18] sm:$0xff]
        %v1177 = vsel %vm322, %v1170, 0
        %1179 = vmatprep.subr.mxu0 0.0
        %1180 = vmatpush1.msra.mxu0 0.0
        %1181 = vmatprep.subr.mxu0 0.0
        %1182 = vmatpush1.msra.mxu0 0.0
        %1183 = vmatprep.subr.mxu0 0.0
        %1184 = vmatpush1.msra.mxu0 0.0
        %1185 = vmatprep.subr.mxu0 0.0
        %1186 = vmatpush1.msra.mxu0 0.0
        %1187 = vmatprep.subr.mxu0 0.0
        %1188 = vmatpush1.msra.mxu0 0.0
        %1189 = vmatprep.subr.mxu0 0.0
        %1190 = vmatpush1.msra.mxu0 0.0
        %1191 = vmatprep.subr.mxu0 0.0
        %1192 = vmatpush1.msra.mxu0 0.0
        %1193 = vmatprep.subr.mxu0 0.0
        %1194 = vmatpush1.msra.mxu0 0.0
        %1195 = vmatprep.subr.mxu0 0.0
        %1196 = vmatpush1.msra.mxu0 0.0
        %1197 = vmatprep.subr.mxu0 0.0
        %1198 = vmatpush1.msra.mxu0 0.0
        %1199 = vmatprep.subr.mxu0 0.0
        %1200 = vmatpush1.msra.mxu0 0.0
        %1201 = vmatprep.subr.mxu0 0.0
        %1202 = vmatpush1.msra.mxu0 0.0
        %1203 = vmatprep.subr.mxu0 0.0
        %1204 = vmatpush1.msra.mxu0 %v1175
        %1205 = vmatprep.subr.mxu0 0.0
        %1206 = vmatpush1.msra.mxu0 %v1174
        %1207 = vmatprep.subr.mxu0 0.0
        %1208 = vmatpush1.msra.mxu0 %v1173
        %1209 = vmatprep.subr.mxu0 0.0
        %1210 = vmatpush1.msra.mxu0 %v1172
        %1211 = vmatprep.subr.mxu0 0.0
        %1212 = vmatpush2.msra.mxu0 0.0
        %1213 = vmatprep.subr.mxu0 0.0
        %1214 = vmatpush2.msra.mxu0 0.0
        %1215 = vmatprep.subr.mxu0 0.0
        %1216 = vmatpush2.msra.mxu0 0.0
        %1217 = vmatprep.subr.mxu0 0.0
        %1218 = vmatpush2.msra.mxu0 0.0
        %1219 = vmatprep.subr.mxu0 0.0
        %1220 = vmatpush2.msra.mxu0 0.0
        %1221 = vmatprep.subr.mxu0 0.0
        %1222 = vmatpush2.msra.mxu0 0.0
        %1223 = vmatprep.subr.mxu0 0.0
        %1224 = vmatpush2.msra.mxu0 0.0
        %1225 = vmatprep.subr.mxu0 0.0
        %1226 = vmatpush2.msra.mxu0 0.0
        %1227 = vmatprep.subr.mxu0 0.0
        %1228 = vmatpush2.msra.mxu0 0.0
        %1229 = vmatprep.subr.mxu0 0.0
        %1230 = vmatpush2.msra.mxu0 0.0
        %1231 = vmatprep.subr.mxu0 0.0
        %1232 = vmatpush2.msra.mxu0 0.0
        %1233 = vmatprep.subr.mxu0 0.0
        %1234 = vmatpush2.msra.mxu0 0.0
        %1235 = vmatprep.subr.mxu0 0.0
        %1236 = vmatpush2.msra.mxu0 0.0
        %1237 = vmatprep.subr.mxu0 0.0
        %1238 = vmatpush2.msra.mxu0 0.0
        %1239 = vmatprep.subr.mxu0 0.0
        %1240 = vmatpush2.msra.mxu0 0.0
        %1241 = vmatprep.subr.mxu0 0.0
        %1242 = vmatpush2.msra.mxu0 0.0
        %1243 = vmatprep.mubr.f32.mxu0 0.0
        %1244 = vmatmul.mubr.f32.gmra.mxu0 %v1177
        %v1245 = vpop.f32.mrf.mxu0
        %v1246 = vadd.f32 0.0, %v1245
        %v1247 = vpop.f32.mrf.mxu0
        %1248 = vdwg.mxu0
        %v1249 = vadd.f32 %v1169, %v1246
        %v1250 = vxor.u32 %v1249, 2147483648
        %v1251 = vmul.f32 %v1250, 1.442695
        %v1252 = vpow.pop %v1251
        %v1253 = vadd.f32 %v1252, 1.0
        %v1254 = vrcp.pop %v1253
        %v1255 = vmul.f32 1.0, %v1254
        %v1256 = vtanh.pop %v1249
        %1258 = vrot.lane.b32.xlu0 %v1171, 32
        %v1259 = vpop.permute.xlu0 %1258
        %v1261 = vmul.f32 %v1255, %v1259
        %1263 = vrot.lane.b32.xlu0 %v1256, 64
        %v1264 = vpop.permute.xlu0 %1263
        %v1266 = vmul.f32 %v1255, %v1264
        %1268 = vrot.lane.b32.xlu0 %v1266, 32
        %v1269 = vpop.permute.xlu0 %1268
        %v1271 = vadd.f32 %v1261, %v1269
        %v1272 = vtanh.pop %v1271
        %1274 = vrot.lane.b32.xlu0 %v1272, 64
        %v1275 = vpop.permute.xlu0 %1274
        %v1277 = vmul.f32 %v1255, %v1275
        %1279 = vrot.lane.b32.xlu0 %v1277, 32
        %v1280 = vpop.permute.xlu0 %1279
        %1282 = vst.msk [vmem:[#allocation4] sm:$0x3] %vm429, %v1280
        %1284 = vrot.lane.b32.xlu0 %v1271, 96
        %v1285 = vpop.permute.xlu0 %1284
        %1287 = vst.msk [vmem:[#allocation5] sm:$0x3] %vm429, %v1285
        %1288 = vst.msk [vmem:[%s303] sm:$0x3] %vm429, %v1280
        %s1289 = smul.u32 4, %s19
        %p1290 = scmp.lt.s32.totalorder %s1289, 7
        %s1291 = scalar_select %p1290, %s1289, 7
        %s1292 = smul.addr %s1291, 2
        %s1293 = scalar_lea.vmem %s4, %s1292
        %s1294 = ssub.s32 1, %s19
        %s1295 = smul.u32 4, %s1294
        %p1296 = scmp.lt.s32.totalorder %s1295, 7
        %s1297 = scalar_select %p1296, %s1295, 7
        %s1298 = smul.addr %s1297, 2
        %s1299 = scalar_lea.vmem %s5, %s1298
        // Predicated region
        $region49: #{deep_lstm_forward.6} parent=35 // pred_check
          %p1300 = pneg %p133
        $region50: #{deep_lstm_forward.6} parent=35 // pred_check_branch
          %1302 = sbr.rel (%p1300) target = $region52
        $region51: #{deep_lstm_forward.6} parent=35 // pred_region
          %s1303 = smul.u32 4, %s19
        $region52: #{deep_lstm_forward.6} parent=35 // pred_fallthru
          _
        // Predicated region
        $region53: #{deep_lstm_forward.6} parent=35 // pred_check
          %p1304 = pneg %p161
        $region54: #{deep_lstm_forward.6} parent=35 // pred_check_branch
          %1306 = sbr.rel (%p1304) target = $region56
        $region55: #{deep_lstm_forward.6} parent=35 // pred_region
          %s1307 = ssub.s32 1, %s19
          %s1308 = smul.u32 4, %s1307
        $region56: #{deep_lstm_forward.6} parent=35 // pred_fallthru
          _
      $region36: #{deep_lstm_forward.6} parent=5 // pred_fallthru
        _
      %p1309 = scmp.le.s32.totalorder 2, %s14
      // Predicated region
      $region57: #{deep_lstm_forward.6} parent=5 // pred_check
        %p1310 = pneg %p1309
      $region58: #{deep_lstm_forward.6} parent=5 // pred_check_branch
        %1312 = sbr.rel (%p1310) target = $region60
      $region59: #{deep_lstm_forward.6} parent=5 // pred_region
        %s1313 = ssub.s32 %s14, 2
        // Predicated region
        $region61: #{deep_lstm_forward.6} parent=59 // pred_check
          %p1314 = pneg %p139
        $region62: #{deep_lstm_forward.6} parent=59 // pred_check_branch
          %1316 = sbr.rel (%p1314) target = $region64
        $region63: #{deep_lstm_forward.6} parent=59 // pred_region
          %s1317 = smul.u32 4, %s20
          %p1318 = scmp.lt.s32.totalorder %s1317, 7
          %s1319 = scalar_select %p1318, %s1317, 7
          %s1320 = smul.addr %s1319, 2
          %s1321 = scalar_lea.vmem %s4, %s1320
        $region64: #{deep_lstm_forward.6} parent=59 // pred_fallthru
          _
        // Predicated region
        $region65: #{deep_lstm_forward.6} parent=59 // pred_check
          %p1322 = pneg %p167
        $region66: #{deep_lstm_forward.6} parent=59 // pred_check_branch
          %1324 = sbr.rel (%p1322) target = $region68
        $region67: #{deep_lstm_forward.6} parent=59 // pred_region
          %s1325 = ssub.s32 1, %s20
          %s1326 = smul.u32 4, %s1325
          %p1327 = scmp.lt.s32.totalorder %s1326, 7
          %s1328 = scalar_select %p1327, %s1326, 7
          %s1329 = smul.addr %s1328, 2
          %s1330 = scalar_lea.vmem %s5, %s1329
        $region68: #{deep_lstm_forward.6} parent=59 // pred_fallthru
          _
      $region60: #{deep_lstm_forward.6} parent=5 // pred_fallthru
        _
    $region6: #{deep_lstm_forward.6} parent=1 // loop_footer
      %s18 = sadd.s32 1, %s14
    $region7: #{deep_lstm_forward.6} parent=1 // loop_footer_branch
      %13 = sbr.rel target = $region3
    $region8: #{deep_lstm_forward.6} parent=1 // loop_exit
      _
    %1331 = vsyncpa [#allocation7], 1
    %s1332 = scalar_lea.sflag [#allocation7], 1
    %1333 = vsyncpa %s1332, 1
    %1334 = vsyncpa [#allocation9], 1

// kernel: deep_lstm_forward.9
$region0: #{deep_lstm_forward.9}
  #allocation0 [shape = 'u32[]', space=smem, size = 0x4, offset = 0x4, fixed_abs, tag = 'smem constant byte address 0x4 - core index']
  #allocation1 [shape = 'u32[144,128]{1,0:T(1,128)}', space=vmem, size = 0x12000, scoped, tag = 'internal scratch']
  %s0 = inlined_call_operand.vmem [shape: f32[16,32], index: 0, kind: input, shape index: {}]
  %s1 = inlined_call_operand.vmem [shape: f32[16,32], index: 1, kind: input, shape index: {}]
  %s2 = inlined_call_operand.vmem [shape: f32[32,128], index: 2, kind: input, shape index: {}]
  %s3 = inlined_call_operand.vmem [shape: f32[1,128], index: 3, kind: input, shape index: {}]
  %s4 = inlined_call_operand.vmem [shape: f32[16,128], index: 4, kind: output, shape index: {}]
  %s5 = sld [smem:[#allocation0]]
  $region49: #{deep_lstm_forward.9} parent=0
    _
  %s7 = ssub.s32 1, %s5
  %s8 = scalar_select 0, %s7, %s5
  loop: start=0, step=1, limit=4
  $region2: #{deep_lstm_forward.9} parent=0 // loop_pre_header
    _
  $region3: #{deep_lstm_forward.9} parent=0 // loop_header
    %s10 = sphi 0, %s14
    %p11 = scmp.ge.s32.totalorder %s10, 4
    %s20 = sphi 0, %s22
    %s23 = sphi 0, %s20
    %s24 = sphi 0, %s23
    %s40 = sphi 0, %s24
    %s46 = sphi 0, %s48
    %s49 = sphi 0, %s46
    %s50 = sphi 0, %s49
    %s66 = sphi 0, %s50
    %s70 = sphi 0, %s70
    %s72 = sphi 0, %s70
    %s73 = sphi 0, %s72
    %s87 = sphi 0, %s73
    %s91 = sphi 0, %s91
    %s93 = sphi 0, %s91
    %s94 = sphi 0, %s93
    %s108 = sphi 0, %s94
    %s114 = sphi 0, %s116
    %s117 = sphi 0, %s114
    %s118 = sphi 0, %s117
    %s134 = sphi 0, %s118
  $region4: #{deep_lstm_forward.9} parent=0 // loop_header_branch
    %13 = sbr.rel (%p11) target = $region8
  $region5: #{deep_lstm_forward.9} parent=0 // loop_body
    %s15 = ssub.s32 %s10, 1
    %s16 = ssub.s32 %s10, 2
    %s17 = sadd.s32 %s10, 1
    %s18 = ssub.s32 %s10, %s17
    %p19 = scmp.eq.s32.totalorder %s18, 0
    %s21 = sadd.s32 %s20, 1
    %s22 = scalar_select %p19, %s20, %s21
    %p25 = pneg %p19
    %p26 = scmp.eq.s32.totalorder %s10, 1
    %p27 = por %p25, %p26
    %p28 = scmp.ne.s32.totalorder %s20, %s23
    %p29 = scmp.eq.s32.totalorder %s10, 0
    %p30 = por %p28, %p29
    %p31 = scmp.ne.s32.totalorder %s20, %s23
    %p32 = scmp.eq.s32.totalorder %s15, 1
    %p33 = por %p31, %p32
    %p34 = scmp.ne.s32.totalorder %s23, %s24
    %p35 = scmp.eq.s32.totalorder %s15, 0
    %p36 = por %p34, %p35
    %p37 = scmp.ne.s32.totalorder %s23, %s24
    %p38 = scmp.eq.s32.totalorder %s16, 1
    %p39 = por %p37, %p38
    %p41 = scmp.ne.s32.totalorder %s24, %s40
    %p42 = scmp.eq.s32.totalorder %s16, 0
    %p43 = por %p41, %p42
    %s44 = ssub.s32 %s10, %s17
    %p45 = scmp.eq.s32.totalorder %s44, 0
    %s47 = sadd.s32 %s46, 1
    %s48 = scalar_select %p45, %s46, %s47
    %p51 = pneg %p45
    %p52 = scmp.eq.s32.totalorder %s10, 1
    %p53 = por %p51, %p52
    %p54 = scmp.ne.s32.totalorder %s46, %s49
    %p55 = scmp.eq.s32.totalorder %s10, 0
    %p56 = por %p54, %p55
    %p57 = scmp.ne.s32.totalorder %s46, %s49
    %p58 = scmp.eq.s32.totalorder %s15, 1
    %p59 = por %p57, %p58
    %p60 = scmp.ne.s32.totalorder %s49, %s50
    %p61 = scmp.eq.s32.totalorder %s15, 0
    %p62 = por %p60, %p61
    %p63 = scmp.ne.s32.totalorder %s49, %s50
    %p64 = scmp.eq.s32.totalorder %s16, 1
    %p65 = por %p63, %p64
    %p67 = scmp.ne.s32.totalorder %s50, %s66
    %p68 = scmp.eq.s32.totalorder %s16, 0
    %p69 = por %p67, %p68
    %s71 = sadd.s32 %s70, 1
    %p74 = scmp.eq.s32.totalorder %s10, 1
    %p75 = scmp.ne.s32.totalorder %s70, %s72
    %p76 = scmp.eq.s32.totalorder %s10, 0
    %p77 = por %p75, %p76
    %p78 = scmp.ne.s32.totalorder %s70, %s72
    %p79 = scmp.eq.s32.totalorder %s15, 1
    %p80 = por %p78, %p79
    %p81 = scmp.ne.s32.totalorder %s72, %s73
    %p82 = scmp.eq.s32.totalorder %s15, 0
    %p83 = por %p81, %p82
    %p84 = scmp.ne.s32.totalorder %s72, %s73
    %p85 = scmp.eq.s32.totalorder %s16, 1
    %p86 = por %p84, %p85
    %p88 = scmp.ne.s32.totalorder %s73, %s87
    %p89 = scmp.eq.s32.totalorder %s16, 0
    %p90 = por %p88, %p89
    %s92 = sadd.s32 %s91, 1
    %p95 = scmp.eq.s32.totalorder %s10, 1
    %p96 = scmp.ne.s32.totalorder %s91, %s93
    %p97 = scmp.eq.s32.totalorder %s10, 0
    %p98 = por %p96, %p97
    %p99 = scmp.ne.s32.totalorder %s91, %s93
    %p100 = scmp.eq.s32.totalorder %s15, 1
    %p101 = por %p99, %p100
    %p102 = scmp.ne.s32.totalorder %s93, %s94
    %p103 = scmp.eq.s32.totalorder %s15, 0
    %p104 = por %p102, %p103
    %p105 = scmp.ne.s32.totalorder %s93, %s94
    %p106 = scmp.eq.s32.totalorder %s16, 1
    %p107 = por %p105, %p106
    %p109 = scmp.ne.s32.totalorder %s94, %s108
    %p110 = scmp.eq.s32.totalorder %s16, 0
    %p111 = por %p109, %p110
    %s112 = ssub.s32 %s10, %s17
    %p113 = scmp.eq.s32.totalorder %s112, 0
    %s115 = sadd.s32 %s114, 1
    %s116 = scalar_select %p113, %s114, %s115
    %p119 = pneg %p113
    %p120 = scmp.eq.s32.totalorder %s10, 1
    %p121 = por %p119, %p120
    %p122 = scmp.ne.s32.totalorder %s114, %s117
    %p123 = scmp.eq.s32.totalorder %s10, 0
    %p124 = por %p122, %p123
    %p125 = scmp.ne.s32.totalorder %s114, %s117
    %p126 = scmp.eq.s32.totalorder %s15, 1
    %p127 = por %p125, %p126
    %p128 = scmp.ne.s32.totalorder %s117, %s118
    %p129 = scmp.eq.s32.totalorder %s15, 0
    %p130 = por %p128, %p129
    %p131 = scmp.ne.s32.totalorder %s117, %s118
    %p132 = scmp.eq.s32.totalorder %s16, 1
    %p133 = por %p131, %p132
    %p135 = scmp.ne.s32.totalorder %s118, %s134
    %p136 = scmp.eq.s32.totalorder %s16, 0
    %p137 = por %p135, %p136
    %p138 = scmp.le.s32.totalorder 1, %s10
    %p139 = scmp.lt.s32.totalorder %s10, 3
    %p140 = pnand %p138, %p139
    %p141 = pneg %p140
    // Predicated region
    $region9: #{deep_lstm_forward.9} parent=5 // pred_check
      _
    $region10: #{deep_lstm_forward.9} parent=5 // pred_check_branch
      %143 = sbr.rel (%p140) target = $region12
    $region11: #{deep_lstm_forward.9} parent=5 // pred_region
      %s144 = ssub.s32 %s10, 1
      // Predicated region
      $region13: #{deep_lstm_forward.9} parent=11 // pred_check
        %p145 = pneg %p83
      $region14: #{deep_lstm_forward.9} parent=11 // pred_check_branch
        %147 = sbr.rel (%p145) target = $region16
      $region15: #{deep_lstm_forward.9} parent=11 // pred_region
        _
      $region16: #{deep_lstm_forward.9} parent=11 // pred_fallthru
        _
      // Predicated region
      $region17: #{deep_lstm_forward.9} parent=11 // pred_check
        %p148 = pneg %p104
      $region18: #{deep_lstm_forward.9} parent=11 // pred_check_branch
        %150 = sbr.rel (%p148) target = $region20
      $region19: #{deep_lstm_forward.9} parent=11 // pred_region
        _
      $region20: #{deep_lstm_forward.9} parent=11 // pred_fallthru
        _
    $region12: #{deep_lstm_forward.9} parent=5 // pred_fallthru
      _
    %p151 = scmp.lt.s32.totalorder %s10, 2
    // Predicated region
    $region21: #{deep_lstm_forward.9} parent=5 // pred_check
      %p152 = pneg %p151
    $region22: #{deep_lstm_forward.9} parent=5 // pred_check_branch
      %154 = sbr.rel (%p152) target = $region24
    $region23: #{deep_lstm_forward.9} parent=5 // pred_region
      // Predicated region
      $region25: #{deep_lstm_forward.9} parent=23 // pred_check
        %p155 = pneg %p30
      $region26: #{deep_lstm_forward.9} parent=23 // pred_check_branch
        %157 = sbr.rel (%p155) target = $region28
      $region27: #{deep_lstm_forward.9} parent=23 // pred_region
        %p158 = scmp.lt.s32.totalorder %s10, 1
        %s159 = scalar_select %p158, %s10, 1
        %s160 = smul.addr %s159, 8
        %s161 = scalar_lea.vmem %s0, %s160
      $region28: #{deep_lstm_forward.9} parent=23 // pred_fallthru
        _
      // Predicated region
      $region29: #{deep_lstm_forward.9} parent=23 // pred_check
        %p162 = pneg %p56
      $region30: #{deep_lstm_forward.9} parent=23 // pred_check_branch
        %164 = sbr.rel (%p162) target = $region32
      $region31: #{deep_lstm_forward.9} parent=23 // pred_region
        %p165 = scmp.lt.s32.totalorder %s10, 1
        %s166 = scalar_select %p165, %s10, 1
        %s167 = smul.addr %s166, 8
        %s168 = scalar_lea.vmem %s1, %s167
      $region32: #{deep_lstm_forward.9} parent=23 // pred_fallthru
        _
    $region24: #{deep_lstm_forward.9} parent=5 // pred_fallthru
      _
    %p169 = scmp.le.s32.totalorder 1, %s10
    %p170 = scmp.lt.s32.totalorder %s10, 3
    %p171 = pnand %p169, %p170
    %p172 = pneg %p171
    // Predicated region
    $region33: #{deep_lstm_forward.9} parent=5 // pred_check
      _
    $region34: #{deep_lstm_forward.9} parent=5 // pred_check_branch
      %174 = sbr.rel (%p171) target = $region36
    $region35: #{deep_lstm_forward.9} parent=5 // pred_region
      %s175 = ssub.s32 %s10, 1
      %p176 = scmp.lt.s32.totalorder %s15, 1
      %s177 = scalar_select %p176, %s15, 1
      %s178 = smul.addr %s177, 8
      %s179 = scalar_lea.vmem %s0, %s178
      %p180 = pneg %p36
      %p181 = pneg %p33
      %p182 = scmp.lt.s32.totalorder %s15, 1
      %s183 = scalar_select %p182, %s15, 1
      %s184 = smul.addr %s183, 8
      %s185 = scalar_lea.vmem %s1, %s184
      %p186 = pneg %p62
      %p187 = pneg %p59
      %p188 = pneg %p83
      %p189 = pneg %p80
      %p190 = pneg %p104
      %p191 = pneg %p101
      %p192 = pneg %p130
      %p193 = pneg %p127
      %p194 = scmp.lt.s32.totalorder %s15, 1
      %s195 = scalar_select %p194, %s15, 1
      %s196 = smul.addr %s195, 8
      %s197 = scalar_lea.vmem %s4, %s196
      %p198 = scmp.lt.s32.totalorder %s15, 1
      %s199 = scalar_select %p198, %s15, 1
      %s200 = smul.addr %s199, 8
      %s201 = scalar_lea.vmem %s0, %s200
      %p202 = scmp.lt.s32.totalorder %s15, 1
      %s203 = scalar_select %p202, %s15, 1
      %s204 = smul.addr %s203, 8
      %s205 = scalar_lea.vmem %s1, %s204
      %p206 = scmp.lt.s32.totalorder %s15, 1
      %s207 = scalar_select %p206, %s15, 1
      %s208 = smul.addr %s207, 8
      %s209 = scalar_lea.vmem %s4, %s208
      %v210 = vld [vmem:[%s201] sm:$0xff]
      %v211 = vld [vmem:[%s205] sm:$0xff]
      %v212 = vadd.f32 %v210, %v211
      %v213 = vld [vmem:[%s2] sm:$0xff]
      %v214 = vld [vmem:[%s2 + $0x8] sm:$0xff]
      %v215 = vld [vmem:[%s2 + $0x10] sm:$0xff]
      %v216 = vld [vmem:[%s2 + $0x18] sm:$0xff]
      %v217 = vld [vmem:[%s3] sm:$0x1]
      %v219 = vlaneseq
      %v220 = vshrl.u32 %v219, 7
      %v221 = vsub.s32 0, %v220
      %v222 = vrot.slane %v217, %v221
      %vm224 = vcmask 261120
      %v226 = vsel %vm224, %v212, 0
      %228 = vmatprep.subr.mxu0 0.0
      %229 = vmatpush1.msra.mxu0 0.0
      %230 = vmatprep.subr.mxu0 0.0
      %231 = vmatpush1.msra.mxu0 0.0
      %232 = vmatprep.subr.mxu0 0.0
      %233 = vmatpush1.msra.mxu0 0.0
      %234 = vmatprep.subr.mxu0 0.0
      %235 = vmatpush1.msra.mxu0 0.0
      %236 = vmatprep.subr.mxu0 0.0
      %237 = vmatpush1.msra.mxu0 0.0
      %238 = vmatprep.subr.mxu0 0.0
      %239 = vmatpush1.msra.mxu0 0.0
      %240 = vmatprep.subr.mxu0 0.0
      %241 = vmatpush1.msra.mxu0 0.0
      %242 = vmatprep.subr.mxu0 0.0
      %243 = vmatpush1.msra.mxu0 0.0
      %244 = vmatprep.subr.mxu0 0.0
      %245 = vmatpush1.msra.mxu0 0.0
      %246 = vmatprep.subr.mxu0 0.0
      %247 = vmatpush1.msra.mxu0 0.0
      %248 = vmatprep.subr.mxu0 0.0
      %249 = vmatpush1.msra.mxu0 0.0
      %250 = vmatprep.subr.mxu0 0.0
      %251 = vmatpush1.msra.mxu0 0.0
      %252 = vmatprep.subr.mxu0 0.0
      %253 = vmatpush1.msra.mxu0 %v216
      %254 = vmatprep.subr.mxu0 0.0
      %255 = vmatpush1.msra.mxu0 %v215
      %256 = vmatprep.subr.mxu0 0.0
      %257 = vmatpush1.msra.mxu0 %v214
      %258 = vmatprep.subr.mxu0 0.0
      %259 = vmatpush1.msra.mxu0 %v213
      %260 = vmatprep.subr.mxu0 0.0
      %261 = vmatpush2.msra.mxu0 0.0
      %262 = vmatprep.subr.mxu0 0.0
      %263 = vmatpush2.msra.mxu0 0.0
      %264 = vmatprep.subr.mxu0 0.0
      %265 = vmatpush2.msra.mxu0 0.0
      %266 = vmatprep.subr.mxu0 0.0
      %267 = vmatpush2.msra.mxu0 0.0
      %268 = vmatprep.subr.mxu0 0.0
      %269 = vmatpush2.msra.mxu0 0.0
      %270 = vmatprep.subr.mxu0 0.0
      %271 = vmatpush2.msra.mxu0 0.0
      %272 = vmatprep.subr.mxu0 0.0
      %273 = vmatpush2.msra.mxu0 0.0
      %274 = vmatprep.subr.mxu0 0.0
      %275 = vmatpush2.msra.mxu0 0.0
      %276 = vmatprep.subr.mxu0 0.0
      %277 = vmatpush2.msra.mxu0 0.0
      %278 = vmatprep.subr.mxu0 0.0
      %279 = vmatpush2.msra.mxu0 0.0
      %280 = vmatprep.subr.mxu0 0.0
      %281 = vmatpush2.msra.mxu0 0.0
      %282 = vmatprep.subr.mxu0 0.0
      %283 = vmatpush2.msra.mxu0 0.0
      %284 = vmatprep.subr.mxu0 0.0
      %285 = vmatpush2.msra.mxu0 0.0
      %286 = vmatprep.subr.mxu0 0.0
      %287 = vmatpush2.msra.mxu0 0.0
      %288 = vmatprep.subr.mxu0 0.0
      %289 = vmatpush2.msra.mxu0 0.0
      %290 = vmatprep.subr.mxu0 0.0
      %291 = vmatpush2.msra.mxu0 0.0
      %292 = vmatprep.mubr.f32.mxu0 0.0
      %293 = vmatmul.mubr.f32.gmra.mxu0 %v226
      %v294 = vpop.f32.mrf.mxu0
      %v295 = vadd.f32 %v222, %v294
      %v296 = vpop.f32.mrf.mxu0
      %297 = vdwg.mxu0
      %298 = vst [vmem:[%s209] sm:$0xff] %v295
      %p299 = scmp.lt.s32.totalorder %s15, 1
      %s300 = scalar_select %p299, %s15, 1
      %s301 = smul.addr %s300, 8
      %s302 = scalar_lea.vmem %s4, %s301
      // Predicated region
      $region37: #{deep_lstm_forward.9} parent=35 // pred_check
        %p303 = pneg %p127
      $region38: #{deep_lstm_forward.9} parent=35 // pred_check_branch
        %305 = sbr.rel (%p303) target = $region40
      $region39: #{deep_lstm_forward.9} parent=35 // pred_region
        _
      $region40: #{deep_lstm_forward.9} parent=35 // pred_fallthru
        _
    $region36: #{deep_lstm_forward.9} parent=5 // pred_fallthru
      _
    %p306 = scmp.le.s32.totalorder 2, %s10
    // Predicated region
    $region41: #{deep_lstm_forward.9} parent=5 // pred_check
      %p307 = pneg %p306
    $region42: #{deep_lstm_forward.9} parent=5 // pred_check_branch
      %309 = sbr.rel (%p307) target = $region44
    $region43: #{deep_lstm_forward.9} parent=5 // pred_region
      %s310 = ssub.s32 %s10, 2
      // Predicated region
      $region45: #{deep_lstm_forward.9} parent=43 // pred_check
        %p311 = pneg %p133
      $region46: #{deep_lstm_forward.9} parent=43 // pred_check_branch
        %313 = sbr.rel (%p311) target = $region48
      $region47: #{deep_lstm_forward.9} parent=43 // pred_region
        %p314 = scmp.lt.s32.totalorder %s16, 1
        %s315 = scalar_select %p314, %s16, 1
        %s316 = smul.addr %s315, 8
        %s317 = scalar_lea.vmem %s4, %s316
      $region48: #{deep_lstm_forward.9} parent=43 // pred_fallthru
        _
    $region44: #{deep_lstm_forward.9} parent=5 // pred_fallthru
      _
  $region6: #{deep_lstm_forward.9} parent=0 // loop_footer
    %s14 = sadd.s32 1, %s10
  $region7: #{deep_lstm_forward.9} parent=0 // loop_footer_branch
    %9 = sbr.rel target = $region3
  $region8: #{deep_lstm_forward.9} parent=0 // loop_exit
    _

// kernel: deep_lstm_forward.8
$region0: #{deep_lstm_forward.8}
  #allocation0 [shape = 'u32[]', space=smem, size = 0x4, offset = 0x4, fixed_abs, tag = 'smem constant byte address 0x4 - core index']
  #allocation1 [shape = 'u32[144,128]{1,0:T(1,128)}', space=vmem, size = 0x12000, scoped, tag = 'internal scratch']
  #allocation2 [shape = 'f32[2,32]{1,0:T(2,128)}', space=vmem, size = 0x400, scoped, tag = 'scratch operand']
  #allocation3 [shape = 'f32[2,32]{1,0:T(2,128)}', space=vmem, size = 0x400, scoped, tag = 'scratch operand']
  #allocation4 [shape = 'f32[2,32]{1,0:T(2,128)}', space=vmem, size = 0x400, scoped, tag = 'scratch operand']
  #allocation5 [shape = 'f32[2,32]{1,0:T(2,128)}', space=vmem, size = 0x400, scoped, tag = 'scratch operand']
  %s0 = inlined_call_operand.vmem [shape: f32[8,2,128], index: 0, kind: input, shape index: {}]
  %s1 = inlined_call_operand.vmem [shape: f32[8,2,128], index: 1, kind: input, shape index: {}]
  %s2 = inlined_call_operand.vmem [shape: f32[32,128], index: 2, kind: input, shape index: {}]
  %s3 = inlined_call_operand.vmem [shape: f32[32,128], index: 3, kind: input, shape index: {}]
  %s4 = inlined_call_operand.vmem [shape: f32[8,2,32], index: 4, kind: output, shape index: {0}]
  %s5 = inlined_call_operand.vmem [shape: f32[8,2,32], index: 5, kind: output, shape index: {1}]
  %6 = xla_tuple %s4, %s5
  %s7 = sld [smem:[#allocation0]]
  $region61: #{deep_lstm_forward.8} parent=0
    _
  %s9 = ssub.s32 1, %s7
  %s10 = scalar_select 0, %s9, %s7
  loop: start=0, step=1, limit=4
  $region2: #{deep_lstm_forward.8} parent=0 // loop_pre_header
    _
  $region3: #{deep_lstm_forward.8} parent=0 // loop_header
    %s12 = sphi 0, %s16
    %p13 = scmp.ge.s32.totalorder %s12, 4
    %s22 = sphi 0, %s24
    %s25 = sphi 0, %s22
    %s26 = sphi 0, %s25
    %s42 = sphi 0, %s26
    %s50 = sphi 0, %s52
    %s53 = sphi 0, %s50
    %s54 = sphi 0, %s53
    %s70 = sphi 0, %s54
    %s74 = sphi 0, %s74
    %s76 = sphi 0, %s74
    %s77 = sphi 0, %s76
    %s91 = sphi 0, %s77
    %s95 = sphi 0, %s95
    %s97 = sphi 0, %s95
    %s98 = sphi 0, %s97
    %s112 = sphi 0, %s98
    %s118 = sphi 0, %s120
    %s121 = sphi 0, %s118
    %s122 = sphi 0, %s121
    %s138 = sphi 0, %s122
    %s146 = sphi 0, %s148
    %s149 = sphi 0, %s146
    %s150 = sphi 0, %s149
    %s166 = sphi 0, %s150
  $region4: #{deep_lstm_forward.8} parent=0 // loop_header_branch
    %15 = sbr.rel (%p13) target = $region8
  $region5: #{deep_lstm_forward.8} parent=0 // loop_body
    %s17 = ssub.s32 %s12, 1
    %s18 = ssub.s32 %s12, 2
    %s19 = sadd.s32 %s12, 1
    %s20 = ssub.s32 %s12, %s19
    %p21 = scmp.eq.s32.totalorder %s20, 0
    %s23 = sadd.s32 %s22, 1
    %s24 = scalar_select %p21, %s22, %s23
    %p27 = pneg %p21
    %p28 = scmp.eq.s32.totalorder %s12, 1
    %p29 = por %p27, %p28
    %p30 = scmp.ne.s32.totalorder %s22, %s25
    %p31 = scmp.eq.s32.totalorder %s12, 0
    %p32 = por %p30, %p31
    %p33 = scmp.ne.s32.totalorder %s22, %s25
    %p34 = scmp.eq.s32.totalorder %s17, 1
    %p35 = por %p33, %p34
    %p36 = scmp.ne.s32.totalorder %s25, %s26
    %p37 = scmp.eq.s32.totalorder %s17, 0
    %p38 = por %p36, %p37
    %p39 = scmp.ne.s32.totalorder %s25, %s26
    %p40 = scmp.eq.s32.totalorder %s18, 1
    %p41 = por %p39, %p40
    %p43 = scmp.ne.s32.totalorder %s26, %s42
    %p44 = scmp.eq.s32.totalorder %s18, 0
    %p45 = por %p43, %p44
    %s46 = ssub.s32 1, %s12
    %s47 = ssub.s32 1, %s19
    %s48 = ssub.s32 %s46, %s47
    %p49 = scmp.eq.s32.totalorder %s48, 0
    %s51 = sadd.s32 %s50, 1
    %s52 = scalar_select %p49, %s50, %s51
    %p55 = pneg %p49
    %p56 = scmp.eq.s32.totalorder %s12, 1
    %p57 = por %p55, %p56
    %p58 = scmp.ne.s32.totalorder %s50, %s53
    %p59 = scmp.eq.s32.totalorder %s12, 0
    %p60 = por %p58, %p59
    %p61 = scmp.ne.s32.totalorder %s50, %s53
    %p62 = scmp.eq.s32.totalorder %s17, 1
    %p63 = por %p61, %p62
    %p64 = scmp.ne.s32.totalorder %s53, %s54
    %p65 = scmp.eq.s32.totalorder %s17, 0
    %p66 = por %p64, %p65
    %p67 = scmp.ne.s32.totalorder %s53, %s54
    %p68 = scmp.eq.s32.totalorder %s18, 1
    %p69 = por %p67, %p68
    %p71 = scmp.ne.s32.totalorder %s54, %s70
    %p72 = scmp.eq.s32.totalorder %s18, 0
    %p73 = por %p71, %p72
    %s75 = sadd.s32 %s74, 1
    %p78 = scmp.eq.s32.totalorder %s12, 1
    %p79 = scmp.ne.s32.totalorder %s74, %s76
    %p80 = scmp.eq.s32.totalorder %s12, 0
    %p81 = por %p79, %p80
    %p82 = scmp.ne.s32.totalorder %s74, %s76
    %p83 = scmp.eq.s32.totalorder %s17, 1
    %p84 = por %p82, %p83
    %p85 = scmp.ne.s32.totalorder %s76, %s77
    %p86 = scmp.eq.s32.totalorder %s17, 0
    %p87 = por %p85, %p86
    %p88 = scmp.ne.s32.totalorder %s76, %s77
    %p89 = scmp.eq.s32.totalorder %s18, 1
    %p90 = por %p88, %p89
    %p92 = scmp.ne.s32.totalorder %s77, %s91
    %p93 = scmp.eq.s32.totalorder %s18, 0
    %p94 = por %p92, %p93
    %s96 = sadd.s32 %s95, 1
    %p99 = scmp.eq.s32.totalorder %s12, 1
    %p100 = scmp.ne.s32.totalorder %s95, %s97
    %p101 = scmp.eq.s32.totalorder %s12, 0
    %p102 = por %p100, %p101
    %p103 = scmp.ne.s32.totalorder %s95, %s97
    %p104 = scmp.eq.s32.totalorder %s17, 1
    %p105 = por %p103, %p104
    %p106 = scmp.ne.s32.totalorder %s97, %s98
    %p107 = scmp.eq.s32.totalorder %s17, 0
    %p108 = por %p106, %p107
    %p109 = scmp.ne.s32.totalorder %s97, %s98
    %p110 = scmp.eq.s32.totalorder %s18, 1
    %p111 = por %p109, %p110
    %p113 = scmp.ne.s32.totalorder %s98, %s112
    %p114 = scmp.eq.s32.totalorder %s18, 0
    %p115 = por %p113, %p114
    %s116 = ssub.s32 %s12, %s19
    %p117 = scmp.eq.s32.totalorder %s116, 0
    %s119 = sadd.s32 %s118, 1
    %s120 = scalar_select %p117, %s118, %s119
    %p123 = pneg %p117
    %p124 = scmp.eq.s32.totalorder %s12, 1
    %p125 = por %p123, %p124
    %p126 = scmp.ne.s32.totalorder %s118, %s121
    %p127 = scmp.eq.s32.totalorder %s12, 0
    %p128 = por %p126, %p127
    %p129 = scmp.ne.s32.totalorder %s118, %s121
    %p130 = scmp.eq.s32.totalorder %s17, 1
    %p131 = por %p129, %p130
    %p132 = scmp.ne.s32.totalorder %s121, %s122
    %p133 = scmp.eq.s32.totalorder %s17, 0
    %p134 = por %p132, %p133
    %p135 = scmp.ne.s32.totalorder %s121, %s122
    %p136 = scmp.eq.s32.totalorder %s18, 1
    %p137 = por %p135, %p136
    %p139 = scmp.ne.s32.totalorder %s122, %s138
    %p140 = scmp.eq.s32.totalorder %s18, 0
    %p141 = por %p139, %p140
    %s142 = ssub.s32 1, %s12
    %s143 = ssub.s32 1, %s19
    %s144 = ssub.s32 %s142, %s143
    %p145 = scmp.eq.s32.totalorder %s144, 0
    %s147 = sadd.s32 %s146, 1
    %s148 = scalar_select %p145, %s146, %s147
    %p151 = pneg %p145
    %p152 = scmp.eq.s32.totalorder %s12, 1
    %p153 = por %p151, %p152
    %p154 = scmp.ne.s32.totalorder %s146, %s149
    %p155 = scmp.eq.s32.totalorder %s12, 0
    %p156 = por %p154, %p155
    %p157 = scmp.ne.s32.totalorder %s146, %s149
    %p158 = scmp.eq.s32.totalorder %s17, 1
    %p159 = por %p157, %p158
    %p160 = scmp.ne.s32.totalorder %s149, %s150
    %p161 = scmp.eq.s32.totalorder %s17, 0
    %p162 = por %p160, %p161
    %p163 = scmp.ne.s32.totalorder %s149, %s150
    %p164 = scmp.eq.s32.totalorder %s18, 1
    %p165 = por %p163, %p164
    %p167 = scmp.ne.s32.totalorder %s150, %s166
    %p168 = scmp.eq.s32.totalorder %s18, 0
    %p169 = por %p167, %p168
    %p170 = scmp.le.s32.totalorder 1, %s12
    %p171 = scmp.lt.s32.totalorder %s12, 3
    %p172 = pnand %p170, %p171
    %p173 = pneg %p172
    // Predicated region
    $region9: #{deep_lstm_forward.8} parent=5 // pred_check
      _
    $region10: #{deep_lstm_forward.8} parent=5 // pred_check_branch
      %175 = sbr.rel (%p172) target = $region12
    $region11: #{deep_lstm_forward.8} parent=5 // pred_region
      %s176 = ssub.s32 %s12, 1
      // Predicated region
      $region13: #{deep_lstm_forward.8} parent=11 // pred_check
        %p177 = pneg %p87
      $region14: #{deep_lstm_forward.8} parent=11 // pred_check_branch
        %179 = sbr.rel (%p177) target = $region16
      $region15: #{deep_lstm_forward.8} parent=11 // pred_region
        _
      $region16: #{deep_lstm_forward.8} parent=11 // pred_fallthru
        _
      // Predicated region
      $region17: #{deep_lstm_forward.8} parent=11 // pred_check
        %p180 = pneg %p108
      $region18: #{deep_lstm_forward.8} parent=11 // pred_check_branch
        %182 = sbr.rel (%p180) target = $region20
      $region19: #{deep_lstm_forward.8} parent=11 // pred_region
        _
      $region20: #{deep_lstm_forward.8} parent=11 // pred_fallthru
        _
    $region12: #{deep_lstm_forward.8} parent=5 // pred_fallthru
      _
    %p183 = scmp.lt.s32.totalorder %s12, 2
    // Predicated region
    $region21: #{deep_lstm_forward.8} parent=5 // pred_check
      %p184 = pneg %p183
    $region22: #{deep_lstm_forward.8} parent=5 // pred_check_branch
      %186 = sbr.rel (%p184) target = $region24
    $region23: #{deep_lstm_forward.8} parent=5 // pred_region
      // Predicated region
      $region25: #{deep_lstm_forward.8} parent=23 // pred_check
        %p187 = pneg %p32
      $region26: #{deep_lstm_forward.8} parent=23 // pred_check_branch
        %189 = sbr.rel (%p187) target = $region28
      $region27: #{deep_lstm_forward.8} parent=23 // pred_region
        %s190 = smul.u32 4, %s12
        %p191 = scmp.lt.s32.totalorder %s190, 7
        %s192 = scalar_select %p191, %s190, 7
        %s193 = smul.addr %s192, 2
        %s194 = scalar_lea.vmem %s0, %s193
        %s195 = smul.u32 4, %s12
      $region28: #{deep_lstm_forward.8} parent=23 // pred_fallthru
        _
      // Predicated region
      $region29: #{deep_lstm_forward.8} parent=23 // pred_check
        %p196 = pneg %p60
      $region30: #{deep_lstm_forward.8} parent=23 // pred_check_branch
        %198 = sbr.rel (%p196) target = $region32
      $region31: #{deep_lstm_forward.8} parent=23 // pred_region
        %s199 = ssub.s32 1, %s12
        %s200 = smul.u32 4, %s199
        %p201 = scmp.lt.s32.totalorder %s200, 7
        %s202 = scalar_select %p201, %s200, 7
        %s203 = smul.addr %s202, 2
        %s204 = scalar_lea.vmem %s1, %s203
        %s205 = ssub.s32 1, %s12
        %s206 = smul.u32 4, %s205
      $region32: #{deep_lstm_forward.8} parent=23 // pred_fallthru
        _
    $region24: #{deep_lstm_forward.8} parent=5 // pred_fallthru
      _
    %p207 = scmp.le.s32.totalorder 1, %s12
    %p208 = scmp.lt.s32.totalorder %s12, 3
    %p209 = pnand %p207, %p208
    %p210 = pneg %p209
    // Predicated region
    $region33: #{deep_lstm_forward.8} parent=5 // pred_check
      _
    $region34: #{deep_lstm_forward.8} parent=5 // pred_check_branch
      %212 = sbr.rel (%p209) target = $region36
    $region35: #{deep_lstm_forward.8} parent=5 // pred_region
      %s213 = ssub.s32 %s12, 1
      %s214 = smul.u32 4, %s17
      %p215 = scmp.lt.s32.totalorder %s214, 7
      %s216 = scalar_select %p215, %s214, 7
      %s217 = smul.addr %s216, 2
      %s218 = scalar_lea.vmem %s0, %s217
      %p219 = pneg %p38
      %p220 = pneg %p35
      %s221 = ssub.s32 1, %s17
      %s222 = smul.u32 4, %s221
      %p223 = scmp.lt.s32.totalorder %s222, 7
      %s224 = scalar_select %p223, %s222, 7
      %s225 = smul.addr %s224, 2
      %s226 = scalar_lea.vmem %s1, %s225
      %p227 = pneg %p66
      %p228 = pneg %p63
      %p229 = pneg %p87
      %p230 = pneg %p84
      %p231 = pneg %p108
      %p232 = pneg %p105
      %p233 = pneg %p134
      %p234 = pneg %p131
      %s235 = smul.u32 4, %s17
      %p236 = scmp.lt.s32.totalorder %s235, 7
      %s237 = scalar_select %p236, %s235, 7
      %s238 = smul.addr %s237, 2
      %s239 = scalar_lea.vmem %s4, %s238
      %p240 = pneg %p162
      %p241 = pneg %p159
      %s242 = ssub.s32 1, %s17
      %s243 = smul.u32 4, %s242
      %p244 = scmp.lt.s32.totalorder %s243, 7
      %s245 = scalar_select %p244, %s243, 7
      %s246 = smul.addr %s245, 2
      %s247 = scalar_lea.vmem %s5, %s246
      %s248 = smul.u32 4, %s17
      %p249 = scmp.lt.s32.totalorder %s248, 7
      %s250 = scalar_select %p249, %s248, 7
      %s251 = smul.addr %s250, 2
      %s252 = scalar_lea.vmem %s0, %s251
      %s253 = smul.u32 4, %s17
      %s254 = ssub.s32 1, %s17
      %s255 = smul.u32 4, %s254
      %p256 = scmp.lt.s32.totalorder %s255, 7
      %s257 = scalar_select %p256, %s255, 7
      %s258 = smul.addr %s257, 2
      %s259 = scalar_lea.vmem %s1, %s258
      %s260 = ssub.s32 1, %s17
      %s261 = smul.u32 4, %s260
      %s262 = smul.u32 4, %s17
      %p263 = scmp.lt.s32.totalorder %s262, 7
      %s264 = scalar_select %p263, %s262, 7
      %s265 = smul.addr %s264, 2
      %s266 = scalar_lea.vmem %s4, %s265
      %s267 = smul.u32 4, %s17
      %s268 = ssub.s32 1, %s17
      %s269 = smul.u32 4, %s268
      %p270 = scmp.lt.s32.totalorder %s269, 7
      %s271 = scalar_select %p270, %s269, 7
      %s272 = smul.addr %s271, 2
      %s273 = scalar_lea.vmem %s5, %s272
      %s274 = ssub.s32 1, %s17
      %s275 = smul.u32 4, %s274
      %p276 = scmp.eq.s32.totalorder %s17, 0
      // Predicated region
      $region37: #{deep_lstm_forward.8} parent=35 // pred_check
        %p277 = pneg %p276
      $region38: #{deep_lstm_forward.8} parent=35 // pred_check_branch
        %279 = sbr.rel (%p277) target = $region40
      $region39: #{deep_lstm_forward.8} parent=35 // pred_region
        %vm280 = vcmask 254976
        %281 = vst.msk [vmem:[#allocation2] sm:$0x3] %vm280, 0.0
        %282 = vst.msk [vmem:[#allocation3] sm:$0x3] %vm280, 0.0
        %283 = vst.msk [vmem:[#allocation4] sm:$0x3] %vm280, 0.0
        %284 = vst.msk [vmem:[#allocation5] sm:$0x3] %vm280, 0.0
      $region40: #{deep_lstm_forward.8} parent=35 // pred_fallthru
        _
      %v285 = vld [vmem:[%s252] sm:$0x3]
      %v286 = vld [vmem:[#allocation2] sm:$0x3]
      %v287 = vld [vmem:[#allocation3] sm:$0x3]
      %v288 = vld [vmem:[%s2] sm:$0xff]
      %v289 = vld [vmem:[%s2 + $0x8] sm:$0xff]
      %v290 = vld [vmem:[%s2 + $0x10] sm:$0xff]
      %v291 = vld [vmem:[%s2 + $0x18] sm:$0xff]
      %vm292 = vcmask 261120
      %v294 = vsel %vm292, %v286, 0
      %296 = vmatprep.subr.mxu0 0.0
      %297 = vmatpush1.msra.mxu0 0.0
      %298 = vmatprep.subr.mxu0 0.0
      %299 = vmatpush1.msra.mxu0 0.0
      %300 = vmatprep.subr.mxu0 0.0
      %301 = vmatpush1.msra.mxu0 0.0
      %302 = vmatprep.subr.mxu0 0.0
      %303 = vmatpush1.msra.mxu0 0.0
      %304 = vmatprep.subr.mxu0 0.0
      %305 = vmatpush1.msra.mxu0 0.0
      %306 = vmatprep.subr.mxu0 0.0
      %307 = vmatpush1.msra.mxu0 0.0
      %308 = vmatprep.subr.mxu0 0.0
      %309 = vmatpush1.msra.mxu0 0.0
      %310 = vmatprep.subr.mxu0 0.0
      %311 = vmatpush1.msra.mxu0 0.0
      %312 = vmatprep.subr.mxu0 0.0
      %313 = vmatpush1.msra.mxu0 0.0
      %314 = vmatprep.subr.mxu0 0.0
      %315 = vmatpush1.msra.mxu0 0.0
      %316 = vmatprep.subr.mxu0 0.0
      %317 = vmatpush1.msra.mxu0 0.0
      %318 = vmatprep.subr.mxu0 0.0
      %319 = vmatpush1.msra.mxu0 0.0
      %320 = vmatprep.subr.mxu0 0.0
      %321 = vmatpush1.msra.mxu0 %v291
      %322 = vmatprep.subr.mxu0 0.0
      %323 = vmatpush1.msra.mxu0 %v290
      %324 = vmatprep.subr.mxu0 0.0
      %325 = vmatpush1.msra.mxu0 %v289
      %326 = vmatprep.subr.mxu0 0.0
      %327 = vmatpush1.msra.mxu0 %v288
      %328 = vmatprep.subr.mxu0 0.0
      %329 = vmatpush2.msra.mxu0 0.0
      %330 = vmatprep.subr.mxu0 0.0
      %331 = vmatpush2.msra.mxu0 0.0
      %332 = vmatprep.subr.mxu0 0.0
      %333 = vmatpush2.msra.mxu0 0.0
      %334 = vmatprep.subr.mxu0 0.0
      %335 = vmatpush2.msra.mxu0 0.0
      %336 = vmatprep.subr.mxu0 0.0
      %337 = vmatpush2.msra.mxu0 0.0
      %338 = vmatprep.subr.mxu0 0.0
      %339 = vmatpush2.msra.mxu0 0.0
      %340 = vmatprep.subr.mxu0 0.0
      %341 = vmatpush2.msra.mxu0 0.0
      %342 = vmatprep.subr.mxu0 0.0
      %343 = vmatpush2.msra.mxu0 0.0
      %344 = vmatprep.subr.mxu0 0.0
      %345 = vmatpush2.msra.mxu0 0.0
      %346 = vmatprep.subr.mxu0 0.0
      %347 = vmatpush2.msra.mxu0 0.0
      %348 = vmatprep.subr.mxu0 0.0
      %349 = vmatpush2.msra.mxu0 0.0
      %350 = vmatprep.subr.mxu0 0.0
      %351 = vmatpush2.msra.mxu0 0.0
      %352 = vmatprep.subr.mxu0 0.0
      %353 = vmatpush2.msra.mxu0 0.0
      %354 = vmatprep.subr.mxu0 0.0
      %355 = vmatpush2.msra.mxu0 0.0
      %356 = vmatprep.subr.mxu0 0.0
      %357 = vmatpush2.msra.mxu0 0.0
      %358 = vmatprep.subr.mxu0 0.0
      %359 = vmatpush2.msra.mxu0 0.0
      %360 = vmatprep.mubr.f32.mxu0 0.0
      %361 = vmatmul.mubr.f32.gmra.mxu0 %v294
      %v362 = vpop.f32.mrf.mxu0
      %v363 = vadd.f32 0.0, %v362
      %v364 = vpop.f32.mrf.mxu0
      %365 = vdwg.mxu0
      %v366 = vadd.f32 %v285, %v363
      %v367 = vxor.u32 %v366, 2147483648
      %v368 = vmul.f32 %v367, 1.442695
      %v369 = vpow.pop %v368
      %v370 = vadd.f32 %v369, 1.0
      %v371 = vrcp.pop %v370
      %v372 = vmul.f32 1.0, %v371
      %v373 = vtanh.pop %v366
      %375 = vrot.lane.b32.xlu0 %v287, 32
      %v376 = vpop.permute.xlu0 %375
      %v378 = vmul.f32 %v372, %v376
      %380 = vrot.lane.b32.xlu0 %v373, 64
      %v381 = vpop.permute.xlu0 %380
      %v383 = vmul.f32 %v372, %v381
      %385 = vrot.lane.b32.xlu0 %v383, 32
      %v386 = vpop.permute.xlu0 %385
      %v388 = vadd.f32 %v378, %v386
      %v389 = vtanh.pop %v388
      %391 = vrot.lane.b32.xlu0 %v389, 64
      %v392 = vpop.permute.xlu0 %391
      %v394 = vmul.f32 %v372, %v392
      %396 = vrot.lane.b32.xlu0 %v394, 32
      %v397 = vpop.permute.xlu0 %396
      %vm399 = vcmask 254976
      %400 = vst.msk [vmem:[#allocation2] sm:$0x3] %vm399, %v397
      %402 = vrot.lane.b32.xlu0 %v388, 96
      %v403 = vpop.permute.xlu0 %402
      %405 = vst.msk [vmem:[#allocation3] sm:$0x3] %vm399, %v403
      %406 = vst.msk [vmem:[%s266] sm:$0x3] %vm399, %v397
      %s407 = scalar_lea.vmem %s259, 6
      %v408 = vld [vmem:[%s407] sm:$0x3]
      %v409 = vld [vmem:[#allocation4] sm:$0x3]
      %v410 = vld [vmem:[#allocation5] sm:$0x3]
      %v411 = vld [vmem:[%s3] sm:$0xff]
      %v412 = vld [vmem:[%s3 + $0x8] sm:$0xff]
      %v413 = vld [vmem:[%s3 + $0x10] sm:$0xff]
      %v414 = vld [vmem:[%s3 + $0x18] sm:$0xff]
      %v416 = vsel %vm292, %v409, 0
      %418 = vmatprep.subr.mxu0 0.0
      %419 = vmatpush1.msra.mxu0 0.0
      %420 = vmatprep.subr.mxu0 0.0
      %421 = vmatpush1.msra.mxu0 0.0
      %422 = vmatprep.subr.mxu0 0.0
      %423 = vmatpush1.msra.mxu0 0.0
      %424 = vmatprep.subr.mxu0 0.0
      %425 = vmatpush1.msra.mxu0 0.0
      %426 = vmatprep.subr.mxu0 0.0
      %427 = vmatpush1.msra.mxu0 0.0
      %428 = vmatprep.subr.mxu0 0.0
      %429 = vmatpush1.msra.mxu0 0.0
      %430 = vmatprep.subr.mxu0 0.0
      %431 = vmatpush1.msra.mxu0 0.0
      %432 = vmatprep.subr.mxu0 0.0
      %433 = vmatpush1.msra.mxu0 0.0
      %434 = vmatprep.subr.mxu0 0.0
      %435 = vmatpush1.msra.mxu0 0.0
      %436 = vmatprep.subr.mxu0 0.0
      %437 = vmatpush1.msra.mxu0 0.0
      %438 = vmatprep.subr.mxu0 0.0
      %439 = vmatpush1.msra.mxu0 0.0
      %440 = vmatprep.subr.mxu0 0.0
      %441 = vmatpush1.msra.mxu0 0.0
      %442 = vmatprep.subr.mxu0 0.0
      %443 = vmatpush1.msra.mxu0 %v414
      %444 = vmatprep.subr.mxu0 0.0
      %445 = vmatpush1.msra.mxu0 %v413
      %446 = vmatprep.subr.mxu0 0.0
      %447 = vmatpush1.msra.mxu0 %v412
      %448 = vmatprep.subr.mxu0 0.0
      %449 = vmatpush1.msra.mxu0 %v411
      %450 = vmatprep.subr.mxu0 0.0
      %451 = vmatpush2.msra.mxu0 0.0
      %452 = vmatprep.subr.mxu0 0.0
      %453 = vmatpush2.msra.mxu0 0.0
      %454 = vmatprep.subr.mxu0 0.0
      %455 = vmatpush2.msra.mxu0 0.0
      %456 = vmatprep.subr.mxu0 0.0
      %457 = vmatpush2.msra.mxu0 0.0
      %458 = vmatprep.subr.mxu0 0.0
      %459 = vmatpush2.msra.mxu0 0.0
      %460 = vmatprep.subr.mxu0 0.0
      %461 = vmatpush2.msra.mxu0 0.0
      %462 = vmatprep.subr.mxu0 0.0
      %463 = vmatpush2.msra.mxu0 0.0
      %464 = vmatprep.subr.mxu0 0.0
      %465 = vmatpush2.msra.mxu0 0.0
      %466 = vmatprep.subr.mxu0 0.0
      %467 = vmatpush2.msra.mxu0 0.0
      %468 = vmatprep.subr.mxu0 0.0
      %469 = vmatpush2.msra.mxu0 0.0
      %470 = vmatprep.subr.mxu0 0.0
      %471 = vmatpush2.msra.mxu0 0.0
      %472 = vmatprep.subr.mxu0 0.0
      %473 = vmatpush2.msra.mxu0 0.0
      %474 = vmatprep.subr.mxu0 0.0
      %475 = vmatpush2.msra.mxu0 0.0
      %476 = vmatprep.subr.mxu0 0.0
      %477 = vmatpush2.msra.mxu0 0.0
      %478 = vmatprep.subr.mxu0 0.0
      %479 = vmatpush2.msra.mxu0 0.0
      %480 = vmatprep.subr.mxu0 0.0
      %481 = vmatpush2.msra.mxu0 0.0
      %482 = vmatprep.mubr.f32.mxu0 0.0
      %483 = vmatmul.mubr.f32.gmra.mxu0 %v416
      %v484 = vpop.f32.mrf.mxu0
      %v485 = vadd.f32 0.0, %v484
      %v486 = vpop.f32.mrf.mxu0
      %487 = vdwg.mxu0
      %v488 = vadd.f32 %v408, %v485
      %v489 = vxor.u32 %v488, 2147483648
      %v490 = vmul.f32 %v489, 1.442695
      %v491 = vpow.pop %v490
      %v492 = vadd.f32 %v491, 1.0
      %v493 = vrcp.pop %v492
      %v494 = vmul.f32 1.0, %v493
      %v495 = vtanh.pop %v488
      %497 = vrot.lane.b32.xlu0 %v410, 32
      %v498 = vpop.permute.xlu0 %497
      %v500 = vmul.f32 %v494, %v498
      %502 = vrot.lane.b32.xlu0 %v495, 64
      %v503 = vpop.permute.xlu0 %502
      %v505 = vmul.f32 %v494, %v503
      %507 = vrot.lane.b32.xlu0 %v505, 32
      %v508 = vpop.permute.xlu0 %507
      %v510 = vadd.f32 %v500, %v508
      %v511 = vtanh.pop %v510
      %513 = vrot.lane.b32.xlu0 %v511, 64
      %v514 = vpop.permute.xlu0 %513
      %v516 = vmul.f32 %v494, %v514
      %518 = vrot.lane.b32.xlu0 %v516, 32
      %v519 = vpop.permute.xlu0 %518
      %521 = vst.msk [vmem:[#allocation4] sm:$0x3] %vm399, %v519
      %523 = vrot.lane.b32.xlu0 %v510, 96
      %v524 = vpop.permute.xlu0 %523
      %526 = vst.msk [vmem:[#allocation5] sm:$0x3] %vm399, %v524
      %s527 = scalar_lea.vmem %s273, 6
      %528 = vst.msk [vmem:[%s527] sm:$0x3] %vm399, %v519
      %s529 = scalar_lea.vmem %s252, 2
      %v530 = vld [vmem:[%s529] sm:$0x3]
      %v531 = vld [vmem:[#allocation2] sm:$0x3]
      %v532 = vld [vmem:[#allocation3] sm:$0x3]
      %v533 = vld [vmem:[%s2] sm:$0xff]
      %v534 = vld [vmem:[%s2 + $0x8] sm:$0xff]
      %v535 = vld [vmem:[%s2 + $0x10] sm:$0xff]
      %v536 = vld [vmem:[%s2 + $0x18] sm:$0xff]
      %v538 = vsel %vm292, %v531, 0
      %540 = vmatprep.subr.mxu0 0.0
      %541 = vmatpush1.msra.mxu0 0.0
      %542 = vmatprep.subr.mxu0 0.0
      %543 = vmatpush1.msra.mxu0 0.0
      %544 = vmatprep.subr.mxu0 0.0
      %545 = vmatpush1.msra.mxu0 0.0
      %546 = vmatprep.subr.mxu0 0.0
      %547 = vmatpush1.msra.mxu0 0.0
      %548 = vmatprep.subr.mxu0 0.0
      %549 = vmatpush1.msra.mxu0 0.0
      %550 = vmatprep.subr.mxu0 0.0
      %551 = vmatpush1.msra.mxu0 0.0
      %552 = vmatprep.subr.mxu0 0.0
      %553 = vmatpush1.msra.mxu0 0.0
      %554 = vmatprep.subr.mxu0 0.0
      %555 = vmatpush1.msra.mxu0 0.0
      %556 = vmatprep.subr.mxu0 0.0
      %557 = vmatpush1.msra.mxu0 0.0
      %558 = vmatprep.subr.mxu0 0.0
      %559 = vmatpush1.msra.mxu0 0.0
      %560 = vmatprep.subr.mxu0 0.0
      %561 = vmatpush1.msra.mxu0 0.0
      %562 = vmatprep.subr.mxu0 0.0
      %563 = vmatpush1.msra.mxu0 0.0
      %564 = vmatprep.subr.mxu0 0.0
      %565 = vmatpush1.msra.mxu0 %v536
      %566 = vmatprep.subr.mxu0 0.0
      %567 = vmatpush1.msra.mxu0 %v535
      %568 = vmatprep.subr.mxu0 0.0
      %569 = vmatpush1.msra.mxu0 %v534
      %570 = vmatprep.subr.mxu0 0.0
      %571 = vmatpush1.msra.mxu0 %v533
      %572 = vmatprep.subr.mxu0 0.0
      %573 = vmatpush2.msra.mxu0 0.0
      %574 = vmatprep.subr.mxu0 0.0
      %575 = vmatpush2.msra.mxu0 0.0
      %576 = vmatprep.subr.mxu0 0.0
      %577 = vmatpush2.msra.mxu0 0.0
      %578 = vmatprep.subr.mxu0 0.0
      %579 = vmatpush2.msra.mxu0 0.0
      %580 = vmatprep.subr.mxu0 0.0
      %581 = vmatpush2.msra.mxu0 0.0
      %582 = vmatprep.subr.mxu0 0.0
      %583 = vmatpush2.msra.mxu0 0.0
      %584 = vmatprep.subr.mxu0 0.0
      %585 = vmatpush2.msra.mxu0 0.0
      %586 = vmatprep.subr.mxu0 0.0
      %587 = vmatpush2.msra.mxu0 0.0
      %588 = vmatprep.subr.mxu0 0.0
      %589 = vmatpush2.msra.mxu0 0.0
      %590 = vmatprep.subr.mxu0 0.0
      %591 = vmatpush2.msra.mxu0 0.0
      %592 = vmatprep.subr.mxu0 0.0
      %593 = vmatpush2.msra.mxu0 0.0
      %594 = vmatprep.subr.mxu0 0.0
      %595 = vmatpush2.msra.mxu0 0.0
      %596 = vmatprep.subr.mxu0 0.0
      %597 = vmatpush2.msra.mxu0 0.0
      %598 = vmatprep.subr.mxu0 0.0
      %599 = vmatpush2.msra.mxu0 0.0
      %600 = vmatprep.subr.mxu0 0.0
      %601 = vmatpush2.msra.mxu0 0.0
      %602 = vmatprep.subr.mxu0 0.0
      %603 = vmatpush2.msra.mxu0 0.0
      %604 = vmatprep.mubr.f32.mxu0 0.0
      %605 = vmatmul.mubr.f32.gmra.mxu0 %v538
      %v606 = vpop.f32.mrf.mxu0
      %v607 = vadd.f32 0.0, %v606
      %v608 = vpop.f32.mrf.mxu0
      %609 = vdwg.mxu0
      %v610 = vadd.f32 %v530, %v607
      %v611 = vxor.u32 %v610, 2147483648
      %v612 = vmul.f32 %v611, 1.442695
      %v613 = vpow.pop %v612
      %v614 = vadd.f32 %v613, 1.0
      %v615 = vrcp.pop %v614
      %v616 = vmul.f32 1.0, %v615
      %v617 = vtanh.pop %v610
      %619 = vrot.lane.b32.xlu0 %v532, 32
      %v620 = vpop.permute.xlu0 %619
      %v622 = vmul.f32 %v616, %v620
      %624 = vrot.lane.b32.xlu0 %v617, 64
      %v625 = vpop.permute.xlu0 %624
      %v627 = vmul.f32 %v616, %v625
      %629 = vrot.lane.b32.xlu0 %v627, 32
      %v630 = vpop.permute.xlu0 %629
      %v632 = vadd.f32 %v622, %v630
      %v633 = vtanh.pop %v632
      %635 = vrot.lane.b32.xlu0 %v633, 64
      %v636 = vpop.permute.xlu0 %635
      %v638 = vmul.f32 %v616, %v636
      %640 = vrot.lane.b32.xlu0 %v638, 32
      %v641 = vpop.permute.xlu0 %640
      %643 = vst.msk [vmem:[#allocation2] sm:$0x3] %vm399, %v641
      %645 = vrot.lane.b32.xlu0 %v632, 96
      %v646 = vpop.permute.xlu0 %645
      %648 = vst.msk [vmem:[#allocation3] sm:$0x3] %vm399, %v646
      %s649 = scalar_lea.vmem %s266, 2
      %650 = vst.msk [vmem:[%s649] sm:$0x3] %vm399, %v641
      %s651 = scalar_lea.vmem %s259, 4
      %v652 = vld [vmem:[%s651] sm:$0x3]
      %v653 = vld [vmem:[#allocation4] sm:$0x3]
      %v654 = vld [vmem:[#allocation5] sm:$0x3]
      %v655 = vld [vmem:[%s3] sm:$0xff]
      %v656 = vld [vmem:[%s3 + $0x8] sm:$0xff]
      %v657 = vld [vmem:[%s3 + $0x10] sm:$0xff]
      %v658 = vld [vmem:[%s3 + $0x18] sm:$0xff]
      %v660 = vsel %vm292, %v653, 0
      %662 = vmatprep.subr.mxu0 0.0
      %663 = vmatpush1.msra.mxu0 0.0
      %664 = vmatprep.subr.mxu0 0.0
      %665 = vmatpush1.msra.mxu0 0.0
      %666 = vmatprep.subr.mxu0 0.0
      %667 = vmatpush1.msra.mxu0 0.0
      %668 = vmatprep.subr.mxu0 0.0
      %669 = vmatpush1.msra.mxu0 0.0
      %670 = vmatprep.subr.mxu0 0.0
      %671 = vmatpush1.msra.mxu0 0.0
      %672 = vmatprep.subr.mxu0 0.0
      %673 = vmatpush1.msra.mxu0 0.0
      %674 = vmatprep.subr.mxu0 0.0
      %675 = vmatpush1.msra.mxu0 0.0
      %676 = vmatprep.subr.mxu0 0.0
      %677 = vmatpush1.msra.mxu0 0.0
      %678 = vmatprep.subr.mxu0 0.0
      %679 = vmatpush1.msra.mxu0 0.0
      %680 = vmatprep.subr.mxu0 0.0
      %681 = vmatpush1.msra.mxu0 0.0
      %682 = vmatprep.subr.mxu0 0.0
      %683 = vmatpush1.msra.mxu0 0.0
      %684 = vmatprep.subr.mxu0 0.0
      %685 = vmatpush1.msra.mxu0 0.0
      %686 = vmatprep.subr.mxu0 0.0
      %687 = vmatpush1.msra.mxu0 %v658
      %688 = vmatprep.subr.mxu0 0.0
      %689 = vmatpush1.msra.mxu0 %v657
      %690 = vmatprep.subr.mxu0 0.0
      %691 = vmatpush1.msra.mxu0 %v656
      %692 = vmatprep.subr.mxu0 0.0
      %693 = vmatpush1.msra.mxu0 %v655
      %694 = vmatprep.subr.mxu0 0.0
      %695 = vmatpush2.msra.mxu0 0.0
      %696 = vmatprep.subr.mxu0 0.0
      %697 = vmatpush2.msra.mxu0 0.0
      %698 = vmatprep.subr.mxu0 0.0
      %699 = vmatpush2.msra.mxu0 0.0
      %700 = vmatprep.subr.mxu0 0.0
      %701 = vmatpush2.msra.mxu0 0.0
      %702 = vmatprep.subr.mxu0 0.0
      %703 = vmatpush2.msra.mxu0 0.0
      %704 = vmatprep.subr.mxu0 0.0
      %705 = vmatpush2.msra.mxu0 0.0
      %706 = vmatprep.subr.mxu0 0.0
      %707 = vmatpush2.msra.mxu0 0.0
      %708 = vmatprep.subr.mxu0 0.0
      %709 = vmatpush2.msra.mxu0 0.0
      %710 = vmatprep.subr.mxu0 0.0
      %711 = vmatpush2.msra.mxu0 0.0
      %712 = vmatprep.subr.mxu0 0.0
      %713 = vmatpush2.msra.mxu0 0.0
      %714 = vmatprep.subr.mxu0 0.0
      %715 = vmatpush2.msra.mxu0 0.0
      %716 = vmatprep.subr.mxu0 0.0
      %717 = vmatpush2.msra.mxu0 0.0
      %718 = vmatprep.subr.mxu0 0.0
      %719 = vmatpush2.msra.mxu0 0.0
      %720 = vmatprep.subr.mxu0 0.0
      %721 = vmatpush2.msra.mxu0 0.0
      %722 = vmatprep.subr.mxu0 0.0
      %723 = vmatpush2.msra.mxu0 0.0
      %724 = vmatprep.subr.mxu0 0.0
      %725 = vmatpush2.msra.mxu0 0.0
      %726 = vmatprep.mubr.f32.mxu0 0.0
      %727 = vmatmul.mubr.f32.gmra.mxu0 %v660
      %v728 = vpop.f32.mrf.mxu0
      %v729 = vadd.f32 0.0, %v728
      %v730 = vpop.f32.mrf.mxu0
      %731 = vdwg.mxu0
      %v732 = vadd.f32 %v652, %v729
      %v733 = vxor.u32 %v732, 2147483648
      %v734 = vmul.f32 %v733, 1.442695
      %v735 = vpow.pop %v734
      %v736 = vadd.f32 %v735, 1.0
      %v737 = vrcp.pop %v736
      %v738 = vmul.f32 1.0, %v737
      %v739 = vtanh.pop %v732
      %741 = vrot.lane.b32.xlu0 %v654, 32
      %v742 = vpop.permute.xlu0 %741
      %v744 = vmul.f32 %v738, %v742
      %746 = vrot.lane.b32.xlu0 %v739, 64
      %v747 = vpop.permute.xlu0 %746
      %v749 = vmul.f32 %v738, %v747
      %751 = vrot.lane.b32.xlu0 %v749, 32
      %v752 = vpop.permute.xlu0 %751
      %v754 = vadd.f32 %v744, %v752
      %v755 = vtanh.pop %v754
      %757 = vrot.lane.b32.xlu0 %v755, 64
      %v758 = vpop.permute.xlu0 %757
      %v760 = vmul.f32 %v738, %v758
      %762 = vrot.lane.b32.xlu0 %v760, 32
      %v763 = vpop.permute.xlu0 %762
      %765 = vst.msk [vmem:[#allocation4] sm:$0x3] %vm399, %v763
      %767 = vrot.lane.b32.xlu0 %v754, 96
      %v768 = vpop.permute.xlu0 %767
      %770 = vst.msk [vmem:[#allocation5] sm:$0x3] %vm399, %v768
      %s771 = scalar_lea.vmem %s273, 4
      %772 = vst.msk [vmem:[%s771] sm:$0x3] %vm399, %v763
      %s773 = scalar_lea.vmem %s252, 4
      %v774 = vld [vmem:[%s773] sm:$0x3]
      %v775 = vld [vmem:[#allocation2] sm:$0x3]
      %v776 = vld [vmem:[#allocation3] sm:$0x3]
      %v777 = vld [vmem:[%s2] sm:$0xff]
      %v778 = vld [vmem:[%s2 + $0x8] sm:$0xff]
      %v779 = vld [vmem:[%s2 + $0x10] sm:$0xff]
      %v780 = vld [vmem:[%s2 + $0x18] sm:$0xff]
      %v782 = vsel %vm292, %v775, 0
      %784 = vmatprep.subr.mxu0 0.0
      %785 = vmatpush1.msra.mxu0 0.0
      %786 = vmatprep.subr.mxu0 0.0
      %787 = vmatpush1.msra.mxu0 0.0
      %788 = vmatprep.subr.mxu0 0.0
      %789 = vmatpush1.msra.mxu0 0.0
      %790 = vmatprep.subr.mxu0 0.0
      %791 = vmatpush1.msra.mxu0 0.0
      %792 = vmatprep.subr.mxu0 0.0
      %793 = vmatpush1.msra.mxu0 0.0
      %794 = vmatprep.subr.mxu0 0.0
      %795 = vmatpush1.msra.mxu0 0.0
      %796 = vmatprep.subr.mxu0 0.0
      %797 = vmatpush1.msra.mxu0 0.0
      %798 = vmatprep.subr.mxu0 0.0
      %799 = vmatpush1.msra.mxu0 0.0
      %800 = vmatprep.subr.mxu0 0.0
      %801 = vmatpush1.msra.mxu0 0.0
      %802 = vmatprep.subr.mxu0 0.0
      %803 = vmatpush1.msra.mxu0 0.0
      %804 = vmatprep.subr.mxu0 0.0
      %805 = vmatpush1.msra.mxu0 0.0
      %806 = vmatprep.subr.mxu0 0.0
      %807 = vmatpush1.msra.mxu0 0.0
      %808 = vmatprep.subr.mxu0 0.0
      %809 = vmatpush1.msra.mxu0 %v780
      %810 = vmatprep.subr.mxu0 0.0
      %811 = vmatpush1.msra.mxu0 %v779
      %812 = vmatprep.subr.mxu0 0.0
      %813 = vmatpush1.msra.mxu0 %v778
      %814 = vmatprep.subr.mxu0 0.0
      %815 = vmatpush1.msra.mxu0 %v777
      %816 = vmatprep.subr.mxu0 0.0
      %817 = vmatpush2.msra.mxu0 0.0
      %818 = vmatprep.subr.mxu0 0.0
      %819 = vmatpush2.msra.mxu0 0.0
      %820 = vmatprep.subr.mxu0 0.0
      %821 = vmatpush2.msra.mxu0 0.0
      %822 = vmatprep.subr.mxu0 0.0
      %823 = vmatpush2.msra.mxu0 0.0
      %824 = vmatprep.subr.mxu0 0.0
      %825 = vmatpush2.msra.mxu0 0.0
      %826 = vmatprep.subr.mxu0 0.0
      %827 = vmatpush2.msra.mxu0 0.0
      %828 = vmatprep.subr.mxu0 0.0
      %829 = vmatpush2.msra.mxu0 0.0
      %830 = vmatprep.subr.mxu0 0.0
      %831 = vmatpush2.msra.mxu0 0.0
      %832 = vmatprep.subr.mxu0 0.0
      %833 = vmatpush2.msra.mxu0 0.0
      %834 = vmatprep.subr.mxu0 0.0
      %835 = vmatpush2.msra.mxu0 0.0
      %836 = vmatprep.subr.mxu0 0.0
      %837 = vmatpush2.msra.mxu0 0.0
      %838 = vmatprep.subr.mxu0 0.0
      %839 = vmatpush2.msra.mxu0 0.0
      %840 = vmatprep.subr.mxu0 0.0
      %841 = vmatpush2.msra.mxu0 0.0
      %842 = vmatprep.subr.mxu0 0.0
      %843 = vmatpush2.msra.mxu0 0.0
      %844 = vmatprep.subr.mxu0 0.0
      %845 = vmatpush2.msra.mxu0 0.0
      %846 = vmatprep.subr.mxu0 0.0
      %847 = vmatpush2.msra.mxu0 0.0
      %848 = vmatprep.mubr.f32.mxu0 0.0
      %849 = vmatmul.mubr.f32.gmra.mxu0 %v782
      %v850 = vpop.f32.mrf.mxu0
      %v851 = vadd.f32 0.0, %v850
      %v852 = vpop.f32.mrf.mxu0
      %853 = vdwg.mxu0
      %v854 = vadd.f32 %v774, %v851
      %v855 = vxor.u32 %v854, 2147483648
      %v856 = vmul.f32 %v855, 1.442695
      %v857 = vpow.pop %v856
      %v858 = vadd.f32 %v857, 1.0
      %v859 = vrcp.pop %v858
      %v860 = vmul.f32 1.0, %v859
      %v861 = vtanh.pop %v854
      %863 = vrot.lane.b32.xlu0 %v776, 32
      %v864 = vpop.permute.xlu0 %863
      %v866 = vmul.f32 %v860, %v864
      %868 = vrot.lane.b32.xlu0 %v861, 64
      %v869 = vpop.permute.xlu0 %868
      %v871 = vmul.f32 %v860, %v869
      %873 = vrot.lane.b32.xlu0 %v871, 32
      %v874 = vpop.permute.xlu0 %873
      %v876 = vadd.f32 %v866, %v874
      %v877 = vtanh.pop %v876
      %879 = vrot.lane.b32.xlu0 %v877, 64
      %v880 = vpop.permute.xlu0 %879
      %v882 = vmul.f32 %v860, %v880
      %884 = vrot.lane.b32.xlu0 %v882, 32
      %v885 = vpop.permute.xlu0 %884
      %887 = vst.msk [vmem:[#allocation2] sm:$0x3] %vm399, %v885
      %889 = vrot.lane.b32.xlu0 %v876, 96
      %v890 = vpop.permute.xlu0 %889
      %892 = vst.msk [vmem:[#allocation3] sm:$0x3] %vm399, %v890
      %s893 = scalar_lea.vmem %s266, 4
      %894 = vst.msk [vmem:[%s893] sm:$0x3] %vm399, %v885
      %s895 = scalar_lea.vmem %s259, 2
      %v896 = vld [vmem:[%s895] sm:$0x3]
      %v897 = vld [vmem:[#allocation4] sm:$0x3]
      %v898 = vld [vmem:[#allocation5] sm:$0x3]
      %v899 = vld [vmem:[%s3] sm:$0xff]
      %v900 = vld [vmem:[%s3 + $0x8] sm:$0xff]
      %v901 = vld [vmem:[%s3 + $0x10] sm:$0xff]
      %v902 = vld [vmem:[%s3 + $0x18] sm:$0xff]
      %v904 = vsel %vm292, %v897, 0
      %906 = vmatprep.subr.mxu0 0.0
      %907 = vmatpush1.msra.mxu0 0.0
      %908 = vmatprep.subr.mxu0 0.0
      %909 = vmatpush1.msra.mxu0 0.0
      %910 = vmatprep.subr.mxu0 0.0
      %911 = vmatpush1.msra.mxu0 0.0
      %912 = vmatprep.subr.mxu0 0.0
      %913 = vmatpush1.msra.mxu0 0.0
      %914 = vmatprep.subr.mxu0 0.0
      %915 = vmatpush1.msra.mxu0 0.0
      %916 = vmatprep.subr.mxu0 0.0
      %917 = vmatpush1.msra.mxu0 0.0
      %918 = vmatprep.subr.mxu0 0.0
      %919 = vmatpush1.msra.mxu0 0.0
      %920 = vmatprep.subr.mxu0 0.0
      %921 = vmatpush1.msra.mxu0 0.0
      %922 = vmatprep.subr.mxu0 0.0
      %923 = vmatpush1.msra.mxu0 0.0
      %924 = vmatprep.subr.mxu0 0.0
      %925 = vmatpush1.msra.mxu0 0.0
      %926 = vmatprep.subr.mxu0 0.0
      %927 = vmatpush1.msra.mxu0 0.0
      %928 = vmatprep.subr.mxu0 0.0
      %929 = vmatpush1.msra.mxu0 0.0
      %930 = vmatprep.subr.mxu0 0.0
      %931 = vmatpush1.msra.mxu0 %v902
      %932 = vmatprep.subr.mxu0 0.0
      %933 = vmatpush1.msra.mxu0 %v901
      %934 = vmatprep.subr.mxu0 0.0
      %935 = vmatpush1.msra.mxu0 %v900
      %936 = vmatprep.subr.mxu0 0.0
      %937 = vmatpush1.msra.mxu0 %v899
      %938 = vmatprep.subr.mxu0 0.0
      %939 = vmatpush2.msra.mxu0 0.0
      %940 = vmatprep.subr.mxu0 0.0
      %941 = vmatpush2.msra.mxu0 0.0
      %942 = vmatprep.subr.mxu0 0.0
      %943 = vmatpush2.msra.mxu0 0.0
      %944 = vmatprep.subr.mxu0 0.0
      %945 = vmatpush2.msra.mxu0 0.0
      %946 = vmatprep.subr.mxu0 0.0
      %947 = vmatpush2.msra.mxu0 0.0
      %948 = vmatprep.subr.mxu0 0.0
      %949 = vmatpush2.msra.mxu0 0.0
      %950 = vmatprep.subr.mxu0 0.0
      %951 = vmatpush2.msra.mxu0 0.0
      %952 = vmatprep.subr.mxu0 0.0
      %953 = vmatpush2.msra.mxu0 0.0
      %954 = vmatprep.subr.mxu0 0.0
      %955 = vmatpush2.msra.mxu0 0.0
      %956 = vmatprep.subr.mxu0 0.0
      %957 = vmatpush2.msra.mxu0 0.0
      %958 = vmatprep.subr.mxu0 0.0
      %959 = vmatpush2.msra.mxu0 0.0
      %960 = vmatprep.subr.mxu0 0.0
      %961 = vmatpush2.msra.mxu0 0.0
      %962 = vmatprep.subr.mxu0 0.0
      %963 = vmatpush2.msra.mxu0 0.0
      %964 = vmatprep.subr.mxu0 0.0
      %965 = vmatpush2.msra.mxu0 0.0
      %966 = vmatprep.subr.mxu0 0.0
      %967 = vmatpush2.msra.mxu0 0.0
      %968 = vmatprep.subr.mxu0 0.0
      %969 = vmatpush2.msra.mxu0 0.0
      %970 = vmatprep.mubr.f32.mxu0 0.0
      %971 = vmatmul.mubr.f32.gmra.mxu0 %v904
      %v972 = vpop.f32.mrf.mxu0
      %v973 = vadd.f32 0.0, %v972
      %v974 = vpop.f32.mrf.mxu0
      %975 = vdwg.mxu0
      %v976 = vadd.f32 %v896, %v973
      %v977 = vxor.u32 %v976, 2147483648
      %v978 = vmul.f32 %v977, 1.442695
      %v979 = vpow.pop %v978
      %v980 = vadd.f32 %v979, 1.0
      %v981 = vrcp.pop %v980
      %v982 = vmul.f32 1.0, %v981
      %v983 = vtanh.pop %v976
      %985 = vrot.lane.b32.xlu0 %v898, 32
      %v986 = vpop.permute.xlu0 %985
      %v988 = vmul.f32 %v982, %v986
      %990 = vrot.lane.b32.xlu0 %v983, 64
      %v991 = vpop.permute.xlu0 %990
      %v993 = vmul.f32 %v982, %v991
      %995 = vrot.lane.b32.xlu0 %v993, 32
      %v996 = vpop.permute.xlu0 %995
      %v998 = vadd.f32 %v988, %v996
      %v999 = vtanh.pop %v998
      %1001 = vrot.lane.b32.xlu0 %v999, 64
      %v1002 = vpop.permute.xlu0 %1001
      %v1004 = vmul.f32 %v982, %v1002
      %1006 = vrot.lane.b32.xlu0 %v1004, 32
      %v1007 = vpop.permute.xlu0 %1006
      %1009 = vst.msk [vmem:[#allocation4] sm:$0x3] %vm399, %v1007
      %1011 = vrot.lane.b32.xlu0 %v998, 96
      %v1012 = vpop.permute.xlu0 %1011
      %1014 = vst.msk [vmem:[#allocation5] sm:$0x3] %vm399, %v1012
      %s1015 = scalar_lea.vmem %s273, 2
      %1016 = vst.msk [vmem:[%s1015] sm:$0x3] %vm399, %v1007
      %s1017 = scalar_lea.vmem %s252, 6
      %v1018 = vld [vmem:[%s1017] sm:$0x3]
      %v1019 = vld [vmem:[#allocation2] sm:$0x3]
      %v1020 = vld [vmem:[#allocation3] sm:$0x3]
      %v1021 = vld [vmem:[%s2] sm:$0xff]
      %v1022 = vld [vmem:[%s2 + $0x8] sm:$0xff]
      %v1023 = vld [vmem:[%s2 + $0x10] sm:$0xff]
      %v1024 = vld [vmem:[%s2 + $0x18] sm:$0xff]
      %v1026 = vsel %vm292, %v1019, 0
      %1028 = vmatprep.subr.mxu0 0.0
      %1029 = vmatpush1.msra.mxu0 0.0
      %1030 = vmatprep.subr.mxu0 0.0
      %1031 = vmatpush1.msra.mxu0 0.0
      %1032 = vmatprep.subr.mxu0 0.0
      %1033 = vmatpush1.msra.mxu0 0.0
      %1034 = vmatprep.subr.mxu0 0.0
      %1035 = vmatpush1.msra.mxu0 0.0
      %1036 = vmatprep.subr.mxu0 0.0
      %1037 = vmatpush1.msra.mxu0 0.0
      %1038 = vmatprep.subr.mxu0 0.0
      %1039 = vmatpush1.msra.mxu0 0.0
      %1040 = vmatprep.subr.mxu0 0.0
      %1041 = vmatpush1.msra.mxu0 0.0
      %1042 = vmatprep.subr.mxu0 0.0
      %1043 = vmatpush1.msra.mxu0 0.0
      %1044 = vmatprep.subr.mxu0 0.0
      %1045 = vmatpush1.msra.mxu0 0.0
      %1046 = vmatprep.subr.mxu0 0.0
      %1047 = vmatpush1.msra.mxu0 0.0
      %1048 = vmatprep.subr.mxu0 0.0
      %1049 = vmatpush1.msra.mxu0 0.0
      %1050 = vmatprep.subr.mxu0 0.0
      %1051 = vmatpush1.msra.mxu0 0.0
      %1052 = vmatprep.subr.mxu0 0.0
      %1053 = vmatpush1.msra.mxu0 %v1024
      %1054 = vmatprep.subr.mxu0 0.0
      %1055 = vmatpush1.msra.mxu0 %v1023
      %1056 = vmatprep.subr.mxu0 0.0
      %1057 = vmatpush1.msra.mxu0 %v1022
      %1058 = vmatprep.subr.mxu0 0.0
      %1059 = vmatpush1.msra.mxu0 %v1021
      %1060 = vmatprep.subr.mxu0 0.0
      %1061 = vmatpush2.msra.mxu0 0.0
      %1062 = vmatprep.subr.mxu0 0.0
      %1063 = vmatpush2.msra.mxu0 0.0
      %1064 = vmatprep.subr.mxu0 0.0
      %1065 = vmatpush2.msra.mxu0 0.0
      %1066 = vmatprep.subr.mxu0 0.0
      %1067 = vmatpush2.msra.mxu0 0.0
      %1068 = vmatprep.subr.mxu0 0.0
      %1069 = vmatpush2.msra.mxu0 0.0
      %1070 = vmatprep.subr.mxu0 0.0
      %1071 = vmatpush2.msra.mxu0 0.0
      %1072 = vmatprep.subr.mxu0 0.0
      %1073 = vmatpush2.msra.mxu0 0.0
      %1074 = vmatprep.subr.mxu0 0.0
      %1075 = vmatpush2.msra.mxu0 0.0
      %1076 = vmatprep.subr.mxu0 0.0
      %1077 = vmatpush2.msra.mxu0 0.0
      %1078 = vmatprep.subr.mxu0 0.0
      %1079 = vmatpush2.msra.mxu0 0.0
      %1080 = vmatprep.subr.mxu0 0.0
      %1081 = vmatpush2.msra.mxu0 0.0
      %1082 = vmatprep.subr.mxu0 0.0
      %1083 = vmatpush2.msra.mxu0 0.0
      %1084 = vmatprep.subr.mxu0 0.0
      %1085 = vmatpush2.msra.mxu0 0.0
      %1086 = vmatprep.subr.mxu0 0.0
      %1087 = vmatpush2.msra.mxu0 0.0
      %1088 = vmatprep.subr.mxu0 0.0
      %1089 = vmatpush2.msra.mxu0 0.0
      %1090 = vmatprep.subr.mxu0 0.0
      %1091 = vmatpush2.msra.mxu0 0.0
      %1092 = vmatprep.mubr.f32.mxu0 0.0
      %1093 = vmatmul.mubr.f32.gmra.mxu0 %v1026
      %v1094 = vpop.f32.mrf.mxu0
      %v1095 = vadd.f32 0.0, %v1094
      %v1096 = vpop.f32.mrf.mxu0
      %1097 = vdwg.mxu0
      %v1098 = vadd.f32 %v1018, %v1095
      %v1099 = vxor.u32 %v1098, 2147483648
      %v1100 = vmul.f32 %v1099, 1.442695
      %v1101 = vpow.pop %v1100
      %v1102 = vadd.f32 %v1101, 1.0
      %v1103 = vrcp.pop %v1102
      %v1104 = vmul.f32 1.0, %v1103
      %v1105 = vtanh.pop %v1098
      %1107 = vrot.lane.b32.xlu0 %v1020, 32
      %v1108 = vpop.permute.xlu0 %1107
      %v1110 = vmul.f32 %v1104, %v1108
      %1112 = vrot.lane.b32.xlu0 %v1105, 64
      %v1113 = vpop.permute.xlu0 %1112
      %v1115 = vmul.f32 %v1104, %v1113
      %1117 = vrot.lane.b32.xlu0 %v1115, 32
      %v1118 = vpop.permute.xlu0 %1117
      %v1120 = vadd.f32 %v1110, %v1118
      %v1121 = vtanh.pop %v1120
      %1123 = vrot.lane.b32.xlu0 %v1121, 64
      %v1124 = vpop.permute.xlu0 %1123
      %v1126 = vmul.f32 %v1104, %v1124
      %1128 = vrot.lane.b32.xlu0 %v1126, 32
      %v1129 = vpop.permute.xlu0 %1128
      %1131 = vst.msk [vmem:[#allocation2] sm:$0x3] %vm399, %v1129
      %1133 = vrot.lane.b32.xlu0 %v1120, 96
      %v1134 = vpop.permute.xlu0 %1133
      %1136 = vst.msk [vmem:[#allocation3] sm:$0x3] %vm399, %v1134
      %s1137 = scalar_lea.vmem %s266, 6
      %1138 = vst.msk [vmem:[%s1137] sm:$0x3] %vm399, %v1129
      %v1139 = vld [vmem:[%s259] sm:$0x3]
      %v1140 = vld [vmem:[#allocation4] sm:$0x3]
      %v1141 = vld [vmem:[#allocation5] sm:$0x3]
      %v1142 = vld [vmem:[%s3] sm:$0xff]
      %v1143 = vld [vmem:[%s3 + $0x8] sm:$0xff]
      %v1144 = vld [vmem:[%s3 + $0x10] sm:$0xff]
      %v1145 = vld [vmem:[%s3 + $0x18] sm:$0xff]
      %v1147 = vsel %vm292, %v1140, 0
      %1149 = vmatprep.subr.mxu0 0.0
      %1150 = vmatpush1.msra.mxu0 0.0
      %1151 = vmatprep.subr.mxu0 0.0
      %1152 = vmatpush1.msra.mxu0 0.0
      %1153 = vmatprep.subr.mxu0 0.0
      %1154 = vmatpush1.msra.mxu0 0.0
      %1155 = vmatprep.subr.mxu0 0.0
      %1156 = vmatpush1.msra.mxu0 0.0
      %1157 = vmatprep.subr.mxu0 0.0
      %1158 = vmatpush1.msra.mxu0 0.0
      %1159 = vmatprep.subr.mxu0 0.0
      %1160 = vmatpush1.msra.mxu0 0.0
      %1161 = vmatprep.subr.mxu0 0.0
      %1162 = vmatpush1.msra.mxu0 0.0
      %1163 = vmatprep.subr.mxu0 0.0
      %1164 = vmatpush1.msra.mxu0 0.0
      %1165 = vmatprep.subr.mxu0 0.0
      %1166 = vmatpush1.msra.mxu0 0.0
      %1167 = vmatprep.subr.mxu0 0.0
      %1168 = vmatpush1.msra.mxu0 0.0
      %1169 = vmatprep.subr.mxu0 0.0
      %1170 = vmatpush1.msra.mxu0 0.0
      %1171 = vmatprep.subr.mxu0 0.0
      %1172 = vmatpush1.msra.mxu0 0.0
      %1173 = vmatprep.subr.mxu0 0.0
      %1174 = vmatpush1.msra.mxu0 %v1145
      %1175 = vmatprep.subr.mxu0 0.0
      %1176 = vmatpush1.msra.mxu0 %v1144
      %1177 = vmatprep.subr.mxu0 0.0
      %1178 = vmatpush1.msra.mxu0 %v1143
      %1179 = vmatprep.subr.mxu0 0.0
      %1180 = vmatpush1.msra.mxu0 %v1142
      %1181 = vmatprep.subr.mxu0 0.0
      %1182 = vmatpush2.msra.mxu0 0.0
      %1183 = vmatprep.subr.mxu0 0.0
      %1184 = vmatpush2.msra.mxu0 0.0
      %1185 = vmatprep.subr.mxu0 0.0
      %1186 = vmatpush2.msra.mxu0 0.0
      %1187 = vmatprep.subr.mxu0 0.0
      %1188 = vmatpush2.msra.mxu0 0.0
      %1189 = vmatprep.subr.mxu0 0.0
      %1190 = vmatpush2.msra.mxu0 0.0
      %1191 = vmatprep.subr.mxu0 0.0
      %1192 = vmatpush2.msra.mxu0 0.0
      %1193 = vmatprep.subr.mxu0 0.0
      %1194 = vmatpush2.msra.mxu0 0.0
      %1195 = vmatprep.subr.mxu0 0.0
      %1196 = vmatpush2.msra.mxu0 0.0
      %1197 = vmatprep.subr.mxu0 0.0
      %1198 = vmatpush2.msra.mxu0 0.0
      %1199 = vmatprep.subr.mxu0 0.0
      %1200 = vmatpush2.msra.mxu0 0.0
      %1201 = vmatprep.subr.mxu0 0.0
      %1202 = vmatpush2.msra.mxu0 0.0
      %1203 = vmatprep.subr.mxu0 0.0
      %1204 = vmatpush2.msra.mxu0 0.0
      %1205 = vmatprep.subr.mxu0 0.0
      %1206 = vmatpush2.msra.mxu0 0.0
      %1207 = vmatprep.subr.mxu0 0.0
      %1208 = vmatpush2.msra.mxu0 0.0
      %1209 = vmatprep.subr.mxu0 0.0
      %1210 = vmatpush2.msra.mxu0 0.0
      %1211 = vmatprep.subr.mxu0 0.0
      %1212 = vmatpush2.msra.mxu0 0.0
      %1213 = vmatprep.mubr.f32.mxu0 0.0
      %1214 = vmatmul.mubr.f32.gmra.mxu0 %v1147
      %v1215 = vpop.f32.mrf.mxu0
      %v1216 = vadd.f32 0.0, %v1215
      %v1217 = vpop.f32.mrf.mxu0
      %1218 = vdwg.mxu0
      %v1219 = vadd.f32 %v1139, %v1216
      %v1220 = vxor.u32 %v1219, 2147483648
      %v1221 = vmul.f32 %v1220, 1.442695
      %v1222 = vpow.pop %v1221
      %v1223 = vadd.f32 %v1222, 1.0
      %v1224 = vrcp.pop %v1223
      %v1225 = vmul.f32 1.0, %v1224
      %v1226 = vtanh.pop %v1219
      %1228 = vrot.lane.b32.xlu0 %v1141, 32
      %v1229 = vpop.permute.xlu0 %1228
      %v1231 = vmul.f32 %v1225, %v1229
      %1233 = vrot.lane.b32.xlu0 %v1226, 64
      %v1234 = vpop.permute.xlu0 %1233
      %v1236 = vmul.f32 %v1225, %v1234
      %1238 = vrot.lane.b32.xlu0 %v1236, 32
      %v1239 = vpop.permute.xlu0 %1238
      %v1241 = vadd.f32 %v1231, %v1239
      %v1242 = vtanh.pop %v1241
      %1244 = vrot.lane.b32.xlu0 %v1242, 64
      %v1245 = vpop.permute.xlu0 %1244
      %v1247 = vmul.f32 %v1225, %v1245
      %1249 = vrot.lane.b32.xlu0 %v1247, 32
      %v1250 = vpop.permute.xlu0 %1249
      %1252 = vst.msk [vmem:[#allocation4] sm:$0x3] %vm399, %v1250
      %1254 = vrot.lane.b32.xlu0 %v1241, 96
      %v1255 = vpop.permute.xlu0 %1254
      %1257 = vst.msk [vmem:[#allocation5] sm:$0x3] %vm399, %v1255
      %1258 = vst.msk [vmem:[%s273] sm:$0x3] %vm399, %v1250
      %s1259 = smul.u32 4, %s17
      %p1260 = scmp.lt.s32.totalorder %s1259, 7
      %s1261 = scalar_select %p1260, %s1259, 7
      %s1262 = smul.addr %s1261, 2
      %s1263 = scalar_lea.vmem %s4, %s1262
      %s1264 = ssub.s32 1, %s17
      %s1265 = smul.u32 4, %s1264
      %p1266 = scmp.lt.s32.totalorder %s1265, 7
      %s1267 = scalar_select %p1266, %s1265, 7
      %s1268 = smul.addr %s1267, 2
      %s1269 = scalar_lea.vmem %s5, %s1268
      // Predicated region
      $region41: #{deep_lstm_forward.8} parent=35 // pred_check
        %p1270 = pneg %p131
      $region42: #{deep_lstm_forward.8} parent=35 // pred_check_branch
        %1272 = sbr.rel (%p1270) target = $region44
      $region43: #{deep_lstm_forward.8} parent=35 // pred_region
        %s1273 = smul.u32 4, %s17
      $region44: #{deep_lstm_forward.8} parent=35 // pred_fallthru
        _
      // Predicated region
      $region45: #{deep_lstm_forward.8} parent=35 // pred_check
        %p1274 = pneg %p159
      $region46: #{deep_lstm_forward.8} parent=35 // pred_check_branch
        %1276 = sbr.rel (%p1274) target = $region48
      $region47: #{deep_lstm_forward.8} parent=35 // pred_region
        %s1277 = ssub.s32 1, %s17
        %s1278 = smul.u32 4, %s1277
      $region48: #{deep_lstm_forward.8} parent=35 // pred_fallthru
        _
    $region36: #{deep_lstm_forward.8} parent=5 // pred_fallthru
      _
    %p1279 = scmp.le.s32.totalorder 2, %s12
    // Predicated region
    $region49: #{deep_lstm_forward.8} parent=5 // pred_check
      %p1280 = pneg %p1279
    $region50: #{deep_lstm_forward.8} parent=5 // pred_check_branch
      %1282 = sbr.rel (%p1280) target = $region52
    $region51: #{deep_lstm_forward.8} parent=5 // pred_region
      %s1283 = ssub.s32 %s12, 2
      // Predicated region
      $region53: #{deep_lstm_forward.8} parent=51 // pred_check
        %p1284 = pneg %p137
      $region54: #{deep_lstm_forward.8} parent=51 // pred_check_branch
        %1286 = sbr.rel (%p1284) target = $region56
      $region55: #{deep_lstm_forward.8} parent=51 // pred_region
        %s1287 = smul.u32 4, %s18
        %p1288 = scmp.lt.s32.totalorder %s1287, 7
        %s1289 = scalar_select %p1288, %s1287, 7
        %s1290 = smul.addr %s1289, 2
        %s1291 = scalar_lea.vmem %s4, %s1290
      $region56: #{deep_lstm_forward.8} parent=51 // pred_fallthru
        _
      // Predicated region
      $region57: #{deep_lstm_forward.8} parent=51 // pred_check
        %p1292 = pneg %p165
      $region58: #{deep_lstm_forward.8} parent=51 // pred_check_branch
        %1294 = sbr.rel (%p1292) target = $region60
      $region59: #{deep_lstm_forward.8} parent=51 // pred_region
        %s1295 = ssub.s32 1, %s18
        %s1296 = smul.u32 4, %s1295
        %p1297 = scmp.lt.s32.totalorder %s1296, 7
        %s1298 = scalar_select %p1297, %s1296, 7
        %s1299 = smul.addr %s1298, 2
        %s1300 = scalar_lea.vmem %s5, %s1299
      $region60: #{deep_lstm_forward.8} parent=51 // pred_fallthru
        _
    $region52: #{deep_lstm_forward.8} parent=5 // pred_fallthru
      _
  $region6: #{deep_lstm_forward.8} parent=0 // loop_footer
    %s16 = sadd.s32 1, %s12
  $region7: #{deep_lstm_forward.8} parent=0 // loop_footer_branch
    %11 = sbr.rel target = $region3
  $region8: #{deep_lstm_forward.8} parent=0 // loop_exit
    _

</llo_original>
